<compile_context>
chip_gen: v5e
topology: v5e:2x2
jax: 0.10.0
libtpu: 0.0.40
codegen_flags: <defaults>
</compile_context>

<pallas_src>
import functools

import jax
import jax.numpy as jnp
from jax.experimental import pallas as pl
from jax.experimental.pallas import tpu as pltpu

LEAKY_SLOPE = 0.01   # PyTorch default negative_slope for leaky_relu
BN_EPS = 1e-5
LANE = 128


def _round_up(n, m):
    return ((n + m - 1) // m) * m


def _leaky(y):
    # single vmax instead of compare+select
    return jnp.maximum(y, LEAKY_SLOPE * y)


# ----------------------------------------------------------------------------
# Fused kernel: (vision block) -> (branch block) for one (batch, row-tile).
# ----------------------------------------------------------------------------
def _fused_kernel(p1_ref, w1_ref, b1_ref, w2_ref, b2_ref, o_ref, inter_ref,
                  *, Ht, W, C1pad, C2pad, n_tiles):
    """One grid step = one batch element x one row tile (Ht rows), both blocks.

    p1_ref   : (1, 1, (Ht+4)*W, K1pad)   bf16  im2col tile (+2 halo rows/side)
    w1_ref   : (K1pad, C1pad)            bf16  conv1 weights (BN scale folded)
    b1_ref   : (1, C1pad)                f32   conv1 folded BN bias
    w2_ref   : (3, 3*C1pad, C2pad)       bf16  conv2 weights grouped by dh
    b2_ref   : (1, C2pad)                f32   conv2 folded BN bias
    o_ref    : (1, 1, Ht/4*W/4, C2pad)   f32   lane-dense output tile
    inter_ref: (Ht/2+2, W/2+2, C1pad)    bf16  pooled intermediate + zero halo
    """
    t = pl.program_id(1)
    Ht2, Ht4 = Ht // 2, Ht // 4
    W2, W4 = W // 2, W // 4

    # ---- block 1: conv1 as ONE MXU matmul over the lane-dense im2col tile --
    y1 = jnp.dot(p1_ref[0, 0], w1_ref[...], preferred_element_type=jnp.float32)
    y1 = _leaky(y1 + b1_ref[...])                        # ((Ht+4)*W, C1pad)
    # 2x2 max pool, stride 2 (channels are lane-dense -> full-vreg reduces).
    y1 = y1.reshape(Ht2 + 2, 2, W2, 2, C1pad)
    y1 = jnp.max(jnp.max(y1, axis=3), axis=1)            # (Ht2+2, W2, C1pad)

    # ---- stage pooled rows (1 pooled halo row per side) in bf16 VMEM -------
    # TODO(synk): audit lowering of the offset-1 sublane store / tap slices;
    # if they relayout, switch to an un-haloed scratch + pltpu.roll W-shifts.
    inter_ref[:, 1:W2 + 1, :] = y1.astype(inter_ref.dtype)
    # Zero only the halo strips (interior is fully rewritten every step).
    zcol = jnp.zeros((Ht2 + 2, 1, C1pad), inter_ref.dtype)
    inter_ref[:, 0:1, :] = zcol
    inter_ref[:, W2 + 1:W2 + 2, :] = zcol
    zrow = jnp.zeros((1, W2 + 2, C1pad), inter_ref.dtype)

    @pl.when(t == 0)                      # image top: conv2 zero padding
    def _():
        inter_ref[0:1, :, :] = zrow

    @pl.when(t == n_tiles - 1)            # image bottom: conv2 zero padding
    def _():
        inter_ref[Ht2 + 1:Ht2 + 2, :, :] = zrow

    # ---- block 2: three dh-group matmuls (K = 3*C1pad), f32 accumulation ---
    # Never materializes the full 9-tap patch matrix.
    acc = jnp.zeros((Ht2 * W2, C2pad), jnp.float32)
    for dh in range(3):
        lhs = jnp.concatenate(
            [inter_ref[dh:dh + Ht2, dw:dw + W2, :] for dw in range(3)],
            axis=-1).reshape(Ht2 * W2, 3 * C1pad)        # bf16, K = 3*C1pad
        acc = acc + jnp.dot(lhs, w2_ref[dh],
                            preferred_element_type=jnp.float32)
    y2 = _leaky(acc + b2_ref[...])
    y2 = y2.reshape(Ht4, 2, W4, 2, C2pad)
    y2 = jnp.max(jnp.max(y2, axis=3), axis=1)            # (Ht4, W4, C2pad)

    # Lane-dense store: last dim = C2pad (multiple of 128), rows = Ht4*W4.
    o_ref[0, 0] = y2.reshape(Ht4 * W4, C2pad).astype(o_ref.dtype)


# ----------------------------------------------------------------------------
# Wrapper helpers: BN fold, im2col row-tiles, VMEM sizing, row-tile choice.
# ----------------------------------------------------------------------------
def _fold_bn(p):
    inv_std = 1.0 / jnp.sqrt(p["var"] + BN_EPS)
    scale = p["gamma"] * inv_std
    bias = p["beta"] - p["gamma"] * p["mean"] * inv_std
    return scale, bias


def _build_p1_tiles(x_nhwc, Ht, K1pad):
    """(B,H,W,Cin) -> (B, n_tiles, (Ht+4)*W, K1pad) bf16 overlapping row-tiles
    of the 3x3 'same' conv im2col (2 pre-pool halo rows per side, zero rows at
    the image boundary; the kernel overwrites boundary halos with exact zeros)."""
    B, H, W, Cin = x_nhwc.shape
    K1 = 9 * Cin
    xb = x_nhwc.astype(jnp.bfloat16)                      # bf16 from the start
    xp = jnp.pad(xb, ((0, 0), (1, 1), (1, 1), (0, 0)))
    cols = [xp[:, dh:dh + H, dw:dw + W, :]
            for dh in range(3) for dw in range(3)]
    p = jnp.concatenate(cols, axis=-1)                    # (B, H, W, 9*Cin)
    p = jnp.pad(p, ((0, 0), (2, 2), (0, 0), (0, K1pad - K1)))
    n_tiles = H // Ht
    tiles = [p[:, t * Ht:t * Ht + Ht + 4] for t in range(n_tiles)]
    p = jnp.stack(tiles, axis=1)                          # (B,nt,Ht+4,W,K1pad)
    return p.reshape(B, n_tiles, (Ht + 4) * W, K1pad)


def _step_vmem_bytes(Ht, W, K1pad, C1pad, C2pad):
    """Conservative per-grid-step VMEM estimate (weights counted double in
    case single-buffering is not honored; dominant transients included)."""
    Ht2, Ht4, W2, W4 = Ht // 2, Ht // 4, W // 2, W // 4
    p1_blk = (Ht + 4) * W * K1pad * 2                     # bf16, x2 buffers
    out_blk = Ht4 * W4 * C2pad * 4                        # f32,  x2 buffers
    w_const = (K1pad * C1pad + 9 * C1pad * C2pad) * 2 + (C1pad + C2pad) * 4
    inter = (Ht2 + 2) * (W2 + 2) * C1pad * 2              # bf16 scratch
    trans = ((Ht + 4) * W * C1pad * 4                     # pre-pool y1 (f32)
             + Ht2 * W2 * 3 * C1pad * 2                   # one dh-group LHS
             + Ht2 * W2 * C2pad * 4)                      # conv2 accumulator
    return 2 * p1_blk + 2 * out_blk + 2 * w_const + inter + trans


def _pick_row_tile(H, W, K1pad, C1pad, C2pad, budget=24 << 20):
    """Largest row tile (multiple of 4, divides H) whose per-step VMEM fits
    the budget; falls back to the smallest valid tile."""
    cands = [Ht for Ht in range(4, H + 1, 4) if H % Ht == 0]
    for Ht in sorted(cands, reverse=True):
        if _step_vmem_bytes(Ht, W, K1pad, C1pad, C2pad) <= budget:
            return Ht
    return cands[0]


def _const_spec(shape, index_map):
    """Grid-invariant blocks (weights/biases): request single buffering so a
    useless second pipeline buffer is not reserved; fall back if the installed
    Pallas version does not expose pipeline_mode."""
    if hasattr(pl, "Buffered"):
        try:
            return pl.BlockSpec(shape, index_map, pipeline_mode=pl.Buffered(1))
        except TypeError:
            pass
    return pl.BlockSpec(shape, index_map)


# ----------------------------------------------------------------------------
# Wrapper: layout prep (im2col tiles, BN fold, padding) + pallas_call.
# ----------------------------------------------------------------------------
def encoder_fused_nhwc(x_nhwc, p_vision, p_branch, row_tile=None):
    """x_nhwc: (B, H, W, Cin) -> (B, H//4, W//4, feat) via both fused blocks."""
    B, H, W, Cin = x_nhwc.shape
    assert H % 4 == 0 and W % 4 == 0, "two 2x2 maxpools need H, W % 4 == 0"
    C1 = p_vision["w"].shape[-1]
    C2 = p_branch["w"].shape[-1]
    H4, W4 = H // 4, W // 4

    K1 = 9 * Cin
    K1pad = _round_up(K1, LANE)
    C1pad = _round_up(C1, LANE)
    C2pad = _round_up(C2, LANE)

    Ht = _pick_row_tile(H, W, K1pad, C1pad, C2pad) if row_tile is None else row_tile
    assert H % Ht == 0 and Ht % 4 == 0, (H, Ht)
    n_tiles = H // Ht
    Ht2, Ht4 = Ht // 2, Ht // 4
    W2 = W // 2

    # Block-1 im2col tiles (lane-dense, bf16, 2-row halo per side).
    p1 = _build_p1_tiles(x_nhwc, Ht, K1pad)

    # Block-1 weights: fold BN scale, K ordered [tap, cin], pad K/Cout to 128.
    s1, b1 = _fold_bn(p_vision)
    w1 = (p_vision["w"] * s1).reshape(K1, C1)
    w1 = jnp.pad(w1, ((0, K1pad - K1), (0, C1pad - C1))).astype(jnp.bfloat16)
    b1 = jnp.pad(b1, (0, C1pad - C1)).reshape(1, C1pad).astype(jnp.float32)

    # Block-2 weights grouped by dh: each group (3*C1pad, C2pad); the K index
    # within a group is dw*C1pad + cin, matching the in-kernel 3-tap concat.
    s2, b2 = _fold_bn(p_branch)
    w2 = p_branch["w"] * s2                               # (3, 3, C1, C2)
    w2 = jnp.pad(w2, ((0, 0), (0, 0), (0, C1pad - C1), (0, C2pad - C2)))
    w2 = w2.reshape(3, 3 * C1pad, C2pad).astype(jnp.bfloat16)
    b2 = jnp.pad(b2, (0, C2pad - C2)).reshape(1, C2pad).astype(jnp.float32)

    kernel = functools.partial(_fused_kernel, Ht=Ht, W=W, C1pad=C1pad,
                               C2pad=C2pad, n_tiles=n_tiles)

    vmem_limit = int(min(max(_step_vmem_bytes(Ht, W, K1pad, C1pad, C2pad)
                             + (8 << 20), 32 << 20), 64 << 20))

    out = pl.pallas_call(
        kernel,
        out_shape=jax.ShapeDtypeStruct((B, n_tiles, Ht4 * W4, C2pad),
                                       jnp.float32),
        grid_spec=pltpu.PrefetchScalarGridSpec(
            num_scalar_prefetch=0,
            grid=(B, n_tiles),
            in_specs=[
                pl.BlockSpec((1, 1, (Ht + 4) * W, K1pad),
                             lambda b, t: (b, t, 0, 0)),
                _const_spec((K1pad, C1pad), lambda b, t: (0, 0)),
                _const_spec((1, C1pad), lambda b, t: (0, 0)),
                _const_spec((3, 3 * C1pad, C2pad), lambda b, t: (0, 0, 0)),
                _const_spec((1, C2pad), lambda b, t: (0, 0)),
            ],
            out_specs=pl.BlockSpec((1, 1, Ht4 * W4, C2pad),
                                   lambda b, t: (b, t, 0, 0)),
            scratch_shapes=[pltpu.VMEM((Ht2 + 2, W2 + 2, C1pad), jnp.bfloat16)],
        ),
        compiler_params=pltpu.CompilerParams(
            dimension_semantics=("parallel", "parallel"),
            vmem_limit_bytes=vmem_limit),
    )(p1, w1, b1, w2, b2)

    # (B, n_tiles, Ht4*W4, Cpad) -> (B, H4, W4, Cpad); padded lanes are zero.
    out = out.reshape(B, n_tiles, Ht4, W4, C2pad).reshape(B, H4, W4, C2pad)
    return out[..., :C2]


# ----------------------------------------------------------------------------
# Parameter init mirroring the PyTorch module's __init__.
# ----------------------------------------------------------------------------
def kaiming_normal_fan_out(key, kh, kw, cin, cout, negative_slope=LEAKY_SLOPE):
    gain = jnp.sqrt(2.0 / (1.0 + negative_slope ** 2))
    fan_out = cout * kh * kw
    std = gain / jnp.sqrt(fan_out)
    return jax.random.normal(key, (kh, kw, cin, cout), jnp.float32) * std


def init_params(key, orig_channels, dest_channels, feat_channels):
    keys = jax.random.split(key, 3)
    chains = {
        "vision": (orig_channels, dest_channels),
        "branch1": (dest_channels, feat_channels),
        "branch2": (dest_channels, feat_channels),
    }
    params = {}
    for k, (name, (cin, cout)) in zip(keys, chains.items()):
        params[name] = {
            "w": kaiming_normal_fan_out(k, 3, 3, cin, cout),
            # BatchNorm init per module __init__: weight=1, bias=0; fresh stats.
            "gamma": jnp.ones((cout,), jnp.float32),
            "beta": jnp.zeros((cout,), jnp.float32),
            "mean": jnp.zeros((cout,), jnp.float32),
            "var": jnp.ones((cout,), jnp.float32),
        }
    return params


def encoder_vcnet12_forward(x_nchw, params, branch=1, row_tile=None):
    """Matches EncoderVCNet12.forward(x, sideout=False, branch=branch).

    x_nchw: (B, orig_channels, H, W). Returns the NCHW feature map."""
    if branch == 1:
        branch_name = "branch1"
    elif branch == 2:
        branch_name = "branch2"
    else:
        raise ValueError()
    x = jnp.transpose(x_nchw, (0, 2, 3, 1))            # NCHW -> NHWC
    y = encoder_fused_nhwc(x, params["vision"], params[branch_name],
                           row_tile=row_tile)
    return jnp.transpose(y, (0, 3, 1, 2))              # NHWC -> NCHW


# ----------------------------------------------------------------------------
# Pure-JAX reference (mirrors the kernel's bf16 operand precision).
# ----------------------------------------------------------------------------
def _reference_block(x_nhwc, p):
    inv_std = 1.0 / jnp.sqrt(p["var"] + BN_EPS)
    w_eff = p["w"] * (p["gamma"] * inv_std)            # fold BN scale (f32)
    bias = p["beta"] - p["gamma"] * p["mean"] * inv_std
    y = jax.lax.conv_general_dilated(
        x_nhwc.astype(jnp.bfloat16), w_eff.astype(jnp.bfloat16),
        window_strides=(1, 1), padding="SAME",
        dimension_numbers=("NHWC", "HWIO", "NHWC"),
        preferred_element_type=jnp.float32)
    y = y + bias
    y = jnp.where(y >= 0, y, LEAKY_SLOPE * y)
    return jax.lax.reduce_window(y, -jnp.inf, jax.lax.max,
                                 (1, 2, 2, 1), (1, 2, 2, 1), "VALID")


def _reference_forward(x_nchw, params, branch=1):
    name = "branch1" if branch == 1 else "branch2"
    x = jnp.transpose(x_nchw, (0, 2, 3, 1))
    x = _reference_block(x, params["vision"])
    x = _reference_block(x, params[name])
    return jnp.transpose(x, (0, 3, 1, 2))


if __name__ == "__main__":
    # Small shapes consistent with the module (orig=3, dest=9, small feat).
    B, orig_ch, dest_ch, feat_ch, H, W = 2, 3, 9, 32, 16, 16

    key = jax.random.PRNGKey(0)
    kx, kp = jax.random.split(key)
    x = jax.random.normal(kx, (B, orig_ch, H, W), jnp.float32)
    params = init_params(kp, orig_ch, dest_ch, feat_ch)

    ref = jax.block_until_ready(_reference_forward(x, params, branch=1))

    # Auto-chosen row tile (whole image at this size).
    fwd = jax.jit(lambda xx, pp: encoder_vcnet12_forward(xx, pp, branch=1))
    out = jax.block_until_ready(fwd(x, params))
    assert out.shape == (B, feat_ch, H // 4, W // 4), out.shape
    err = float(jnp.max(jnp.abs(out - ref)))
    assert err < 1e-2, err

    # Exercise the multi-row-tile (halo) path as well.
    fwd_t = jax.jit(lambda xx, pp: encoder_vcnet12_forward(xx, pp, branch=1,
                                                           row_tile=8))
    out_t = jax.block_until_ready(fwd_t(x, params))
    err_t = float(jnp.max(jnp.abs(out_t - ref)))
    assert err_t < 1e-2, err_t

    print("KERNEL_OK")
</pallas_src>

<mosaic_0001>
module attributes {stable_mosaic.version = 11 : i64} {
  func.func @_fused_kernel(%arg0: i32, %arg1: i32, %arg2: memref<1x1x320x128xbf16, #tpu.memory_space<vmem>>, %arg3: memref<128x128xbf16, #tpu.memory_space<vmem>>, %arg4: memref<1x128xf32, #tpu.memory_space<vmem>>, %arg5: memref<3x384x128xbf16, #tpu.memory_space<vmem>>, %arg6: memref<1x128xf32, #tpu.memory_space<vmem>>, %arg7: memref<1x1x16x128xf32, #tpu.memory_space<vmem>>, %arg8: memref<10x10x128xbf16, #tpu.memory_space<vmem>>) attributes {dimension_semantics = [#tpu.dimension_semantics<parallel>, #tpu.dimension_semantics<parallel>], iteration_bounds = array<i64: 2, 1>, scalar_prefetch = 0 : i64, scratch_operands = 1 : i64, tpu.core_type = #tpu.core_type<tc>, window_params = [{transform_indices = @transform_0, window_bounds = array<i64: 1, 1, 320, 128>}, {pipeline_mode = #tpu.pipeline_mode<synchronous>, transform_indices = @transform_1, window_bounds = array<i64: 128, 128>}, {pipeline_mode = #tpu.pipeline_mode<synchronous>, transform_indices = @transform_2, window_bounds = array<i64: 1, 128>}, {pipeline_mode = #tpu.pipeline_mode<synchronous>, transform_indices = @transform_3, window_bounds = array<i64: 3, 384, 128>}, {pipeline_mode = #tpu.pipeline_mode<synchronous>, transform_indices = @transform_4, window_bounds = array<i64: 1, 128>}, {transform_indices = @transform_5, window_bounds = array<i64: 1, 1, 16, 128>}]} {
    %c0 = arith.constant 0 : index
    %c0_0 = arith.constant 0 : index
    %c0_1 = arith.constant 0 : index
    %c0_2 = arith.constant 0 : index
    %0 = vector.load %arg2[%c0, %c0_0, %c0_1, %c0_2] : memref<1x1x320x128xbf16, #tpu.memory_space<vmem>>, vector<1x1x320x128xbf16>
    %1 = vector.shape_cast %0 : vector<1x1x320x128xbf16> to vector<320x128xbf16>
    %c0_3 = arith.constant 0 : index
    %c0_4 = arith.constant 0 : index
    %2 = vector.load %arg3[%c0_3, %c0_4] : memref<128x128xbf16, #tpu.memory_space<vmem>>, vector<128x128xbf16>
    %cst = arith.constant dense<0.000000e+00> : vector<320x128xf32>
    %3 = tpu.matmul %1, %2, %cst {dimension_numbers = #tpu.dot_dimension_numbers<[1], [0], [0], [1], [0, 0, 1, 1], [], []>} : vector<320x128xbf16>, vector<128x128xbf16>, vector<320x128xf32> -> vector<320x128xf32>
    %c0_5 = arith.constant 0 : index
    %c0_6 = arith.constant 0 : index
    %4 = vector.load %arg4[%c0_5, %c0_6] : memref<1x128xf32, #tpu.memory_space<vmem>>, vector<1x128xf32>
    %5 = vector.broadcast %4 : vector<1x128xf32> to vector<320x128xf32>
    %6 = arith.addf %3, %5 : vector<320x128xf32>
    %cst_7 = arith.constant 0.00999999977 : f32
    %7 = vector.broadcast %cst_7 : f32 to vector<320x128xf32>
    %8 = arith.mulf %7, %6 : vector<320x128xf32>
    %9 = arith.maximumf %6, %8 : vector<320x128xf32>
    %10 = vector.shape_cast %9 : vector<320x128xf32> to vector<10x2x8x2x128xf32>
    %cst_8 = arith.constant dense<0xFF800000> : vector<10x2x8x128xf32>
    %11 = vector.multi_reduction <maximumf>, %10, %cst_8 [3] : vector<10x2x8x2x128xf32> to vector<10x2x8x128xf32>
    %cst_9 = arith.constant dense<0xFF800000> : vector<10x8x128xf32>
    %12 = vector.multi_reduction <maximumf>, %11, %cst_9 [1] : vector<10x2x8x128xf32> to vector<10x8x128xf32>
    %13 = arith.truncf %12 : vector<10x8x128xf32> to vector<10x8x128xbf16>
    %c0_10 = arith.constant 0 : index
    %c1 = arith.constant 1 : index
    %c0_11 = arith.constant 0 : index
    %14 = vector.load %arg8[%c0_10, %c1, %c0_11] : memref<10x10x128xbf16, #tpu.memory_space<vmem>>, vector<10x8x128xbf16>
    tpu.vector_store %arg8[%c0_10, %c1, %c0_11], %13 {strides = array<i32>} : memref<10x10x128xbf16, #tpu.memory_space<vmem>>, vector<10x8x128xbf16>,
    %cst_12 = arith.constant 0.000000e+00 : bf16
    %15 = vector.broadcast %cst_12 : bf16 to vector<10x1x128xbf16>
    %c0_13 = arith.constant 0 : index
    %c0_14 = arith.constant 0 : index
    %c0_15 = arith.constant 0 : index
    %16 = vector.load %arg8[%c0_13, %c0_14, %c0_15] : memref<10x10x128xbf16, #tpu.memory_space<vmem>>, vector<10x1x128xbf16>
    tpu.vector_store %arg8[%c0_13, %c0_14, %c0_15], %15 {strides = array<i32>} : memref<10x10x128xbf16, #tpu.memory_space<vmem>>, vector<10x1x128xbf16>,
    %c0_16 = arith.constant 0 : index
    %c9 = arith.constant 9 : index
    %c0_17 = arith.constant 0 : index
    %17 = vector.load %arg8[%c0_16, %c9, %c0_17] : memref<10x10x128xbf16, #tpu.memory_space<vmem>>, vector<10x1x128xbf16>
    tpu.vector_store %arg8[%c0_16, %c9, %c0_17], %15 {strides = array<i32>} : memref<10x10x128xbf16, #tpu.memory_space<vmem>>, vector<10x1x128xbf16>,
    %cst_18 = arith.constant 0.000000e+00 : bf16
    %18 = vector.broadcast %cst_18 : bf16 to vector<1x10x128xbf16>
    %c0_i32 = arith.constant 0 : i32
    %19 = arith.cmpi eq, %arg1, %c0_i32 : i32
    %20 = arith.extui %19 : i1 to i32
    %c0_i32_19 = arith.constant 0 : i32
    %21 = arith.cmpi ne, %20, %c0_i32_19 : i32
    scf.if %21 {
      %c0_70 = arith.constant 0 : index
      %c0_71 = arith.constant 0 : index
      %c0_72 = arith.constant 0 : index
      %66 = vector.load %arg8[%c0_70, %c0_71, %c0_72] : memref<10x10x128xbf16, #tpu.memory_space<vmem>>, vector<1x10x128xbf16>
      tpu.vector_store %arg8[%c0_70, %c0_71, %c0_72], %18 {strides = array<i32>} : memref<10x10x128xbf16, #tpu.memory_space<vmem>>, vector<1x10x128xbf16>,
    } else {
    }
    %c0_i32_20 = arith.constant 0 : i32
    %22 = arith.cmpi eq, %arg1, %c0_i32_20 : i32
    %23 = arith.extui %22 : i1 to i32
    %c0_i32_21 = arith.constant 0 : i32
    %24 = arith.cmpi ne, %23, %c0_i32_21 : i32
    scf.if %24 {
      %c9_70 = arith.constant 9 : index
      %c0_71 = arith.constant 0 : index
      %c0_72 = arith.constant 0 : index
      %66 = vector.load %arg8[%c9_70, %c0_71, %c0_72] : memref<10x10x128xbf16, #tpu.memory_space<vmem>>, vector<1x10x128xbf16>
      tpu.vector_store %arg8[%c9_70, %c0_71, %c0_72], %18 {strides = array<i32>} : memref<10x10x128xbf16, #tpu.memory_space<vmem>>, vector<1x10x128xbf16>,
    } else {
    }
    %cst_22 = arith.constant 0.000000e+00 : f32
    %25 = vector.broadcast %cst_22 : f32 to vector<64x128xf32>
    %c0_23 = arith.constant 0 : index
    %c0_24 = arith.constant 0 : index
    %c0_25 = arith.constant 0 : index
    %26 = vector.load %arg8[%c0_23, %c0_24, %c0_25] : memref<10x10x128xbf16, #tpu.memory_space<vmem>>, vector<8x8x128xbf16>
    %c0_26 = arith.constant 0 : index
    %c1_27 = arith.constant 1 : index
    %c0_28 = arith.constant 0 : index
    %27 = vector.load %arg8[%c0_26, %c1_27, %c0_28] : memref<10x10x128xbf16, #tpu.memory_space<vmem>>, vector<8x8x128xbf16>
    %c0_29 = arith.constant 0 : index
    %c2 = arith.constant 2 : index
    %c0_30 = arith.constant 0 : index
    %28 = vector.load %arg8[%c0_29, %c2, %c0_30] : memref<10x10x128xbf16, #tpu.memory_space<vmem>>, vector<8x8x128xbf16>
    %29 = tpu.concatenate %26, %27, %28 in 2 : vector<8x8x128xbf16>, vector<8x8x128xbf16>, vector<8x8x128xbf16> -> vector<8x8x384xbf16>
    %30 = vector.shape_cast %29 : vector<8x8x384xbf16> to vector<64x384xbf16>
    %c0_31 = arith.constant 0 : index
    %c0_32 = arith.constant 0 : index
    %c0_33 = arith.constant 0 : index
    %31 = vector.load %arg5[%c0_31, %c0_32, %c0_33] : memref<3x384x128xbf16, #tpu.memory_space<vmem>>, vector<1x384x128xbf16>
    %32 = vector.shape_cast %31 : vector<1x384x128xbf16> to vector<384x128xbf16>
    %cst_34 = arith.constant dense<0.000000e+00> : vector<64x128xf32>
    %33 = tpu.matmul %30, %32, %cst_34 {dimension_numbers = #tpu.dot_dimension_numbers<[1], [0], [0], [1], [0, 0, 1, 1], [], []>} : vector<64x384xbf16>, vector<384x128xbf16>, vector<64x128xf32> -> vector<64x128xf32>
    %34 = arith.addf %25, %33 : vector<64x128xf32>
    %c1_35 = arith.constant 1 : index
    %c0_36 = arith.constant 0 : index
    %c0_37 = arith.constant 0 : index
    %35 = vector.load %arg8[%c1_35, %c0_36, %c0_37] : memref<10x10x128xbf16, #tpu.memory_space<vmem>>, vector<8x8x128xbf16>
    %c1_38 = arith.constant 1 : index
    %c1_39 = arith.constant 1 : index
    %c0_40 = arith.constant 0 : index
    %36 = vector.load %arg8[%c1_38, %c1_39, %c0_40] : memref<10x10x128xbf16, #tpu.memory_space<vmem>>, vector<8x8x128xbf16>
    %c1_41 = arith.constant 1 : index
    %c2_42 = arith.constant 2 : index
    %c0_43 = arith.constant 0 : index
    %37 = vector.load %arg8[%c1_41, %c2_42, %c0_43] : memref<10x10x128xbf16, #tpu.memory_space<vmem>>, vector<8x8x128xbf16>
    %38 = tpu.concatenate %35, %36, %37 in 2 : vector<8x8x128xbf16>, vector<8x8x128xbf16>, vector<8x8x128xbf16> -> vector<8x8x384xbf16>
    %39 = vector.shape_cast %38 : vector<8x8x384xbf16> to vector<64x384xbf16>
    %c1_44 = arith.constant 1 : index
    %c0_45 = arith.constant 0 : index
    %c0_46 = arith.constant 0 : index
    %40 = vector.load %arg5[%c1_44, %c0_45, %c0_46] : memref<3x384x128xbf16, #tpu.memory_space<vmem>>, vector<1x384x128xbf16>
    %41 = vector.shape_cast %40 : vector<1x384x128xbf16> to vector<384x128xbf16>
    %cst_47 = arith.constant dense<0.000000e+00> : vector<64x128xf32>
    %42 = tpu.matmul %39, %41, %cst_47 {dimension_numbers = #tpu.dot_dimension_numbers<[1], [0], [0], [1], [0, 0, 1, 1], [], []>} : vector<64x384xbf16>, vector<384x128xbf16>, vector<64x128xf32> -> vector<64x128xf32>
    %43 = arith.addf %34, %42 : vector<64x128xf32>
    %c2_48 = arith.constant 2 : index
    %c0_49 = arith.constant 0 : index
    %c0_50 = arith.constant 0 : index
    %44 = vector.load %arg8[%c2_48, %c0_49, %c0_50] : memref<10x10x128xbf16, #tpu.memory_space<vmem>>, vector<8x8x128xbf16>
    %c2_51 = arith.constant 2 : index
    %c1_52 = arith.constant 1 : index
    %c0_53 = arith.constant 0 : index
    %45 = vector.load %arg8[%c2_51, %c1_52, %c0_53] : memref<10x10x128xbf16, #tpu.memory_space<vmem>>, vector<8x8x128xbf16>
    %c2_54 = arith.constant 2 : index
    %c2_55 = arith.constant 2 : index
    %c0_56 = arith.constant 0 : index
    %46 = vector.load %arg8[%c2_54, %c2_55, %c0_56] : memref<10x10x128xbf16, #tpu.memory_space<vmem>>, vector<8x8x128xbf16>
    %47 = tpu.concatenate %44, %45, %46 in 2 : vector<8x8x128xbf16>, vector<8x8x128xbf16>, vector<8x8x128xbf16> -> vector<8x8x384xbf16>
    %48 = vector.shape_cast %47 : vector<8x8x384xbf16> to vector<64x384xbf16>
    %c2_57 = arith.constant 2 : index
    %c0_58 = arith.constant 0 : index
    %c0_59 = arith.constant 0 : index
    %49 = vector.load %arg5[%c2_57, %c0_58, %c0_59] : memref<3x384x128xbf16, #tpu.memory_space<vmem>>, vector<1x384x128xbf16>
    %50 = vector.shape_cast %49 : vector<1x384x128xbf16> to vector<384x128xbf16>
    %cst_60 = arith.constant dense<0.000000e+00> : vector<64x128xf32>
    %51 = tpu.matmul %48, %50, %cst_60 {dimension_numbers = #tpu.dot_dimension_numbers<[1], [0], [0], [1], [0, 0, 1, 1], [], []>} : vector<64x384xbf16>, vector<384x128xbf16>, vector<64x128xf32> -> vector<64x128xf32>
    %52 = arith.addf %43, %51 : vector<64x128xf32>
    %c0_61 = arith.constant 0 : index
    %c0_62 = arith.constant 0 : index
    %53 = vector.load %arg6[%c0_61, %c0_62] : memref<1x128xf32, #tpu.memory_space<vmem>>, vector<1x128xf32>
    %54 = vector.broadcast %53 : vector<1x128xf32> to vector<64x128xf32>
    %55 = arith.addf %52, %54 : vector<64x128xf32>
    %cst_63 = arith.constant 0.00999999977 : f32
    %56 = vector.broadcast %cst_63 : f32 to vector<64x128xf32>
    %57 = arith.mulf %56, %55 : vector<64x128xf32>
    %58 = arith.maximumf %55, %57 : vector<64x128xf32>
    %59 = vector.shape_cast %58 : vector<64x128xf32> to vector<4x2x4x2x128xf32>
    %cst_64 = arith.constant dense<0xFF800000> : vector<4x2x4x128xf32>
    %60 = vector.multi_reduction <maximumf>, %59, %cst_64 [3] : vector<4x2x4x2x128xf32> to vector<4x2x4x128xf32>
    %cst_65 = arith.constant dense<0xFF800000> : vector<4x4x128xf32>
    %61 = vector.multi_reduction <maximumf>, %60, %cst_65 [1] : vector<4x2x4x128xf32> to vector<4x4x128xf32>
    %62 = vector.shape_cast %61 : vector<4x4x128xf32> to vector<16x128xf32>
    %c0_66 = arith.constant 0 : index
    %c0_67 = arith.constant 0 : index
    %c0_68 = arith.constant 0 : index
    %c0_69 = arith.constant 0 : index
    %63 = vector.load %arg7[%c0_66, %c0_67, %c0_68, %c0_69] : memref<1x1x16x128xf32, #tpu.memory_space<vmem>>, vector<1x1x16x128xf32>
    %64 = vector.shape_cast %63 : vector<1x1x16x128xf32> to vector<16x128xf32>
    %65 = vector.shape_cast %62 : vector<16x128xf32> to vector<1x1x16x128xf32>
    tpu.vector_store %arg7[%c0_66, %c0_67, %c0_68, %c0_69], %65 {strides = array<i32>} : memref<1x1x16x128xf32, #tpu.memory_space<vmem>>, vector<1x1x16x128xf32>,
    return
  }
  func.func @transform_0(%arg0: i32, %arg1: i32) -> (i32, i32, i32, i32) {
    %c0_i32 = arith.constant 0 : i32
    %c0_i32_0 = arith.constant 0 : i32
    %c0_i32_1 = arith.constant 0 : i32
    return %arg0, %arg1, %c0_i32, %c0_i32_0 : i32, i32, i32, i32
  }
  func.func @transform_1(%arg0: i32, %arg1: i32) -> (i32, i32) {
    %c0_i32 = arith.constant 0 : i32
    %c0_i32_0 = arith.constant 0 : i32
    %c0_i32_1 = arith.constant 0 : i32
    return %c0_i32, %c0_i32_0 : i32, i32
  }
  func.func @transform_2(%arg0: i32, %arg1: i32) -> (i32, i32) {
    %c0_i32 = arith.constant 0 : i32
    %c0_i32_0 = arith.constant 0 : i32
    %c0_i32_1 = arith.constant 0 : i32
    return %c0_i32, %c0_i32_0 : i32, i32
  }
  func.func @transform_3(%arg0: i32, %arg1: i32) -> (i32, i32, i32) {
    %c0_i32 = arith.constant 0 : i32
    %c0_i32_0 = arith.constant 0 : i32
    %c0_i32_1 = arith.constant 0 : i32
    %c0_i32_2 = arith.constant 0 : i32
    return %c0_i32, %c0_i32_0, %c0_i32_1 : i32, i32, i32
  }
  func.func @transform_4(%arg0: i32, %arg1: i32) -> (i32, i32) {
    %c0_i32 = arith.constant 0 : i32
    %c0_i32_0 = arith.constant 0 : i32
    %c0_i32_1 = arith.constant 0 : i32
    return %c0_i32, %c0_i32_0 : i32, i32
  }
  func.func @transform_5(%arg0: i32, %arg1: i32) -> (i32, i32, i32, i32) {
    %c0_i32 = arith.constant 0 : i32
    %c0_i32_0 = arith.constant 0 : i32
    %c0_i32_1 = arith.constant 0 : i32
    return %arg0, %arg1, %c0_i32, %c0_i32_0 : i32, i32, i32, i32
  }
}

</mosaic_0001>

<llo_original>
// kernel: _lambda_.1
$region0: #{_lambda_.1}
  #allocation0 [shape = 'u32[]', space=smem, size = 0x4, offset = 0x4, fixed_abs, tag = 'smem constant byte address 0x4 - core index']
  #allocation1 [shape = 'u32[72,128]{1,0:T(1,128)}', space=vmem, size = 0x9000, scoped, tag = 'internal scratch']
  #allocation2 [shape = 'bf16[10,10,128]{2,1,0:T(8,128)(2,1)}', space=vmem, size = 0xa000, scoped, tag = 'scratch operand']
  %s0 = inlined_call_operand.vmem [shape: bf16[2,1,320,128], index: 0, kind: input, shape index: {}]
  %s1 = inlined_call_operand.vmem [shape: bf16[128,128], index: 1, kind: input, shape index: {}]
  %s2 = inlined_call_operand.vmem [shape: f32[1,128], index: 2, kind: input, shape index: {}]
  %s3 = inlined_call_operand.vmem [shape: bf16[3,384,128], index: 3, kind: input, shape index: {}]
  %s4 = inlined_call_operand.vmem [shape: f32[1,128], index: 4, kind: input, shape index: {}]
  %s5 = inlined_call_operand.vmem [shape: f32[2,1,16,128], index: 5, kind: output, shape index: {}]
  %s6 = sld [smem:[#allocation0]]
  $region57: #{_lambda_.1} parent=0
    _
  %s8 = ssub.s32 1, %s6
  %s9 = scalar_select 0, %s8, %s6
  loop: start=0, step=1, limit=4
  $region2: #{_lambda_.1} parent=0 // loop_pre_header
    _
  $region3: #{_lambda_.1} parent=0 // loop_header
    %s11 = sphi 0, %s15
    %p12 = scmp.ge.s32.totalorder %s11, 4
    %s18 = sphi 0, %s30
    %s19 = sphi 0, %s26
    %s20 = sphi 0, %s18
    %s21 = sphi 0, %s19
    %s22 = sphi 0, %s20
    %s23 = sphi 0, %s21
    %s35 = sphi 0, %s37
    %s38 = sphi 0, %s35
    %s39 = sphi 0, %s38
    %s55 = sphi 0, %s39
    %s59 = sphi 0, %s59
    %s61 = sphi 0, %s59
    %s62 = sphi 0, %s61
    %s76 = sphi 0, %s62
    %s80 = sphi 0, %s80
    %s82 = sphi 0, %s80
    %s83 = sphi 0, %s82
    %s97 = sphi 0, %s83
    %s101 = sphi 0, %s101
    %s103 = sphi 0, %s101
    %s104 = sphi 0, %s103
    %s118 = sphi 0, %s104
    %s122 = sphi 0, %s122
    %s124 = sphi 0, %s122
    %s125 = sphi 0, %s124
    %s139 = sphi 0, %s125
    %s147 = sphi 0, %s149
    %s150 = sphi 0, %s147
    %s151 = sphi 0, %s150
    %s167 = sphi 0, %s151
  $region4: #{_lambda_.1} parent=0 // loop_header_branch
    %14 = sbr.rel (%p12) target = $region8
  $region5: #{_lambda_.1} parent=0 // loop_body
    %s16 = ssub.s32 %s11, 1
    %s17 = ssub.s32 %s11, 2
    %s24 = sadd.s32 1, %s19
    %p25 = scmp.ge.s32.totalorder %s24, 1
    %s26 = scalar_select %p25, 0, %s24
    %s27 = sadd.s32 1, %s18
    %s28 = scalar_select %p25, %s27, %s18
    %p29 = scmp.ge.s32.totalorder %s28, 2
    %s30 = scalar_select %p29, 0, %s28
    %s31 = ssub.s32 %s18, %s30
    %s32 = ssub.s32 %s19, %s26
    %s33 = sor.u32 %s31, %s32
    %p34 = scmp.eq.s32.totalorder %s33, 0
    %s36 = sadd.s32 %s35, 1
    %s37 = scalar_select %p34, %s35, %s36
    %p40 = pneg %p34
    %p41 = scmp.eq.s32.totalorder %s11, 1
    %p42 = por %p40, %p41
    %p43 = scmp.ne.s32.totalorder %s35, %s38
    %p44 = scmp.eq.s32.totalorder %s11, 0
    %p45 = por %p43, %p44
    %p46 = scmp.ne.s32.totalorder %s35, %s38
    %p47 = scmp.eq.s32.totalorder %s16, 1
    %p48 = por %p46, %p47
    %p49 = scmp.ne.s32.totalorder %s38, %s39
    %p50 = scmp.eq.s32.totalorder %s16, 0
    %p51 = por %p49, %p50
    %p52 = scmp.ne.s32.totalorder %s38, %s39
    %p53 = scmp.eq.s32.totalorder %s17, 1
    %p54 = por %p52, %p53
    %p56 = scmp.ne.s32.totalorder %s39, %s55
    %p57 = scmp.eq.s32.totalorder %s17, 0
    %p58 = por %p56, %p57
    %s60 = sadd.s32 %s59, 1
    %p63 = scmp.eq.s32.totalorder %s11, 1
    %p64 = scmp.ne.s32.totalorder %s59, %s61
    %p65 = scmp.eq.s32.totalorder %s11, 0
    %p66 = por %p64, %p65
    %p67 = scmp.ne.s32.totalorder %s59, %s61
    %p68 = scmp.eq.s32.totalorder %s16, 1
    %p69 = por %p67, %p68
    %p70 = scmp.ne.s32.totalorder %s61, %s62
    %p71 = scmp.eq.s32.totalorder %s16, 0
    %p72 = por %p70, %p71
    %p73 = scmp.ne.s32.totalorder %s61, %s62
    %p74 = scmp.eq.s32.totalorder %s17, 1
    %p75 = por %p73, %p74
    %p77 = scmp.ne.s32.totalorder %s62, %s76
    %p78 = scmp.eq.s32.totalorder %s17, 0
    %p79 = por %p77, %p78
    %s81 = sadd.s32 %s80, 1
    %p84 = scmp.eq.s32.totalorder %s11, 1
    %p85 = scmp.ne.s32.totalorder %s80, %s82
    %p86 = scmp.eq.s32.totalorder %s11, 0
    %p87 = por %p85, %p86
    %p88 = scmp.ne.s32.totalorder %s80, %s82
    %p89 = scmp.eq.s32.totalorder %s16, 1
    %p90 = por %p88, %p89
    %p91 = scmp.ne.s32.totalorder %s82, %s83
    %p92 = scmp.eq.s32.totalorder %s16, 0
    %p93 = por %p91, %p92
    %p94 = scmp.ne.s32.totalorder %s82, %s83
    %p95 = scmp.eq.s32.totalorder %s17, 1
    %p96 = por %p94, %p95
    %p98 = scmp.ne.s32.totalorder %s83, %s97
    %p99 = scmp.eq.s32.totalorder %s17, 0
    %p100 = por %p98, %p99
    %s102 = sadd.s32 %s101, 1
    %p105 = scmp.eq.s32.totalorder %s11, 1
    %p106 = scmp.ne.s32.totalorder %s101, %s103
    %p107 = scmp.eq.s32.totalorder %s11, 0
    %p108 = por %p106, %p107
    %p109 = scmp.ne.s32.totalorder %s101, %s103
    %p110 = scmp.eq.s32.totalorder %s16, 1
    %p111 = por %p109, %p110
    %p112 = scmp.ne.s32.totalorder %s103, %s104
    %p113 = scmp.eq.s32.totalorder %s16, 0
    %p114 = por %p112, %p113
    %p115 = scmp.ne.s32.totalorder %s103, %s104
    %p116 = scmp.eq.s32.totalorder %s17, 1
    %p117 = por %p115, %p116
    %p119 = scmp.ne.s32.totalorder %s104, %s118
    %p120 = scmp.eq.s32.totalorder %s17, 0
    %p121 = por %p119, %p120
    %s123 = sadd.s32 %s122, 1
    %p126 = scmp.eq.s32.totalorder %s11, 1
    %p127 = scmp.ne.s32.totalorder %s122, %s124
    %p128 = scmp.eq.s32.totalorder %s11, 0
    %p129 = por %p127, %p128
    %p130 = scmp.ne.s32.totalorder %s122, %s124
    %p131 = scmp.eq.s32.totalorder %s16, 1
    %p132 = por %p130, %p131
    %p133 = scmp.ne.s32.totalorder %s124, %s125
    %p134 = scmp.eq.s32.totalorder %s16, 0
    %p135 = por %p133, %p134
    %p136 = scmp.ne.s32.totalorder %s124, %s125
    %p137 = scmp.eq.s32.totalorder %s17, 1
    %p138 = por %p136, %p137
    %p140 = scmp.ne.s32.totalorder %s125, %s139
    %p141 = scmp.eq.s32.totalorder %s17, 0
    %p142 = por %p140, %p141
    %s143 = ssub.s32 %s18, %s30
    %s144 = ssub.s32 %s19, %s26
    %s145 = sor.u32 %s143, %s144
    %p146 = scmp.eq.s32.totalorder %s145, 0
    %s148 = sadd.s32 %s147, 1
    %s149 = scalar_select %p146, %s147, %s148
    %p152 = pneg %p146
    %p153 = scmp.eq.s32.totalorder %s11, 1
    %p154 = por %p152, %p153
    %p155 = scmp.ne.s32.totalorder %s147, %s150
    %p156 = scmp.eq.s32.totalorder %s11, 0
    %p157 = por %p155, %p156
    %p158 = scmp.ne.s32.totalorder %s147, %s150
    %p159 = scmp.eq.s32.totalorder %s16, 1
    %p160 = por %p158, %p159
    %p161 = scmp.ne.s32.totalorder %s150, %s151
    %p162 = scmp.eq.s32.totalorder %s16, 0
    %p163 = por %p161, %p162
    %p164 = scmp.ne.s32.totalorder %s150, %s151
    %p165 = scmp.eq.s32.totalorder %s17, 1
    %p166 = por %p164, %p165
    %p168 = scmp.ne.s32.totalorder %s151, %s167
    %p169 = scmp.eq.s32.totalorder %s17, 0
    %p170 = por %p168, %p169
    %p171 = scmp.le.s32.totalorder 1, %s11
    %p172 = scmp.lt.s32.totalorder %s11, 3
    %p173 = pnand %p171, %p172
    %p174 = pneg %p173
    // Predicated region
    $region9: #{_lambda_.1} parent=5 // pred_check
      _
    $region10: #{_lambda_.1} parent=5 // pred_check_branch
      %176 = sbr.rel (%p173) target = $region12
    $region11: #{_lambda_.1} parent=5 // pred_region
      %s177 = ssub.s32 %s11, 1
      // Predicated region
      $region13: #{_lambda_.1} parent=11 // pred_check
        %p178 = pneg %p72
      $region14: #{_lambda_.1} parent=11 // pred_check_branch
        %180 = sbr.rel (%p178) target = $region16
      $region15: #{_lambda_.1} parent=11 // pred_region
        _
      $region16: #{_lambda_.1} parent=11 // pred_fallthru
        _
      // Predicated region
      $region17: #{_lambda_.1} parent=11 // pred_check
        %p181 = pneg %p93
      $region18: #{_lambda_.1} parent=11 // pred_check_branch
        %183 = sbr.rel (%p181) target = $region20
      $region19: #{_lambda_.1} parent=11 // pred_region
        _
      $region20: #{_lambda_.1} parent=11 // pred_fallthru
        _
      // Predicated region
      $region21: #{_lambda_.1} parent=11 // pred_check
        %p184 = pneg %p114
      $region22: #{_lambda_.1} parent=11 // pred_check_branch
        %186 = sbr.rel (%p184) target = $region24
      $region23: #{_lambda_.1} parent=11 // pred_region
        _
      $region24: #{_lambda_.1} parent=11 // pred_fallthru
        _
      // Predicated region
      $region25: #{_lambda_.1} parent=11 // pred_check
        %p187 = pneg %p135
      $region26: #{_lambda_.1} parent=11 // pred_check_branch
        %189 = sbr.rel (%p187) target = $region28
      $region27: #{_lambda_.1} parent=11 // pred_region
        _
      $region28: #{_lambda_.1} parent=11 // pred_fallthru
        _
    $region12: #{_lambda_.1} parent=5 // pred_fallthru
      _
    %p190 = scmp.lt.s32.totalorder %s11, 2
    // Predicated region
    $region29: #{_lambda_.1} parent=5 // pred_check
      %p191 = pneg %p190
    $region30: #{_lambda_.1} parent=5 // pred_check_branch
      %193 = sbr.rel (%p191) target = $region32
    $region31: #{_lambda_.1} parent=5 // pred_region
      // Predicated region
      $region33: #{_lambda_.1} parent=31 // pred_check
        %p194 = pneg %p45
      $region34: #{_lambda_.1} parent=31 // pred_check_branch
        %196 = sbr.rel (%p194) target = $region36
      $region35: #{_lambda_.1} parent=31 // pred_region
        %p197 = scmp.lt.s32.totalorder %s18, 1
        %s198 = scalar_select %p197, %s18, 1
        %p199 = scmp.lt.s32.totalorder %s19, 0
        %s200 = scalar_select %p199, %s19, 0
        %s201 = smul.addr %s200, 40
        %s202 = smul.addr %s198, 40
        %s203 = sadd.s32 %s201, %s202
        %s204 = smul.addr %s203, 4
        %s205 = scalar_lea.vmem %s0, %s204
      $region36: #{_lambda_.1} parent=31 // pred_fallthru
        _
    $region32: #{_lambda_.1} parent=5 // pred_fallthru
      _
    %p206 = scmp.le.s32.totalorder 1, %s11
    %p207 = scmp.lt.s32.totalorder %s11, 3
    %p208 = pnand %p206, %p207
    %p209 = pneg %p208
    // Predicated region
    $region37: #{_lambda_.1} parent=5 // pred_check
      _
    $region38: #{_lambda_.1} parent=5 // pred_check_branch
      %211 = sbr.rel (%p208) target = $region40
    $region39: #{_lambda_.1} parent=5 // pred_region
      %s212 = ssub.s32 %s11, 1
      %p213 = scmp.lt.s32.totalorder %s20, 1
      %s214 = scalar_select %p213, %s20, 1
      %p215 = scmp.lt.s32.totalorder %s21, 0
      %s216 = scalar_select %p215, %s21, 0
      %s217 = smul.addr %s216, 40
      %s218 = smul.addr %s214, 40
      %s219 = sadd.s32 %s217, %s218
      %s220 = smul.addr %s219, 4
      %s221 = scalar_lea.vmem %s0, %s220
      %p222 = pneg %p51
      %p223 = pneg %p48
      %p224 = pneg %p72
      %p225 = pneg %p69
      %p226 = pneg %p93
      %p227 = pneg %p90
      %p228 = pneg %p114
      %p229 = pneg %p111
      %p230 = pneg %p135
      %p231 = pneg %p132
      %p232 = pneg %p163
      %p233 = pneg %p160
      %p234 = scmp.lt.s32.totalorder %s20, 1
      %s235 = scalar_select %p234, %s20, 1
      %p236 = scmp.lt.s32.totalorder %s21, 0
      %s237 = scalar_select %p236, %s21, 0
      %s238 = smul.addr %s237, 2
      %s239 = smul.addr %s235, 2
      %s240 = sadd.s32 %s238, %s239
      %s241 = smul.addr %s240, 8
      %s242 = scalar_lea.vmem %s5, %s241
      %p243 = scmp.lt.s32.totalorder %s20, 1
      %s244 = scalar_select %p243, %s20, 1
      %p245 = scmp.lt.s32.totalorder %s21, 0
      %s246 = scalar_select %p245, %s21, 0
      %s247 = smul.addr %s246, 40
      %s248 = smul.addr %s244, 40
      %s249 = sadd.s32 %s247, %s248
      %s250 = smul.addr %s249, 4
      %s251 = scalar_lea.vmem %s0, %s250
      %p252 = scmp.lt.s32.totalorder %s20, 1
      %s253 = scalar_select %p252, %s20, 1
      %p254 = scmp.lt.s32.totalorder %s21, 0
      %s255 = scalar_select %p254, %s21, 0
      %s256 = smul.addr %s255, 2
      %s257 = smul.addr %s253, 2
      %s258 = sadd.s32 %s256, %s257
      %s259 = smul.addr %s258, 8
      %s260 = scalar_lea.vmem %s5, %s259
      %v262 = vld [vmem:[%s251] sm:$0xf]
      %v263 = vld [vmem:[%s251 + $0x4] sm:$0xf]
      %v264 = vld [vmem:[%s251 + $0x8] sm:$0xf]
      %v265 = vld [vmem:[%s251 + $0xc] sm:$0xf]
      %v266 = vld [vmem:[%s251 + $0x10] sm:$0xf]
      %v267 = vld [vmem:[%s251 + $0x14] sm:$0xf]
      %v268 = vld [vmem:[%s251 + $0x18] sm:$0xf]
      %v269 = vld [vmem:[%s251 + $0x1c] sm:$0xf]
      %v270 = vld [vmem:[%s251 + $0x20] sm:$0xf]
      %v271 = vld [vmem:[%s251 + $0x24] sm:$0xf]
      %v272 = vld [vmem:[%s251 + $0x28] sm:$0xf]
      %v273 = vld [vmem:[%s251 + $0x2c] sm:$0xf]
      %v274 = vld [vmem:[%s251 + $0x30] sm:$0xf]
      %v275 = vld [vmem:[%s251 + $0x34] sm:$0xf]
      %v276 = vld [vmem:[%s251 + $0x38] sm:$0xf]
      %v277 = vld [vmem:[%s251 + $0x3c] sm:$0xf]
      %v278 = vld [vmem:[%s251 + $0x40] sm:$0xf]
      %v279 = vld [vmem:[%s251 + $0x44] sm:$0xf]
      %v280 = vld [vmem:[%s251 + $0x48] sm:$0xf]
      %v281 = vld [vmem:[%s251 + $0x4c] sm:$0xf]
      %v282 = vld [vmem:[%s251 + $0x50] sm:$0xf]
      %v283 = vld [vmem:[%s251 + $0x54] sm:$0xf]
      %v284 = vld [vmem:[%s251 + $0x58] sm:$0xf]
      %v285 = vld [vmem:[%s251 + $0x5c] sm:$0xf]
      %v286 = vld [vmem:[%s251 + $0x60] sm:$0xf]
      %v287 = vld [vmem:[%s251 + $0x64] sm:$0xf]
      %v288 = vld [vmem:[%s251 + $0x68] sm:$0xf]
      %v289 = vld [vmem:[%s251 + $0x6c] sm:$0xf]
      %v290 = vld [vmem:[%s251 + $0x70] sm:$0xf]
      %v291 = vld [vmem:[%s251 + $0x74] sm:$0xf]
      %v292 = vld [vmem:[%s251 + $0x78] sm:$0xf]
      %v293 = vld [vmem:[%s251 + $0x7c] sm:$0xf]
      %v294 = vld [vmem:[%s251 + $0x80] sm:$0xf]
      %v295 = vld [vmem:[%s251 + $0x84] sm:$0xf]
      %v296 = vld [vmem:[%s251 + $0x88] sm:$0xf]
      %v297 = vld [vmem:[%s251 + $0x8c] sm:$0xf]
      %v298 = vld [vmem:[%s251 + $0x90] sm:$0xf]
      %v299 = vld [vmem:[%s251 + $0x94] sm:$0xf]
      %v300 = vld [vmem:[%s251 + $0x98] sm:$0xf]
      %v301 = vld [vmem:[%s251 + $0x9c] sm:$0xf]
      %v302 = vld [vmem:[%s1] sm:$0xf]
      %v303 = vld [vmem:[%s1 + $0x4] sm:$0xf]
      %v304 = vld [vmem:[%s1 + $0x8] sm:$0xf]
      %v305 = vld [vmem:[%s1 + $0xc] sm:$0xf]
      %v306 = vld [vmem:[%s1 + $0x10] sm:$0xf]
      %v307 = vld [vmem:[%s1 + $0x14] sm:$0xf]
      %v308 = vld [vmem:[%s1 + $0x18] sm:$0xf]
      %v309 = vld [vmem:[%s1 + $0x1c] sm:$0xf]
      %v310 = vld [vmem:[%s1 + $0x20] sm:$0xf]
      %v311 = vld [vmem:[%s1 + $0x24] sm:$0xf]
      %v312 = vld [vmem:[%s1 + $0x28] sm:$0xf]
      %v313 = vld [vmem:[%s1 + $0x2c] sm:$0xf]
      %v314 = vld [vmem:[%s1 + $0x30] sm:$0xf]
      %v315 = vld [vmem:[%s1 + $0x34] sm:$0xf]
      %v316 = vld [vmem:[%s1 + $0x38] sm:$0xf]
      %v317 = vld [vmem:[%s1 + $0x3c] sm:$0xf]
      %v318 = vld [vmem:[%s2] sm:$0x1]
      %v320 = vperm.slane %v318, 0
      %v362 = vunpack.c.l.b16 %v262
      %v363 = vunpack.c.l.b16 %v263
      %v364 = vunpack.c.l.b16 %v264
      %v365 = vunpack.c.l.b16 %v265
      %v366 = vunpack.c.l.b16 %v266
      %v367 = vunpack.c.l.b16 %v267
      %v368 = vunpack.c.l.b16 %v268
      %v369 = vunpack.c.l.b16 %v269
      %v370 = vunpack.c.l.b16 %v270
      %v371 = vunpack.c.l.b16 %v271
      %v372 = vunpack.c.l.b16 %v272
      %v373 = vunpack.c.l.b16 %v273
      %v374 = vunpack.c.l.b16 %v274
      %v375 = vunpack.c.l.b16 %v275
      %v376 = vunpack.c.l.b16 %v276
      %v377 = vunpack.c.l.b16 %v277
      %v378 = vunpack.c.l.b16 %v278
      %v379 = vunpack.c.l.b16 %v279
      %v380 = vunpack.c.l.b16 %v280
      %v381 = vunpack.c.l.b16 %v281
      %v382 = vunpack.c.l.b16 %v282
      %v383 = vunpack.c.l.b16 %v283
      %v384 = vunpack.c.l.b16 %v284
      %v385 = vunpack.c.l.b16 %v285
      %v386 = vunpack.c.l.b16 %v286
      %v387 = vunpack.c.l.b16 %v287
      %v388 = vunpack.c.l.b16 %v288
      %v389 = vunpack.c.l.b16 %v289
      %v390 = vunpack.c.l.b16 %v290
      %v391 = vunpack.c.l.b16 %v291
      %v392 = vunpack.c.l.b16 %v292
      %v393 = vunpack.c.l.b16 %v293
      %v394 = vunpack.c.l.b16 %v294
      %v395 = vunpack.c.l.b16 %v295
      %v396 = vunpack.c.l.b16 %v296
      %v397 = vunpack.c.l.b16 %v297
      %v398 = vunpack.c.l.b16 %v298
      %v399 = vunpack.c.l.b16 %v299
      %v400 = vunpack.c.l.b16 %v300
      %v401 = vunpack.c.l.b16 %v301
      %v402 = vpack.c.b16 %v363, %v362
      %v403 = vpack.c.b16 %v365, %v364
      %v404 = vpack.c.b16 %v367, %v366
      %v405 = vpack.c.b16 %v369, %v368
      %v406 = vpack.c.b16 %v371, %v370
      %v407 = vpack.c.b16 %v373, %v372
      %v408 = vpack.c.b16 %v375, %v374
      %v409 = vpack.c.b16 %v377, %v376
      %v410 = vpack.c.b16 %v379, %v378
      %v411 = vpack.c.b16 %v381, %v380
      %v412 = vpack.c.b16 %v383, %v382
      %v413 = vpack.c.b16 %v385, %v384
      %v414 = vpack.c.b16 %v387, %v386
      %v415 = vpack.c.b16 %v389, %v388
      %v416 = vpack.c.b16 %v391, %v390
      %v417 = vpack.c.b16 %v393, %v392
      %v418 = vpack.c.b16 %v395, %v394
      %v419 = vpack.c.b16 %v397, %v396
      %v420 = vpack.c.b16 %v399, %v398
      %v421 = vpack.c.b16 %v401, %v400
      %v458 = vunpack.c.l.b16 %v302
      %v459 = vunpack.c.l.b16 %v303
      %v460 = vunpack.c.l.b16 %v304
      %v461 = vunpack.c.l.b16 %v305
      %v462 = vunpack.c.l.b16 %v306
      %v463 = vunpack.c.l.b16 %v307
      %v464 = vunpack.c.l.b16 %v308
      %v465 = vunpack.c.l.b16 %v309
      %v466 = vunpack.c.l.b16 %v310
      %v467 = vunpack.c.l.b16 %v311
      %v468 = vunpack.c.l.b16 %v312
      %v469 = vunpack.c.l.b16 %v313
      %v470 = vunpack.c.l.b16 %v314
      %v471 = vunpack.c.l.b16 %v315
      %v472 = vunpack.c.l.b16 %v316
      %v473 = vunpack.c.l.b16 %v317
      %v474 = vpack.c.b16 %v459, %v458
      %v475 = vpack.c.b16 %v461, %v460
      %v476 = vpack.c.b16 %v463, %v462
      %v477 = vpack.c.b16 %v465, %v464
      %v478 = vpack.c.b16 %v467, %v466
      %v479 = vpack.c.b16 %v469, %v468
      %v480 = vpack.c.b16 %v471, %v470
      %v481 = vpack.c.b16 %v473, %v472
      %490 = vmatpush.bf16.msra.mxu0 %v481
      %491 = vmatpush.bf16.msra.mxu0 %v480
      %492 = vmatpush.bf16.msra.mxu0 %v479
      %493 = vmatpush.bf16.msra.mxu0 %v478
      %494 = vmatpush.bf16.msra.mxu0 %v477
      %495 = vmatpush.bf16.msra.mxu0 %v476
      %496 = vmatpush.bf16.msra.mxu0 %v475
      %497 = vmatpush.bf16.msra.mxu0 %v474
      %498 = vmatmul.bf16.gmra.mxu0 %v402
      %v499 = vpop.f32.mrf.mxu0
      %v500 = vadd.f32 %v320, %v499
      %v501 = vpop.f32.mrf.mxu0
      %v502 = vadd.f32 %v320, %v501
      %503 = vmatmul.bf16.gmra.mxu0 %v403
      %v504 = vpop.f32.mrf.mxu0
      %v505 = vadd.f32 %v320, %v504
      %v506 = vpop.f32.mrf.mxu0
      %v507 = vadd.f32 %v320, %v506
      %508 = vmatmul.bf16.gmra.mxu0 %v404
      %v509 = vpop.f32.mrf.mxu0
      %v510 = vadd.f32 %v320, %v509
      %v511 = vpop.f32.mrf.mxu0
      %v512 = vadd.f32 %v320, %v511
      %513 = vmatmul.bf16.gmra.mxu0 %v405
      %v514 = vpop.f32.mrf.mxu0
      %v515 = vadd.f32 %v320, %v514
      %v516 = vpop.f32.mrf.mxu0
      %v517 = vadd.f32 %v320, %v516
      %518 = vmatmul.bf16.gmra.mxu0 %v406
      %v519 = vpop.f32.mrf.mxu0
      %v520 = vadd.f32 %v320, %v519
      %v521 = vpop.f32.mrf.mxu0
      %v522 = vadd.f32 %v320, %v521
      %523 = vmatmul.bf16.gmra.mxu0 %v407
      %v524 = vpop.f32.mrf.mxu0
      %v525 = vadd.f32 %v320, %v524
      %v526 = vpop.f32.mrf.mxu0
      %v527 = vadd.f32 %v320, %v526
      %528 = vmatmul.bf16.gmra.mxu0 %v408
      %v529 = vpop.f32.mrf.mxu0
      %v530 = vadd.f32 %v320, %v529
      %v531 = vpop.f32.mrf.mxu0
      %v532 = vadd.f32 %v320, %v531
      %533 = vmatmul.bf16.gmra.mxu0 %v409
      %v534 = vpop.f32.mrf.mxu0
      %v535 = vadd.f32 %v320, %v534
      %v536 = vpop.f32.mrf.mxu0
      %v537 = vadd.f32 %v320, %v536
      %538 = vmatmul.bf16.gmra.mxu0 %v410
      %v539 = vpop.f32.mrf.mxu0
      %v540 = vadd.f32 %v320, %v539
      %v541 = vpop.f32.mrf.mxu0
      %v542 = vadd.f32 %v320, %v541
      %543 = vmatmul.bf16.gmra.mxu0 %v411
      %v544 = vpop.f32.mrf.mxu0
      %v545 = vadd.f32 %v320, %v544
      %v546 = vpop.f32.mrf.mxu0
      %v547 = vadd.f32 %v320, %v546
      %548 = vmatmul.bf16.gmra.mxu0 %v412
      %v549 = vpop.f32.mrf.mxu0
      %v550 = vadd.f32 %v320, %v549
      %v551 = vpop.f32.mrf.mxu0
      %v552 = vadd.f32 %v320, %v551
      %553 = vmatmul.bf16.gmra.mxu0 %v413
      %v554 = vpop.f32.mrf.mxu0
      %v555 = vadd.f32 %v320, %v554
      %v556 = vpop.f32.mrf.mxu0
      %v557 = vadd.f32 %v320, %v556
      %558 = vmatmul.bf16.gmra.mxu0 %v414
      %v559 = vpop.f32.mrf.mxu0
      %v560 = vadd.f32 %v320, %v559
      %v561 = vpop.f32.mrf.mxu0
      %v562 = vadd.f32 %v320, %v561
      %563 = vmatmul.bf16.gmra.mxu0 %v415
      %v564 = vpop.f32.mrf.mxu0
      %v565 = vadd.f32 %v320, %v564
      %v566 = vpop.f32.mrf.mxu0
      %v567 = vadd.f32 %v320, %v566
      %568 = vmatmul.bf16.gmra.mxu0 %v416
      %v569 = vpop.f32.mrf.mxu0
      %v570 = vadd.f32 %v320, %v569
      %v571 = vpop.f32.mrf.mxu0
      %v572 = vadd.f32 %v320, %v571
      %573 = vmatmul.bf16.gmra.mxu0 %v417
      %v574 = vpop.f32.mrf.mxu0
      %v575 = vadd.f32 %v320, %v574
      %v576 = vpop.f32.mrf.mxu0
      %v577 = vadd.f32 %v320, %v576
      %578 = vmatmul.bf16.gmra.mxu0 %v418
      %v579 = vpop.f32.mrf.mxu0
      %v580 = vadd.f32 %v320, %v579
      %v581 = vpop.f32.mrf.mxu0
      %v582 = vadd.f32 %v320, %v581
      %583 = vmatmul.bf16.gmra.mxu0 %v419
      %v584 = vpop.f32.mrf.mxu0
      %v585 = vadd.f32 %v320, %v584
      %v586 = vpop.f32.mrf.mxu0
      %v587 = vadd.f32 %v320, %v586
      %588 = vmatmul.bf16.gmra.mxu0 %v420
      %v589 = vpop.f32.mrf.mxu0
      %v590 = vadd.f32 %v320, %v589
      %v591 = vpop.f32.mrf.mxu0
      %v592 = vadd.f32 %v320, %v591
      %593 = vmatmul.bf16.gmra.mxu0 %v421
      %v594 = vpop.f32.mrf.mxu0
      %v595 = vadd.f32 %v320, %v594
      %v596 = vpop.f32.mrf.mxu0
      %v597 = vadd.f32 %v320, %v596
      %598 = vdwg.mxu0
      %v599 = vmul.f32 %v500, 0.01
      %v600 = vmul.f32 %v502, 0.01
      %v601 = vmul.f32 %v505, 0.01
      %v602 = vmul.f32 %v507, 0.01
      %v603 = vmul.f32 %v510, 0.01
      %v604 = vmul.f32 %v512, 0.01
      %v605 = vmul.f32 %v515, 0.01
      %v606 = vmul.f32 %v517, 0.01
      %v607 = vmul.f32 %v520, 0.01
      %v608 = vmul.f32 %v522, 0.01
      %v609 = vmul.f32 %v525, 0.01
      %v610 = vmul.f32 %v527, 0.01
      %v611 = vmul.f32 %v530, 0.01
      %v612 = vmul.f32 %v532, 0.01
      %v613 = vmul.f32 %v535, 0.01
      %v614 = vmul.f32 %v537, 0.01
      %v615 = vmul.f32 %v540, 0.01
      %v616 = vmul.f32 %v542, 0.01
      %v617 = vmul.f32 %v545, 0.01
      %v618 = vmul.f32 %v547, 0.01
      %v619 = vmul.f32 %v550, 0.01
      %v620 = vmul.f32 %v552, 0.01
      %v621 = vmul.f32 %v555, 0.01
      %v622 = vmul.f32 %v557, 0.01
      %v623 = vmul.f32 %v560, 0.01
      %v624 = vmul.f32 %v562, 0.01
      %v625 = vmul.f32 %v565, 0.01
      %v626 = vmul.f32 %v567, 0.01
      %v627 = vmul.f32 %v570, 0.01
      %v628 = vmul.f32 %v572, 0.01
      %v629 = vmul.f32 %v575, 0.01
      %v630 = vmul.f32 %v577, 0.01
      %v631 = vmul.f32 %v580, 0.01
      %v632 = vmul.f32 %v582, 0.01
      %v633 = vmul.f32 %v585, 0.01
      %v634 = vmul.f32 %v587, 0.01
      %v635 = vmul.f32 %v590, 0.01
      %v636 = vmul.f32 %v592, 0.01
      %v637 = vmul.f32 %v595, 0.01
      %v638 = vmul.f32 %v597, 0.01
      %v639 = vmax.f32 %v500, %v599
      %v640 = vmax.f32 %v502, %v600
      %v641 = vmax.f32 %v505, %v601
      %v642 = vmax.f32 %v507, %v602
      %v643 = vmax.f32 %v510, %v603
      %v644 = vmax.f32 %v512, %v604
      %v645 = vmax.f32 %v515, %v605
      %v646 = vmax.f32 %v517, %v606
      %v647 = vmax.f32 %v520, %v607
      %v648 = vmax.f32 %v522, %v608
      %v649 = vmax.f32 %v525, %v609
      %v650 = vmax.f32 %v527, %v610
      %v651 = vmax.f32 %v530, %v611
      %v652 = vmax.f32 %v532, %v612
      %v653 = vmax.f32 %v535, %v613
      %v654 = vmax.f32 %v537, %v614
      %v655 = vmax.f32 %v540, %v615
      %v656 = vmax.f32 %v542, %v616
      %v657 = vmax.f32 %v545, %v617
      %v658 = vmax.f32 %v547, %v618
      %v659 = vmax.f32 %v550, %v619
      %v660 = vmax.f32 %v552, %v620
      %v661 = vmax.f32 %v555, %v621
      %v662 = vmax.f32 %v557, %v622
      %v663 = vmax.f32 %v560, %v623
      %v664 = vmax.f32 %v562, %v624
      %v665 = vmax.f32 %v565, %v625
      %v666 = vmax.f32 %v567, %v626
      %v667 = vmax.f32 %v570, %v627
      %v668 = vmax.f32 %v572, %v628
      %v669 = vmax.f32 %v575, %v629
      %v670 = vmax.f32 %v577, %v630
      %v671 = vmax.f32 %v580, %v631
      %v672 = vmax.f32 %v582, %v632
      %v673 = vmax.f32 %v585, %v633
      %v674 = vmax.f32 %v587, %v634
      %v675 = vmax.f32 %v590, %v635
      %v676 = vmax.f32 %v592, %v636
      %v677 = vmax.f32 %v595, %v637
      %v678 = vmax.f32 %v597, %v638
      %v719 = vrot.slane %v639, 2
      %v720 = vrot.slane %v639, 4
      %v721 = vrot.slane %v639, 6
      %v722 = vrot.slane %v640, 2
      %v723 = vrot.slane %v640, 4
      %v724 = vrot.slane %v640, 6
      %v725 = vrot.slane %v641, 2
      %v726 = vrot.slane %v641, 4
      %v727 = vrot.slane %v641, 6
      %v728 = vrot.slane %v642, 2
      %v729 = vrot.slane %v642, 4
      %v730 = vrot.slane %v642, 6
      %v731 = vrot.slane %v643, 2
      %v732 = vrot.slane %v643, 4
      %v733 = vrot.slane %v643, 6
      %v734 = vrot.slane %v644, 2
      %v735 = vrot.slane %v644, 4
      %v736 = vrot.slane %v644, 6
      %v737 = vrot.slane %v645, 2
      %v738 = vrot.slane %v645, 4
      %v739 = vrot.slane %v645, 6
      %v740 = vrot.slane %v646, 2
      %v741 = vrot.slane %v646, 4
      %v742 = vrot.slane %v646, 6
      %v743 = vrot.slane %v647, 2
      %v744 = vrot.slane %v647, 4
      %v745 = vrot.slane %v647, 6
      %v746 = vrot.slane %v648, 2
      %v747 = vrot.slane %v648, 4
      %v748 = vrot.slane %v648, 6
      %v749 = vrot.slane %v649, 2
      %v750 = vrot.slane %v649, 4
      %v751 = vrot.slane %v649, 6
      %v752 = vrot.slane %v650, 2
      %v753 = vrot.slane %v650, 4
      %v754 = vrot.slane %v650, 6
      %v755 = vrot.slane %v651, 2
      %v756 = vrot.slane %v651, 4
      %v757 = vrot.slane %v651, 6
      %v758 = vrot.slane %v652, 2
      %v759 = vrot.slane %v652, 4
      %v760 = vrot.slane %v652, 6
      %v761 = vrot.slane %v653, 2
      %v762 = vrot.slane %v653, 4
      %v763 = vrot.slane %v653, 6
      %v764 = vrot.slane %v654, 2
      %v765 = vrot.slane %v654, 4
      %v766 = vrot.slane %v654, 6
      %v767 = vrot.slane %v655, 2
      %v768 = vrot.slane %v655, 4
      %v769 = vrot.slane %v655, 6
      %v770 = vrot.slane %v656, 2
      %v771 = vrot.slane %v656, 4
      %v772 = vrot.slane %v656, 6
      %v773 = vrot.slane %v657, 2
      %v774 = vrot.slane %v657, 4
      %v775 = vrot.slane %v657, 6
      %v776 = vrot.slane %v658, 2
      %v777 = vrot.slane %v658, 4
      %v778 = vrot.slane %v658, 6
      %v779 = vrot.slane %v659, 2
      %v780 = vrot.slane %v659, 4
      %v781 = vrot.slane %v659, 6
      %v782 = vrot.slane %v660, 2
      %v783 = vrot.slane %v660, 4
      %v784 = vrot.slane %v660, 6
      %v785 = vrot.slane %v661, 2
      %v786 = vrot.slane %v661, 4
      %v787 = vrot.slane %v661, 6
      %v788 = vrot.slane %v662, 2
      %v789 = vrot.slane %v662, 4
      %v790 = vrot.slane %v662, 6
      %v791 = vrot.slane %v663, 2
      %v792 = vrot.slane %v663, 4
      %v793 = vrot.slane %v663, 6
      %v794 = vrot.slane %v664, 2
      %v795 = vrot.slane %v664, 4
      %v796 = vrot.slane %v664, 6
      %v797 = vrot.slane %v665, 2
      %v798 = vrot.slane %v665, 4
      %v799 = vrot.slane %v665, 6
      %v800 = vrot.slane %v666, 2
      %v801 = vrot.slane %v666, 4
      %v802 = vrot.slane %v666, 6
      %v803 = vrot.slane %v667, 2
      %v804 = vrot.slane %v667, 4
      %v805 = vrot.slane %v667, 6
      %v806 = vrot.slane %v668, 2
      %v807 = vrot.slane %v668, 4
      %v808 = vrot.slane %v668, 6
      %v809 = vrot.slane %v669, 2
      %v810 = vrot.slane %v669, 4
      %v811 = vrot.slane %v669, 6
      %v812 = vrot.slane %v670, 2
      %v813 = vrot.slane %v670, 4
      %v814 = vrot.slane %v670, 6
      %v815 = vrot.slane %v671, 2
      %v816 = vrot.slane %v671, 4
      %v817 = vrot.slane %v671, 6
      %v818 = vrot.slane %v672, 2
      %v819 = vrot.slane %v672, 4
      %v820 = vrot.slane %v672, 6
      %v821 = vrot.slane %v673, 2
      %v822 = vrot.slane %v673, 4
      %v823 = vrot.slane %v673, 6
      %v824 = vrot.slane %v674, 2
      %v825 = vrot.slane %v674, 4
      %v826 = vrot.slane %v674, 6
      %v827 = vrot.slane %v675, 2
      %v828 = vrot.slane %v675, 4
      %v829 = vrot.slane %v675, 6
      %v830 = vrot.slane %v676, 2
      %v831 = vrot.slane %v676, 4
      %v832 = vrot.slane %v676, 6
      %v833 = vrot.slane %v677, 2
      %v834 = vrot.slane %v677, 4
      %v835 = vrot.slane %v677, 6
      %v836 = vrot.slane %v678, 2
      %v837 = vrot.slane %v678, 4
      %v838 = vrot.slane %v678, 6
      %vm959 = vcmask 1041408
      %v960 = vsel %vm959, %v639, -inf
      %v961 = vrot.slane %v960, 4
      %v962 = vmax.f32 %v960, %v961
      %v963 = vrot.slane %v962, 2
      %v964 = vmax.f32 %v962, %v963
      %v965 = vrot.slane %v964, 1
      %v966 = vmax.f32 %v964, %v965
      %v967 = vsel %vm959, %v719, -inf
      %v968 = vrot.slane %v967, 4
      %v969 = vmax.f32 %v967, %v968
      %v970 = vrot.slane %v969, 2
      %v971 = vmax.f32 %v969, %v970
      %v972 = vrot.slane %v971, 1
      %v973 = vmax.f32 %v971, %v972
      %v974 = vsel %vm959, %v720, -inf
      %v975 = vrot.slane %v974, 4
      %v976 = vmax.f32 %v974, %v975
      %v977 = vrot.slane %v976, 2
      %v978 = vmax.f32 %v976, %v977
      %v979 = vrot.slane %v978, 1
      %v980 = vmax.f32 %v978, %v979
      %v981 = vsel %vm959, %v721, -inf
      %v982 = vrot.slane %v981, 4
      %v983 = vmax.f32 %v981, %v982
      %v984 = vrot.slane %v983, 2
      %v985 = vmax.f32 %v983, %v984
      %v986 = vrot.slane %v985, 1
      %v987 = vmax.f32 %v985, %v986
      %v988 = vsel %vm959, %v640, -inf
      %v989 = vrot.slane %v988, 4
      %v990 = vmax.f32 %v988, %v989
      %v991 = vrot.slane %v990, 2
      %v992 = vmax.f32 %v990, %v991
      %v993 = vrot.slane %v992, 1
      %v994 = vmax.f32 %v992, %v993
      %v995 = vsel %vm959, %v722, -inf
      %v996 = vrot.slane %v995, 4
      %v997 = vmax.f32 %v995, %v996
      %v998 = vrot.slane %v997, 2
      %v999 = vmax.f32 %v997, %v998
      %v1000 = vrot.slane %v999, 1
      %v1001 = vmax.f32 %v999, %v1000
      %v1002 = vsel %vm959, %v723, -inf
      %v1003 = vrot.slane %v1002, 4
      %v1004 = vmax.f32 %v1002, %v1003
      %v1005 = vrot.slane %v1004, 2
      %v1006 = vmax.f32 %v1004, %v1005
      %v1007 = vrot.slane %v1006, 1
      %v1008 = vmax.f32 %v1006, %v1007
      %v1009 = vsel %vm959, %v724, -inf
      %v1010 = vrot.slane %v1009, 4
      %v1011 = vmax.f32 %v1009, %v1010
      %v1012 = vrot.slane %v1011, 2
      %v1013 = vmax.f32 %v1011, %v1012
      %v1014 = vrot.slane %v1013, 1
      %v1015 = vmax.f32 %v1013, %v1014
      %v1016 = vsel %vm959, %v641, -inf
      %v1017 = vrot.slane %v1016, 4
      %v1018 = vmax.f32 %v1016, %v1017
      %v1019 = vrot.slane %v1018, 2
      %v1020 = vmax.f32 %v1018, %v1019
      %v1021 = vrot.slane %v1020, 1
      %v1022 = vmax.f32 %v1020, %v1021
      %v1023 = vsel %vm959, %v725, -inf
      %v1024 = vrot.slane %v1023, 4
      %v1025 = vmax.f32 %v1023, %v1024
      %v1026 = vrot.slane %v1025, 2
      %v1027 = vmax.f32 %v1025, %v1026
      %v1028 = vrot.slane %v1027, 1
      %v1029 = vmax.f32 %v1027, %v1028
      %v1030 = vsel %vm959, %v726, -inf
      %v1031 = vrot.slane %v1030, 4
      %v1032 = vmax.f32 %v1030, %v1031
      %v1033 = vrot.slane %v1032, 2
      %v1034 = vmax.f32 %v1032, %v1033
      %v1035 = vrot.slane %v1034, 1
      %v1036 = vmax.f32 %v1034, %v1035
      %v1037 = vsel %vm959, %v727, -inf
      %v1038 = vrot.slane %v1037, 4
      %v1039 = vmax.f32 %v1037, %v1038
      %v1040 = vrot.slane %v1039, 2
      %v1041 = vmax.f32 %v1039, %v1040
      %v1042 = vrot.slane %v1041, 1
      %v1043 = vmax.f32 %v1041, %v1042
      %v1044 = vsel %vm959, %v642, -inf
      %v1045 = vrot.slane %v1044, 4
      %v1046 = vmax.f32 %v1044, %v1045
      %v1047 = vrot.slane %v1046, 2
      %v1048 = vmax.f32 %v1046, %v1047
      %v1049 = vrot.slane %v1048, 1
      %v1050 = vmax.f32 %v1048, %v1049
      %v1051 = vsel %vm959, %v728, -inf
      %v1052 = vrot.slane %v1051, 4
      %v1053 = vmax.f32 %v1051, %v1052
      %v1054 = vrot.slane %v1053, 2
      %v1055 = vmax.f32 %v1053, %v1054
      %v1056 = vrot.slane %v1055, 1
      %v1057 = vmax.f32 %v1055, %v1056
      %v1058 = vsel %vm959, %v729, -inf
      %v1059 = vrot.slane %v1058, 4
      %v1060 = vmax.f32 %v1058, %v1059
      %v1061 = vrot.slane %v1060, 2
      %v1062 = vmax.f32 %v1060, %v1061
      %v1063 = vrot.slane %v1062, 1
      %v1064 = vmax.f32 %v1062, %v1063
      %v1065 = vsel %vm959, %v730, -inf
      %v1066 = vrot.slane %v1065, 4
      %v1067 = vmax.f32 %v1065, %v1066
      %v1068 = vrot.slane %v1067, 2
      %v1069 = vmax.f32 %v1067, %v1068
      %v1070 = vrot.slane %v1069, 1
      %v1071 = vmax.f32 %v1069, %v1070
      %v1072 = vsel %vm959, %v643, -inf
      %v1073 = vrot.slane %v1072, 4
      %v1074 = vmax.f32 %v1072, %v1073
      %v1075 = vrot.slane %v1074, 2
      %v1076 = vmax.f32 %v1074, %v1075
      %v1077 = vrot.slane %v1076, 1
      %v1078 = vmax.f32 %v1076, %v1077
      %v1079 = vsel %vm959, %v731, -inf
      %v1080 = vrot.slane %v1079, 4
      %v1081 = vmax.f32 %v1079, %v1080
      %v1082 = vrot.slane %v1081, 2
      %v1083 = vmax.f32 %v1081, %v1082
      %v1084 = vrot.slane %v1083, 1
      %v1085 = vmax.f32 %v1083, %v1084
      %v1086 = vsel %vm959, %v732, -inf
      %v1087 = vrot.slane %v1086, 4
      %v1088 = vmax.f32 %v1086, %v1087
      %v1089 = vrot.slane %v1088, 2
      %v1090 = vmax.f32 %v1088, %v1089
      %v1091 = vrot.slane %v1090, 1
      %v1092 = vmax.f32 %v1090, %v1091
      %v1093 = vsel %vm959, %v733, -inf
      %v1094 = vrot.slane %v1093, 4
      %v1095 = vmax.f32 %v1093, %v1094
      %v1096 = vrot.slane %v1095, 2
      %v1097 = vmax.f32 %v1095, %v1096
      %v1098 = vrot.slane %v1097, 1
      %v1099 = vmax.f32 %v1097, %v1098
      %v1100 = vsel %vm959, %v644, -inf
      %v1101 = vrot.slane %v1100, 4
      %v1102 = vmax.f32 %v1100, %v1101
      %v1103 = vrot.slane %v1102, 2
      %v1104 = vmax.f32 %v1102, %v1103
      %v1105 = vrot.slane %v1104, 1
      %v1106 = vmax.f32 %v1104, %v1105
      %v1107 = vsel %vm959, %v734, -inf
      %v1108 = vrot.slane %v1107, 4
      %v1109 = vmax.f32 %v1107, %v1108
      %v1110 = vrot.slane %v1109, 2
      %v1111 = vmax.f32 %v1109, %v1110
      %v1112 = vrot.slane %v1111, 1
      %v1113 = vmax.f32 %v1111, %v1112
      %v1114 = vsel %vm959, %v735, -inf
      %v1115 = vrot.slane %v1114, 4
      %v1116 = vmax.f32 %v1114, %v1115
      %v1117 = vrot.slane %v1116, 2
      %v1118 = vmax.f32 %v1116, %v1117
      %v1119 = vrot.slane %v1118, 1
      %v1120 = vmax.f32 %v1118, %v1119
      %v1121 = vsel %vm959, %v736, -inf
      %v1122 = vrot.slane %v1121, 4
      %v1123 = vmax.f32 %v1121, %v1122
      %v1124 = vrot.slane %v1123, 2
      %v1125 = vmax.f32 %v1123, %v1124
      %v1126 = vrot.slane %v1125, 1
      %v1127 = vmax.f32 %v1125, %v1126
      %v1128 = vsel %vm959, %v645, -inf
      %v1129 = vrot.slane %v1128, 4
      %v1130 = vmax.f32 %v1128, %v1129
      %v1131 = vrot.slane %v1130, 2
      %v1132 = vmax.f32 %v1130, %v1131
      %v1133 = vrot.slane %v1132, 1
      %v1134 = vmax.f32 %v1132, %v1133
      %v1135 = vsel %vm959, %v737, -inf
      %v1136 = vrot.slane %v1135, 4
      %v1137 = vmax.f32 %v1135, %v1136
      %v1138 = vrot.slane %v1137, 2
      %v1139 = vmax.f32 %v1137, %v1138
      %v1140 = vrot.slane %v1139, 1
      %v1141 = vmax.f32 %v1139, %v1140
      %v1142 = vsel %vm959, %v738, -inf
      %v1143 = vrot.slane %v1142, 4
      %v1144 = vmax.f32 %v1142, %v1143
      %v1145 = vrot.slane %v1144, 2
      %v1146 = vmax.f32 %v1144, %v1145
      %v1147 = vrot.slane %v1146, 1
      %v1148 = vmax.f32 %v1146, %v1147
      %v1149 = vsel %vm959, %v739, -inf
      %v1150 = vrot.slane %v1149, 4
      %v1151 = vmax.f32 %v1149, %v1150
      %v1152 = vrot.slane %v1151, 2
      %v1153 = vmax.f32 %v1151, %v1152
      %v1154 = vrot.slane %v1153, 1
      %v1155 = vmax.f32 %v1153, %v1154
      %v1156 = vsel %vm959, %v646, -inf
      %v1157 = vrot.slane %v1156, 4
      %v1158 = vmax.f32 %v1156, %v1157
      %v1159 = vrot.slane %v1158, 2
      %v1160 = vmax.f32 %v1158, %v1159
      %v1161 = vrot.slane %v1160, 1
      %v1162 = vmax.f32 %v1160, %v1161
      %v1163 = vsel %vm959, %v740, -inf
      %v1164 = vrot.slane %v1163, 4
      %v1165 = vmax.f32 %v1163, %v1164
      %v1166 = vrot.slane %v1165, 2
      %v1167 = vmax.f32 %v1165, %v1166
      %v1168 = vrot.slane %v1167, 1
      %v1169 = vmax.f32 %v1167, %v1168
      %v1170 = vsel %vm959, %v741, -inf
      %v1171 = vrot.slane %v1170, 4
      %v1172 = vmax.f32 %v1170, %v1171
      %v1173 = vrot.slane %v1172, 2
      %v1174 = vmax.f32 %v1172, %v1173
      %v1175 = vrot.slane %v1174, 1
      %v1176 = vmax.f32 %v1174, %v1175
      %v1177 = vsel %vm959, %v742, -inf
      %v1178 = vrot.slane %v1177, 4
      %v1179 = vmax.f32 %v1177, %v1178
      %v1180 = vrot.slane %v1179, 2
      %v1181 = vmax.f32 %v1179, %v1180
      %v1182 = vrot.slane %v1181, 1
      %v1183 = vmax.f32 %v1181, %v1182
      %v1184 = vsel %vm959, %v647, -inf
      %v1185 = vrot.slane %v1184, 4
      %v1186 = vmax.f32 %v1184, %v1185
      %v1187 = vrot.slane %v1186, 2
      %v1188 = vmax.f32 %v1186, %v1187
      %v1189 = vrot.slane %v1188, 1
      %v1190 = vmax.f32 %v1188, %v1189
      %v1191 = vsel %vm959, %v743, -inf
      %v1192 = vrot.slane %v1191, 4
      %v1193 = vmax.f32 %v1191, %v1192
      %v1194 = vrot.slane %v1193, 2
      %v1195 = vmax.f32 %v1193, %v1194
      %v1196 = vrot.slane %v1195, 1
      %v1197 = vmax.f32 %v1195, %v1196
      %v1198 = vsel %vm959, %v744, -inf
      %v1199 = vrot.slane %v1198, 4
      %v1200 = vmax.f32 %v1198, %v1199
      %v1201 = vrot.slane %v1200, 2
      %v1202 = vmax.f32 %v1200, %v1201
      %v1203 = vrot.slane %v1202, 1
      %v1204 = vmax.f32 %v1202, %v1203
      %v1205 = vsel %vm959, %v745, -inf
      %v1206 = vrot.slane %v1205, 4
      %v1207 = vmax.f32 %v1205, %v1206
      %v1208 = vrot.slane %v1207, 2
      %v1209 = vmax.f32 %v1207, %v1208
      %v1210 = vrot.slane %v1209, 1
      %v1211 = vmax.f32 %v1209, %v1210
      %v1212 = vsel %vm959, %v648, -inf
      %v1213 = vrot.slane %v1212, 4
      %v1214 = vmax.f32 %v1212, %v1213
      %v1215 = vrot.slane %v1214, 2
      %v1216 = vmax.f32 %v1214, %v1215
      %v1217 = vrot.slane %v1216, 1
      %v1218 = vmax.f32 %v1216, %v1217
      %v1219 = vsel %vm959, %v746, -inf
      %v1220 = vrot.slane %v1219, 4
      %v1221 = vmax.f32 %v1219, %v1220
      %v1222 = vrot.slane %v1221, 2
      %v1223 = vmax.f32 %v1221, %v1222
      %v1224 = vrot.slane %v1223, 1
      %v1225 = vmax.f32 %v1223, %v1224
      %v1226 = vsel %vm959, %v747, -inf
      %v1227 = vrot.slane %v1226, 4
      %v1228 = vmax.f32 %v1226, %v1227
      %v1229 = vrot.slane %v1228, 2
      %v1230 = vmax.f32 %v1228, %v1229
      %v1231 = vrot.slane %v1230, 1
      %v1232 = vmax.f32 %v1230, %v1231
      %v1233 = vsel %vm959, %v748, -inf
      %v1234 = vrot.slane %v1233, 4
      %v1235 = vmax.f32 %v1233, %v1234
      %v1236 = vrot.slane %v1235, 2
      %v1237 = vmax.f32 %v1235, %v1236
      %v1238 = vrot.slane %v1237, 1
      %v1239 = vmax.f32 %v1237, %v1238
      %v1240 = vsel %vm959, %v649, -inf
      %v1241 = vrot.slane %v1240, 4
      %v1242 = vmax.f32 %v1240, %v1241
      %v1243 = vrot.slane %v1242, 2
      %v1244 = vmax.f32 %v1242, %v1243
      %v1245 = vrot.slane %v1244, 1
      %v1246 = vmax.f32 %v1244, %v1245
      %v1247 = vsel %vm959, %v749, -inf
      %v1248 = vrot.slane %v1247, 4
      %v1249 = vmax.f32 %v1247, %v1248
      %v1250 = vrot.slane %v1249, 2
      %v1251 = vmax.f32 %v1249, %v1250
      %v1252 = vrot.slane %v1251, 1
      %v1253 = vmax.f32 %v1251, %v1252
      %v1254 = vsel %vm959, %v750, -inf
      %v1255 = vrot.slane %v1254, 4
      %v1256 = vmax.f32 %v1254, %v1255
      %v1257 = vrot.slane %v1256, 2
      %v1258 = vmax.f32 %v1256, %v1257
      %v1259 = vrot.slane %v1258, 1
      %v1260 = vmax.f32 %v1258, %v1259
      %v1261 = vsel %vm959, %v751, -inf
      %v1262 = vrot.slane %v1261, 4
      %v1263 = vmax.f32 %v1261, %v1262
      %v1264 = vrot.slane %v1263, 2
      %v1265 = vmax.f32 %v1263, %v1264
      %v1266 = vrot.slane %v1265, 1
      %v1267 = vmax.f32 %v1265, %v1266
      %v1268 = vsel %vm959, %v650, -inf
      %v1269 = vrot.slane %v1268, 4
      %v1270 = vmax.f32 %v1268, %v1269
      %v1271 = vrot.slane %v1270, 2
      %v1272 = vmax.f32 %v1270, %v1271
      %v1273 = vrot.slane %v1272, 1
      %v1274 = vmax.f32 %v1272, %v1273
      %v1275 = vsel %vm959, %v752, -inf
      %v1276 = vrot.slane %v1275, 4
      %v1277 = vmax.f32 %v1275, %v1276
      %v1278 = vrot.slane %v1277, 2
      %v1279 = vmax.f32 %v1277, %v1278
      %v1280 = vrot.slane %v1279, 1
      %v1281 = vmax.f32 %v1279, %v1280
      %v1282 = vsel %vm959, %v753, -inf
      %v1283 = vrot.slane %v1282, 4
      %v1284 = vmax.f32 %v1282, %v1283
      %v1285 = vrot.slane %v1284, 2
      %v1286 = vmax.f32 %v1284, %v1285
      %v1287 = vrot.slane %v1286, 1
      %v1288 = vmax.f32 %v1286, %v1287
      %v1289 = vsel %vm959, %v754, -inf
      %v1290 = vrot.slane %v1289, 4
      %v1291 = vmax.f32 %v1289, %v1290
      %v1292 = vrot.slane %v1291, 2
      %v1293 = vmax.f32 %v1291, %v1292
      %v1294 = vrot.slane %v1293, 1
      %v1295 = vmax.f32 %v1293, %v1294
      %v1296 = vsel %vm959, %v651, -inf
      %v1297 = vrot.slane %v1296, 4
      %v1298 = vmax.f32 %v1296, %v1297
      %v1299 = vrot.slane %v1298, 2
      %v1300 = vmax.f32 %v1298, %v1299
      %v1301 = vrot.slane %v1300, 1
      %v1302 = vmax.f32 %v1300, %v1301
      %v1303 = vsel %vm959, %v755, -inf
      %v1304 = vrot.slane %v1303, 4
      %v1305 = vmax.f32 %v1303, %v1304
      %v1306 = vrot.slane %v1305, 2
      %v1307 = vmax.f32 %v1305, %v1306
      %v1308 = vrot.slane %v1307, 1
      %v1309 = vmax.f32 %v1307, %v1308
      %v1310 = vsel %vm959, %v756, -inf
      %v1311 = vrot.slane %v1310, 4
      %v1312 = vmax.f32 %v1310, %v1311
      %v1313 = vrot.slane %v1312, 2
      %v1314 = vmax.f32 %v1312, %v1313
      %v1315 = vrot.slane %v1314, 1
      %v1316 = vmax.f32 %v1314, %v1315
      %v1317 = vsel %vm959, %v757, -inf
      %v1318 = vrot.slane %v1317, 4
      %v1319 = vmax.f32 %v1317, %v1318
      %v1320 = vrot.slane %v1319, 2
      %v1321 = vmax.f32 %v1319, %v1320
      %v1322 = vrot.slane %v1321, 1
      %v1323 = vmax.f32 %v1321, %v1322
      %v1324 = vsel %vm959, %v652, -inf
      %v1325 = vrot.slane %v1324, 4
      %v1326 = vmax.f32 %v1324, %v1325
      %v1327 = vrot.slane %v1326, 2
      %v1328 = vmax.f32 %v1326, %v1327
      %v1329 = vrot.slane %v1328, 1
      %v1330 = vmax.f32 %v1328, %v1329
      %v1331 = vsel %vm959, %v758, -inf
      %v1332 = vrot.slane %v1331, 4
      %v1333 = vmax.f32 %v1331, %v1332
      %v1334 = vrot.slane %v1333, 2
      %v1335 = vmax.f32 %v1333, %v1334
      %v1336 = vrot.slane %v1335, 1
      %v1337 = vmax.f32 %v1335, %v1336
      %v1338 = vsel %vm959, %v759, -inf
      %v1339 = vrot.slane %v1338, 4
      %v1340 = vmax.f32 %v1338, %v1339
      %v1341 = vrot.slane %v1340, 2
      %v1342 = vmax.f32 %v1340, %v1341
      %v1343 = vrot.slane %v1342, 1
      %v1344 = vmax.f32 %v1342, %v1343
      %v1345 = vsel %vm959, %v760, -inf
      %v1346 = vrot.slane %v1345, 4
      %v1347 = vmax.f32 %v1345, %v1346
      %v1348 = vrot.slane %v1347, 2
      %v1349 = vmax.f32 %v1347, %v1348
      %v1350 = vrot.slane %v1349, 1
      %v1351 = vmax.f32 %v1349, %v1350
      %v1352 = vsel %vm959, %v653, -inf
      %v1353 = vrot.slane %v1352, 4
      %v1354 = vmax.f32 %v1352, %v1353
      %v1355 = vrot.slane %v1354, 2
      %v1356 = vmax.f32 %v1354, %v1355
      %v1357 = vrot.slane %v1356, 1
      %v1358 = vmax.f32 %v1356, %v1357
      %v1359 = vsel %vm959, %v761, -inf
      %v1360 = vrot.slane %v1359, 4
      %v1361 = vmax.f32 %v1359, %v1360
      %v1362 = vrot.slane %v1361, 2
      %v1363 = vmax.f32 %v1361, %v1362
      %v1364 = vrot.slane %v1363, 1
      %v1365 = vmax.f32 %v1363, %v1364
      %v1366 = vsel %vm959, %v762, -inf
      %v1367 = vrot.slane %v1366, 4
      %v1368 = vmax.f32 %v1366, %v1367
      %v1369 = vrot.slane %v1368, 2
      %v1370 = vmax.f32 %v1368, %v1369
      %v1371 = vrot.slane %v1370, 1
      %v1372 = vmax.f32 %v1370, %v1371
      %v1373 = vsel %vm959, %v763, -inf
      %v1374 = vrot.slane %v1373, 4
      %v1375 = vmax.f32 %v1373, %v1374
      %v1376 = vrot.slane %v1375, 2
      %v1377 = vmax.f32 %v1375, %v1376
      %v1378 = vrot.slane %v1377, 1
      %v1379 = vmax.f32 %v1377, %v1378
      %v1380 = vsel %vm959, %v654, -inf
      %v1381 = vrot.slane %v1380, 4
      %v1382 = vmax.f32 %v1380, %v1381
      %v1383 = vrot.slane %v1382, 2
      %v1384 = vmax.f32 %v1382, %v1383
      %v1385 = vrot.slane %v1384, 1
      %v1386 = vmax.f32 %v1384, %v1385
      %v1387 = vsel %vm959, %v764, -inf
      %v1388 = vrot.slane %v1387, 4
      %v1389 = vmax.f32 %v1387, %v1388
      %v1390 = vrot.slane %v1389, 2
      %v1391 = vmax.f32 %v1389, %v1390
      %v1392 = vrot.slane %v1391, 1
      %v1393 = vmax.f32 %v1391, %v1392
      %v1394 = vsel %vm959, %v765, -inf
      %v1395 = vrot.slane %v1394, 4
      %v1396 = vmax.f32 %v1394, %v1395
      %v1397 = vrot.slane %v1396, 2
      %v1398 = vmax.f32 %v1396, %v1397
      %v1399 = vrot.slane %v1398, 1
      %v1400 = vmax.f32 %v1398, %v1399
      %v1401 = vsel %vm959, %v766, -inf
      %v1402 = vrot.slane %v1401, 4
      %v1403 = vmax.f32 %v1401, %v1402
      %v1404 = vrot.slane %v1403, 2
      %v1405 = vmax.f32 %v1403, %v1404
      %v1406 = vrot.slane %v1405, 1
      %v1407 = vmax.f32 %v1405, %v1406
      %v1408 = vsel %vm959, %v655, -inf
      %v1409 = vrot.slane %v1408, 4
      %v1410 = vmax.f32 %v1408, %v1409
      %v1411 = vrot.slane %v1410, 2
      %v1412 = vmax.f32 %v1410, %v1411
      %v1413 = vrot.slane %v1412, 1
      %v1414 = vmax.f32 %v1412, %v1413
      %v1415 = vsel %vm959, %v767, -inf
      %v1416 = vrot.slane %v1415, 4
      %v1417 = vmax.f32 %v1415, %v1416
      %v1418 = vrot.slane %v1417, 2
      %v1419 = vmax.f32 %v1417, %v1418
      %v1420 = vrot.slane %v1419, 1
      %v1421 = vmax.f32 %v1419, %v1420
      %v1422 = vsel %vm959, %v768, -inf
      %v1423 = vrot.slane %v1422, 4
      %v1424 = vmax.f32 %v1422, %v1423
      %v1425 = vrot.slane %v1424, 2
      %v1426 = vmax.f32 %v1424, %v1425
      %v1427 = vrot.slane %v1426, 1
      %v1428 = vmax.f32 %v1426, %v1427
      %v1429 = vsel %vm959, %v769, -inf
      %v1430 = vrot.slane %v1429, 4
      %v1431 = vmax.f32 %v1429, %v1430
      %v1432 = vrot.slane %v1431, 2
      %v1433 = vmax.f32 %v1431, %v1432
      %v1434 = vrot.slane %v1433, 1
      %v1435 = vmax.f32 %v1433, %v1434
      %v1436 = vsel %vm959, %v656, -inf
      %v1437 = vrot.slane %v1436, 4
      %v1438 = vmax.f32 %v1436, %v1437
      %v1439 = vrot.slane %v1438, 2
      %v1440 = vmax.f32 %v1438, %v1439
      %v1441 = vrot.slane %v1440, 1
      %v1442 = vmax.f32 %v1440, %v1441
      %v1443 = vsel %vm959, %v770, -inf
      %v1444 = vrot.slane %v1443, 4
      %v1445 = vmax.f32 %v1443, %v1444
      %v1446 = vrot.slane %v1445, 2
      %v1447 = vmax.f32 %v1445, %v1446
      %v1448 = vrot.slane %v1447, 1
      %v1449 = vmax.f32 %v1447, %v1448
      %v1450 = vsel %vm959, %v771, -inf
      %v1451 = vrot.slane %v1450, 4
      %v1452 = vmax.f32 %v1450, %v1451
      %v1453 = vrot.slane %v1452, 2
      %v1454 = vmax.f32 %v1452, %v1453
      %v1455 = vrot.slane %v1454, 1
      %v1456 = vmax.f32 %v1454, %v1455
      %v1457 = vsel %vm959, %v772, -inf
      %v1458 = vrot.slane %v1457, 4
      %v1459 = vmax.f32 %v1457, %v1458
      %v1460 = vrot.slane %v1459, 2
      %v1461 = vmax.f32 %v1459, %v1460
      %v1462 = vrot.slane %v1461, 1
      %v1463 = vmax.f32 %v1461, %v1462
      %v1464 = vsel %vm959, %v657, -inf
      %v1465 = vrot.slane %v1464, 4
      %v1466 = vmax.f32 %v1464, %v1465
      %v1467 = vrot.slane %v1466, 2
      %v1468 = vmax.f32 %v1466, %v1467
      %v1469 = vrot.slane %v1468, 1
      %v1470 = vmax.f32 %v1468, %v1469
      %v1471 = vsel %vm959, %v773, -inf
      %v1472 = vrot.slane %v1471, 4
      %v1473 = vmax.f32 %v1471, %v1472
      %v1474 = vrot.slane %v1473, 2
      %v1475 = vmax.f32 %v1473, %v1474
      %v1476 = vrot.slane %v1475, 1
      %v1477 = vmax.f32 %v1475, %v1476
      %v1478 = vsel %vm959, %v774, -inf
      %v1479 = vrot.slane %v1478, 4
      %v1480 = vmax.f32 %v1478, %v1479
      %v1481 = vrot.slane %v1480, 2
      %v1482 = vmax.f32 %v1480, %v1481
      %v1483 = vrot.slane %v1482, 1
      %v1484 = vmax.f32 %v1482, %v1483
      %v1485 = vsel %vm959, %v775, -inf
      %v1486 = vrot.slane %v1485, 4
      %v1487 = vmax.f32 %v1485, %v1486
      %v1488 = vrot.slane %v1487, 2
      %v1489 = vmax.f32 %v1487, %v1488
      %v1490 = vrot.slane %v1489, 1
      %v1491 = vmax.f32 %v1489, %v1490
      %v1492 = vsel %vm959, %v658, -inf
      %v1493 = vrot.slane %v1492, 4
      %v1494 = vmax.f32 %v1492, %v1493
      %v1495 = vrot.slane %v1494, 2
      %v1496 = vmax.f32 %v1494, %v1495
      %v1497 = vrot.slane %v1496, 1
      %v1498 = vmax.f32 %v1496, %v1497
      %v1499 = vsel %vm959, %v776, -inf
      %v1500 = vrot.slane %v1499, 4
      %v1501 = vmax.f32 %v1499, %v1500
      %v1502 = vrot.slane %v1501, 2
      %v1503 = vmax.f32 %v1501, %v1502
      %v1504 = vrot.slane %v1503, 1
      %v1505 = vmax.f32 %v1503, %v1504
      %v1506 = vsel %vm959, %v777, -inf
      %v1507 = vrot.slane %v1506, 4
      %v1508 = vmax.f32 %v1506, %v1507
      %v1509 = vrot.slane %v1508, 2
      %v1510 = vmax.f32 %v1508, %v1509
      %v1511 = vrot.slane %v1510, 1
      %v1512 = vmax.f32 %v1510, %v1511
      %v1513 = vsel %vm959, %v778, -inf
      %v1514 = vrot.slane %v1513, 4
      %v1515 = vmax.f32 %v1513, %v1514
      %v1516 = vrot.slane %v1515, 2
      %v1517 = vmax.f32 %v1515, %v1516
      %v1518 = vrot.slane %v1517, 1
      %v1519 = vmax.f32 %v1517, %v1518
      %v1520 = vsel %vm959, %v659, -inf
      %v1521 = vrot.slane %v1520, 4
      %v1522 = vmax.f32 %v1520, %v1521
      %v1523 = vrot.slane %v1522, 2
      %v1524 = vmax.f32 %v1522, %v1523
      %v1525 = vrot.slane %v1524, 1
      %v1526 = vmax.f32 %v1524, %v1525
      %v1527 = vsel %vm959, %v779, -inf
      %v1528 = vrot.slane %v1527, 4
      %v1529 = vmax.f32 %v1527, %v1528
      %v1530 = vrot.slane %v1529, 2
      %v1531 = vmax.f32 %v1529, %v1530
      %v1532 = vrot.slane %v1531, 1
      %v1533 = vmax.f32 %v1531, %v1532
      %v1534 = vsel %vm959, %v780, -inf
      %v1535 = vrot.slane %v1534, 4
      %v1536 = vmax.f32 %v1534, %v1535
      %v1537 = vrot.slane %v1536, 2
      %v1538 = vmax.f32 %v1536, %v1537
      %v1539 = vrot.slane %v1538, 1
      %v1540 = vmax.f32 %v1538, %v1539
      %v1541 = vsel %vm959, %v781, -inf
      %v1542 = vrot.slane %v1541, 4
      %v1543 = vmax.f32 %v1541, %v1542
      %v1544 = vrot.slane %v1543, 2
      %v1545 = vmax.f32 %v1543, %v1544
      %v1546 = vrot.slane %v1545, 1
      %v1547 = vmax.f32 %v1545, %v1546
      %v1548 = vsel %vm959, %v660, -inf
      %v1549 = vrot.slane %v1548, 4
      %v1550 = vmax.f32 %v1548, %v1549
      %v1551 = vrot.slane %v1550, 2
      %v1552 = vmax.f32 %v1550, %v1551
      %v1553 = vrot.slane %v1552, 1
      %v1554 = vmax.f32 %v1552, %v1553
      %v1555 = vsel %vm959, %v782, -inf
      %v1556 = vrot.slane %v1555, 4
      %v1557 = vmax.f32 %v1555, %v1556
      %v1558 = vrot.slane %v1557, 2
      %v1559 = vmax.f32 %v1557, %v1558
      %v1560 = vrot.slane %v1559, 1
      %v1561 = vmax.f32 %v1559, %v1560
      %v1562 = vsel %vm959, %v783, -inf
      %v1563 = vrot.slane %v1562, 4
      %v1564 = vmax.f32 %v1562, %v1563
      %v1565 = vrot.slane %v1564, 2
      %v1566 = vmax.f32 %v1564, %v1565
      %v1567 = vrot.slane %v1566, 1
      %v1568 = vmax.f32 %v1566, %v1567
      %v1569 = vsel %vm959, %v784, -inf
      %v1570 = vrot.slane %v1569, 4
      %v1571 = vmax.f32 %v1569, %v1570
      %v1572 = vrot.slane %v1571, 2
      %v1573 = vmax.f32 %v1571, %v1572
      %v1574 = vrot.slane %v1573, 1
      %v1575 = vmax.f32 %v1573, %v1574
      %v1576 = vsel %vm959, %v661, -inf
      %v1577 = vrot.slane %v1576, 4
      %v1578 = vmax.f32 %v1576, %v1577
      %v1579 = vrot.slane %v1578, 2
      %v1580 = vmax.f32 %v1578, %v1579
      %v1581 = vrot.slane %v1580, 1
      %v1582 = vmax.f32 %v1580, %v1581
      %v1583 = vsel %vm959, %v785, -inf
      %v1584 = vrot.slane %v1583, 4
      %v1585 = vmax.f32 %v1583, %v1584
      %v1586 = vrot.slane %v1585, 2
      %v1587 = vmax.f32 %v1585, %v1586
      %v1588 = vrot.slane %v1587, 1
      %v1589 = vmax.f32 %v1587, %v1588
      %v1590 = vsel %vm959, %v786, -inf
      %v1591 = vrot.slane %v1590, 4
      %v1592 = vmax.f32 %v1590, %v1591
      %v1593 = vrot.slane %v1592, 2
      %v1594 = vmax.f32 %v1592, %v1593
      %v1595 = vrot.slane %v1594, 1
      %v1596 = vmax.f32 %v1594, %v1595
      %v1597 = vsel %vm959, %v787, -inf
      %v1598 = vrot.slane %v1597, 4
      %v1599 = vmax.f32 %v1597, %v1598
      %v1600 = vrot.slane %v1599, 2
      %v1601 = vmax.f32 %v1599, %v1600
      %v1602 = vrot.slane %v1601, 1
      %v1603 = vmax.f32 %v1601, %v1602
      %v1604 = vsel %vm959, %v662, -inf
      %v1605 = vrot.slane %v1604, 4
      %v1606 = vmax.f32 %v1604, %v1605
      %v1607 = vrot.slane %v1606, 2
      %v1608 = vmax.f32 %v1606, %v1607
      %v1609 = vrot.slane %v1608, 1
      %v1610 = vmax.f32 %v1608, %v1609
      %v1611 = vsel %vm959, %v788, -inf
      %v1612 = vrot.slane %v1611, 4
      %v1613 = vmax.f32 %v1611, %v1612
      %v1614 = vrot.slane %v1613, 2
      %v1615 = vmax.f32 %v1613, %v1614
      %v1616 = vrot.slane %v1615, 1
      %v1617 = vmax.f32 %v1615, %v1616
      %v1618 = vsel %vm959, %v789, -inf
      %v1619 = vrot.slane %v1618, 4
      %v1620 = vmax.f32 %v1618, %v1619
      %v1621 = vrot.slane %v1620, 2
      %v1622 = vmax.f32 %v1620, %v1621
      %v1623 = vrot.slane %v1622, 1
      %v1624 = vmax.f32 %v1622, %v1623
      %v1625 = vsel %vm959, %v790, -inf
      %v1626 = vrot.slane %v1625, 4
      %v1627 = vmax.f32 %v1625, %v1626
      %v1628 = vrot.slane %v1627, 2
      %v1629 = vmax.f32 %v1627, %v1628
      %v1630 = vrot.slane %v1629, 1
      %v1631 = vmax.f32 %v1629, %v1630
      %v1632 = vsel %vm959, %v663, -inf
      %v1633 = vrot.slane %v1632, 4
      %v1634 = vmax.f32 %v1632, %v1633
      %v1635 = vrot.slane %v1634, 2
      %v1636 = vmax.f32 %v1634, %v1635
      %v1637 = vrot.slane %v1636, 1
      %v1638 = vmax.f32 %v1636, %v1637
      %v1639 = vsel %vm959, %v791, -inf
      %v1640 = vrot.slane %v1639, 4
      %v1641 = vmax.f32 %v1639, %v1640
      %v1642 = vrot.slane %v1641, 2
      %v1643 = vmax.f32 %v1641, %v1642
      %v1644 = vrot.slane %v1643, 1
      %v1645 = vmax.f32 %v1643, %v1644
      %v1646 = vsel %vm959, %v792, -inf
      %v1647 = vrot.slane %v1646, 4
      %v1648 = vmax.f32 %v1646, %v1647
      %v1649 = vrot.slane %v1648, 2
      %v1650 = vmax.f32 %v1648, %v1649
      %v1651 = vrot.slane %v1650, 1
      %v1652 = vmax.f32 %v1650, %v1651
      %v1653 = vsel %vm959, %v793, -inf
      %v1654 = vrot.slane %v1653, 4
      %v1655 = vmax.f32 %v1653, %v1654
      %v1656 = vrot.slane %v1655, 2
      %v1657 = vmax.f32 %v1655, %v1656
      %v1658 = vrot.slane %v1657, 1
      %v1659 = vmax.f32 %v1657, %v1658
      %v1660 = vsel %vm959, %v664, -inf
      %v1661 = vrot.slane %v1660, 4
      %v1662 = vmax.f32 %v1660, %v1661
      %v1663 = vrot.slane %v1662, 2
      %v1664 = vmax.f32 %v1662, %v1663
      %v1665 = vrot.slane %v1664, 1
      %v1666 = vmax.f32 %v1664, %v1665
      %v1667 = vsel %vm959, %v794, -inf
      %v1668 = vrot.slane %v1667, 4
      %v1669 = vmax.f32 %v1667, %v1668
      %v1670 = vrot.slane %v1669, 2
      %v1671 = vmax.f32 %v1669, %v1670
      %v1672 = vrot.slane %v1671, 1
      %v1673 = vmax.f32 %v1671, %v1672
      %v1674 = vsel %vm959, %v795, -inf
      %v1675 = vrot.slane %v1674, 4
      %v1676 = vmax.f32 %v1674, %v1675
      %v1677 = vrot.slane %v1676, 2
      %v1678 = vmax.f32 %v1676, %v1677
      %v1679 = vrot.slane %v1678, 1
      %v1680 = vmax.f32 %v1678, %v1679
      %v1681 = vsel %vm959, %v796, -inf
      %v1682 = vrot.slane %v1681, 4
      %v1683 = vmax.f32 %v1681, %v1682
      %v1684 = vrot.slane %v1683, 2
      %v1685 = vmax.f32 %v1683, %v1684
      %v1686 = vrot.slane %v1685, 1
      %v1687 = vmax.f32 %v1685, %v1686
      %v1688 = vsel %vm959, %v665, -inf
      %v1689 = vrot.slane %v1688, 4
      %v1690 = vmax.f32 %v1688, %v1689
      %v1691 = vrot.slane %v1690, 2
      %v1692 = vmax.f32 %v1690, %v1691
      %v1693 = vrot.slane %v1692, 1
      %v1694 = vmax.f32 %v1692, %v1693
      %v1695 = vsel %vm959, %v797, -inf
      %v1696 = vrot.slane %v1695, 4
      %v1697 = vmax.f32 %v1695, %v1696
      %v1698 = vrot.slane %v1697, 2
      %v1699 = vmax.f32 %v1697, %v1698
      %v1700 = vrot.slane %v1699, 1
      %v1701 = vmax.f32 %v1699, %v1700
      %v1702 = vsel %vm959, %v798, -inf
      %v1703 = vrot.slane %v1702, 4
      %v1704 = vmax.f32 %v1702, %v1703
      %v1705 = vrot.slane %v1704, 2
      %v1706 = vmax.f32 %v1704, %v1705
      %v1707 = vrot.slane %v1706, 1
      %v1708 = vmax.f32 %v1706, %v1707
      %v1709 = vsel %vm959, %v799, -inf
      %v1710 = vrot.slane %v1709, 4
      %v1711 = vmax.f32 %v1709, %v1710
      %v1712 = vrot.slane %v1711, 2
      %v1713 = vmax.f32 %v1711, %v1712
      %v1714 = vrot.slane %v1713, 1
      %v1715 = vmax.f32 %v1713, %v1714
      %v1716 = vsel %vm959, %v666, -inf
      %v1717 = vrot.slane %v1716, 4
      %v1718 = vmax.f32 %v1716, %v1717
      %v1719 = vrot.slane %v1718, 2
      %v1720 = vmax.f32 %v1718, %v1719
      %v1721 = vrot.slane %v1720, 1
      %v1722 = vmax.f32 %v1720, %v1721
      %v1723 = vsel %vm959, %v800, -inf
      %v1724 = vrot.slane %v1723, 4
      %v1725 = vmax.f32 %v1723, %v1724
      %v1726 = vrot.slane %v1725, 2
      %v1727 = vmax.f32 %v1725, %v1726
      %v1728 = vrot.slane %v1727, 1
      %v1729 = vmax.f32 %v1727, %v1728
      %v1730 = vsel %vm959, %v801, -inf
      %v1731 = vrot.slane %v1730, 4
      %v1732 = vmax.f32 %v1730, %v1731
      %v1733 = vrot.slane %v1732, 2
      %v1734 = vmax.f32 %v1732, %v1733
      %v1735 = vrot.slane %v1734, 1
      %v1736 = vmax.f32 %v1734, %v1735
      %v1737 = vsel %vm959, %v802, -inf
      %v1738 = vrot.slane %v1737, 4
      %v1739 = vmax.f32 %v1737, %v1738
      %v1740 = vrot.slane %v1739, 2
      %v1741 = vmax.f32 %v1739, %v1740
      %v1742 = vrot.slane %v1741, 1
      %v1743 = vmax.f32 %v1741, %v1742
      %v1744 = vsel %vm959, %v667, -inf
      %v1745 = vrot.slane %v1744, 4
      %v1746 = vmax.f32 %v1744, %v1745
      %v1747 = vrot.slane %v1746, 2
      %v1748 = vmax.f32 %v1746, %v1747
      %v1749 = vrot.slane %v1748, 1
      %v1750 = vmax.f32 %v1748, %v1749
      %v1751 = vsel %vm959, %v803, -inf
      %v1752 = vrot.slane %v1751, 4
      %v1753 = vmax.f32 %v1751, %v1752
      %v1754 = vrot.slane %v1753, 2
      %v1755 = vmax.f32 %v1753, %v1754
      %v1756 = vrot.slane %v1755, 1
      %v1757 = vmax.f32 %v1755, %v1756
      %v1758 = vsel %vm959, %v804, -inf
      %v1759 = vrot.slane %v1758, 4
      %v1760 = vmax.f32 %v1758, %v1759
      %v1761 = vrot.slane %v1760, 2
      %v1762 = vmax.f32 %v1760, %v1761
      %v1763 = vrot.slane %v1762, 1
      %v1764 = vmax.f32 %v1762, %v1763
      %v1765 = vsel %vm959, %v805, -inf
      %v1766 = vrot.slane %v1765, 4
      %v1767 = vmax.f32 %v1765, %v1766
      %v1768 = vrot.slane %v1767, 2
      %v1769 = vmax.f32 %v1767, %v1768
      %v1770 = vrot.slane %v1769, 1
      %v1771 = vmax.f32 %v1769, %v1770
      %v1772 = vsel %vm959, %v668, -inf
      %v1773 = vrot.slane %v1772, 4
      %v1774 = vmax.f32 %v1772, %v1773
      %v1775 = vrot.slane %v1774, 2
      %v1776 = vmax.f32 %v1774, %v1775
      %v1777 = vrot.slane %v1776, 1
      %v1778 = vmax.f32 %v1776, %v1777
      %v1779 = vsel %vm959, %v806, -inf
      %v1780 = vrot.slane %v1779, 4
      %v1781 = vmax.f32 %v1779, %v1780
      %v1782 = vrot.slane %v1781, 2
      %v1783 = vmax.f32 %v1781, %v1782
      %v1784 = vrot.slane %v1783, 1
      %v1785 = vmax.f32 %v1783, %v1784
      %v1786 = vsel %vm959, %v807, -inf
      %v1787 = vrot.slane %v1786, 4
      %v1788 = vmax.f32 %v1786, %v1787
      %v1789 = vrot.slane %v1788, 2
      %v1790 = vmax.f32 %v1788, %v1789
      %v1791 = vrot.slane %v1790, 1
      %v1792 = vmax.f32 %v1790, %v1791
      %v1793 = vsel %vm959, %v808, -inf
      %v1794 = vrot.slane %v1793, 4
      %v1795 = vmax.f32 %v1793, %v1794
      %v1796 = vrot.slane %v1795, 2
      %v1797 = vmax.f32 %v1795, %v1796
      %v1798 = vrot.slane %v1797, 1
      %v1799 = vmax.f32 %v1797, %v1798
      %v1800 = vsel %vm959, %v669, -inf
      %v1801 = vrot.slane %v1800, 4
      %v1802 = vmax.f32 %v1800, %v1801
      %v1803 = vrot.slane %v1802, 2
      %v1804 = vmax.f32 %v1802, %v1803
      %v1805 = vrot.slane %v1804, 1
      %v1806 = vmax.f32 %v1804, %v1805
      %v1807 = vsel %vm959, %v809, -inf
      %v1808 = vrot.slane %v1807, 4
      %v1809 = vmax.f32 %v1807, %v1808
      %v1810 = vrot.slane %v1809, 2
      %v1811 = vmax.f32 %v1809, %v1810
      %v1812 = vrot.slane %v1811, 1
      %v1813 = vmax.f32 %v1811, %v1812
      %v1814 = vsel %vm959, %v810, -inf
      %v1815 = vrot.slane %v1814, 4
      %v1816 = vmax.f32 %v1814, %v1815
      %v1817 = vrot.slane %v1816, 2
      %v1818 = vmax.f32 %v1816, %v1817
      %v1819 = vrot.slane %v1818, 1
      %v1820 = vmax.f32 %v1818, %v1819
      %v1821 = vsel %vm959, %v811, -inf
      %v1822 = vrot.slane %v1821, 4
      %v1823 = vmax.f32 %v1821, %v1822
      %v1824 = vrot.slane %v1823, 2
      %v1825 = vmax.f32 %v1823, %v1824
      %v1826 = vrot.slane %v1825, 1
      %v1827 = vmax.f32 %v1825, %v1826
      %v1828 = vsel %vm959, %v670, -inf
      %v1829 = vrot.slane %v1828, 4
      %v1830 = vmax.f32 %v1828, %v1829
      %v1831 = vrot.slane %v1830, 2
      %v1832 = vmax.f32 %v1830, %v1831
      %v1833 = vrot.slane %v1832, 1
      %v1834 = vmax.f32 %v1832, %v1833
      %v1835 = vsel %vm959, %v812, -inf
      %v1836 = vrot.slane %v1835, 4
      %v1837 = vmax.f32 %v1835, %v1836
      %v1838 = vrot.slane %v1837, 2
      %v1839 = vmax.f32 %v1837, %v1838
      %v1840 = vrot.slane %v1839, 1
      %v1841 = vmax.f32 %v1839, %v1840
      %v1842 = vsel %vm959, %v813, -inf
      %v1843 = vrot.slane %v1842, 4
      %v1844 = vmax.f32 %v1842, %v1843
      %v1845 = vrot.slane %v1844, 2
      %v1846 = vmax.f32 %v1844, %v1845
      %v1847 = vrot.slane %v1846, 1
      %v1848 = vmax.f32 %v1846, %v1847
      %v1849 = vsel %vm959, %v814, -inf
      %v1850 = vrot.slane %v1849, 4
      %v1851 = vmax.f32 %v1849, %v1850
      %v1852 = vrot.slane %v1851, 2
      %v1853 = vmax.f32 %v1851, %v1852
      %v1854 = vrot.slane %v1853, 1
      %v1855 = vmax.f32 %v1853, %v1854
      %v1856 = vsel %vm959, %v671, -inf
      %v1857 = vrot.slane %v1856, 4
      %v1858 = vmax.f32 %v1856, %v1857
      %v1859 = vrot.slane %v1858, 2
      %v1860 = vmax.f32 %v1858, %v1859
      %v1861 = vrot.slane %v1860, 1
      %v1862 = vmax.f32 %v1860, %v1861
      %v1863 = vsel %vm959, %v815, -inf
      %v1864 = vrot.slane %v1863, 4
      %v1865 = vmax.f32 %v1863, %v1864
      %v1866 = vrot.slane %v1865, 2
      %v1867 = vmax.f32 %v1865, %v1866
      %v1868 = vrot.slane %v1867, 1
      %v1869 = vmax.f32 %v1867, %v1868
      %v1870 = vsel %vm959, %v816, -inf
      %v1871 = vrot.slane %v1870, 4
      %v1872 = vmax.f32 %v1870, %v1871
      %v1873 = vrot.slane %v1872, 2
      %v1874 = vmax.f32 %v1872, %v1873
      %v1875 = vrot.slane %v1874, 1
      %v1876 = vmax.f32 %v1874, %v1875
      %v1877 = vsel %vm959, %v817, -inf
      %v1878 = vrot.slane %v1877, 4
      %v1879 = vmax.f32 %v1877, %v1878
      %v1880 = vrot.slane %v1879, 2
      %v1881 = vmax.f32 %v1879, %v1880
      %v1882 = vrot.slane %v1881, 1
      %v1883 = vmax.f32 %v1881, %v1882
      %v1884 = vsel %vm959, %v672, -inf
      %v1885 = vrot.slane %v1884, 4
      %v1886 = vmax.f32 %v1884, %v1885
      %v1887 = vrot.slane %v1886, 2
      %v1888 = vmax.f32 %v1886, %v1887
      %v1889 = vrot.slane %v1888, 1
      %v1890 = vmax.f32 %v1888, %v1889
      %v1891 = vsel %vm959, %v818, -inf
      %v1892 = vrot.slane %v1891, 4
      %v1893 = vmax.f32 %v1891, %v1892
      %v1894 = vrot.slane %v1893, 2
      %v1895 = vmax.f32 %v1893, %v1894
      %v1896 = vrot.slane %v1895, 1
      %v1897 = vmax.f32 %v1895, %v1896
      %v1898 = vsel %vm959, %v819, -inf
      %v1899 = vrot.slane %v1898, 4
      %v1900 = vmax.f32 %v1898, %v1899
      %v1901 = vrot.slane %v1900, 2
      %v1902 = vmax.f32 %v1900, %v1901
      %v1903 = vrot.slane %v1902, 1
      %v1904 = vmax.f32 %v1902, %v1903
      %v1905 = vsel %vm959, %v820, -inf
      %v1906 = vrot.slane %v1905, 4
      %v1907 = vmax.f32 %v1905, %v1906
      %v1908 = vrot.slane %v1907, 2
      %v1909 = vmax.f32 %v1907, %v1908
      %v1910 = vrot.slane %v1909, 1
      %v1911 = vmax.f32 %v1909, %v1910
      %v1912 = vsel %vm959, %v673, -inf
      %v1913 = vrot.slane %v1912, 4
      %v1914 = vmax.f32 %v1912, %v1913
      %v1915 = vrot.slane %v1914, 2
      %v1916 = vmax.f32 %v1914, %v1915
      %v1917 = vrot.slane %v1916, 1
      %v1918 = vmax.f32 %v1916, %v1917
      %v1919 = vsel %vm959, %v821, -inf
      %v1920 = vrot.slane %v1919, 4
      %v1921 = vmax.f32 %v1919, %v1920
      %v1922 = vrot.slane %v1921, 2
      %v1923 = vmax.f32 %v1921, %v1922
      %v1924 = vrot.slane %v1923, 1
      %v1925 = vmax.f32 %v1923, %v1924
      %v1926 = vsel %vm959, %v822, -inf
      %v1927 = vrot.slane %v1926, 4
      %v1928 = vmax.f32 %v1926, %v1927
      %v1929 = vrot.slane %v1928, 2
      %v1930 = vmax.f32 %v1928, %v1929
      %v1931 = vrot.slane %v1930, 1
      %v1932 = vmax.f32 %v1930, %v1931
      %v1933 = vsel %vm959, %v823, -inf
      %v1934 = vrot.slane %v1933, 4
      %v1935 = vmax.f32 %v1933, %v1934
      %v1936 = vrot.slane %v1935, 2
      %v1937 = vmax.f32 %v1935, %v1936
      %v1938 = vrot.slane %v1937, 1
      %v1939 = vmax.f32 %v1937, %v1938
      %v1940 = vsel %vm959, %v674, -inf
      %v1941 = vrot.slane %v1940, 4
      %v1942 = vmax.f32 %v1940, %v1941
      %v1943 = vrot.slane %v1942, 2
      %v1944 = vmax.f32 %v1942, %v1943
      %v1945 = vrot.slane %v1944, 1
      %v1946 = vmax.f32 %v1944, %v1945
      %v1947 = vsel %vm959, %v824, -inf
      %v1948 = vrot.slane %v1947, 4
      %v1949 = vmax.f32 %v1947, %v1948
      %v1950 = vrot.slane %v1949, 2
      %v1951 = vmax.f32 %v1949, %v1950
      %v1952 = vrot.slane %v1951, 1
      %v1953 = vmax.f32 %v1951, %v1952
      %v1954 = vsel %vm959, %v825, -inf
      %v1955 = vrot.slane %v1954, 4
      %v1956 = vmax.f32 %v1954, %v1955
      %v1957 = vrot.slane %v1956, 2
      %v1958 = vmax.f32 %v1956, %v1957
      %v1959 = vrot.slane %v1958, 1
      %v1960 = vmax.f32 %v1958, %v1959
      %v1961 = vsel %vm959, %v826, -inf
      %v1962 = vrot.slane %v1961, 4
      %v1963 = vmax.f32 %v1961, %v1962
      %v1964 = vrot.slane %v1963, 2
      %v1965 = vmax.f32 %v1963, %v1964
      %v1966 = vrot.slane %v1965, 1
      %v1967 = vmax.f32 %v1965, %v1966
      %v1968 = vsel %vm959, %v675, -inf
      %v1969 = vrot.slane %v1968, 4
      %v1970 = vmax.f32 %v1968, %v1969
      %v1971 = vrot.slane %v1970, 2
      %v1972 = vmax.f32 %v1970, %v1971
      %v1973 = vrot.slane %v1972, 1
      %v1974 = vmax.f32 %v1972, %v1973
      %v1975 = vsel %vm959, %v827, -inf
      %v1976 = vrot.slane %v1975, 4
      %v1977 = vmax.f32 %v1975, %v1976
      %v1978 = vrot.slane %v1977, 2
      %v1979 = vmax.f32 %v1977, %v1978
      %v1980 = vrot.slane %v1979, 1
      %v1981 = vmax.f32 %v1979, %v1980
      %v1982 = vsel %vm959, %v828, -inf
      %v1983 = vrot.slane %v1982, 4
      %v1984 = vmax.f32 %v1982, %v1983
      %v1985 = vrot.slane %v1984, 2
      %v1986 = vmax.f32 %v1984, %v1985
      %v1987 = vrot.slane %v1986, 1
      %v1988 = vmax.f32 %v1986, %v1987
      %v1989 = vsel %vm959, %v829, -inf
      %v1990 = vrot.slane %v1989, 4
      %v1991 = vmax.f32 %v1989, %v1990
      %v1992 = vrot.slane %v1991, 2
      %v1993 = vmax.f32 %v1991, %v1992
      %v1994 = vrot.slane %v1993, 1
      %v1995 = vmax.f32 %v1993, %v1994
      %v1996 = vsel %vm959, %v676, -inf
      %v1997 = vrot.slane %v1996, 4
      %v1998 = vmax.f32 %v1996, %v1997
      %v1999 = vrot.slane %v1998, 2
      %v2000 = vmax.f32 %v1998, %v1999
      %v2001 = vrot.slane %v2000, 1
      %v2002 = vmax.f32 %v2000, %v2001
      %v2003 = vsel %vm959, %v830, -inf
      %v2004 = vrot.slane %v2003, 4
      %v2005 = vmax.f32 %v2003, %v2004
      %v2006 = vrot.slane %v2005, 2
      %v2007 = vmax.f32 %v2005, %v2006
      %v2008 = vrot.slane %v2007, 1
      %v2009 = vmax.f32 %v2007, %v2008
      %v2010 = vsel %vm959, %v831, -inf
      %v2011 = vrot.slane %v2010, 4
      %v2012 = vmax.f32 %v2010, %v2011
      %v2013 = vrot.slane %v2012, 2
      %v2014 = vmax.f32 %v2012, %v2013
      %v2015 = vrot.slane %v2014, 1
      %v2016 = vmax.f32 %v2014, %v2015
      %v2017 = vsel %vm959, %v832, -inf
      %v2018 = vrot.slane %v2017, 4
      %v2019 = vmax.f32 %v2017, %v2018
      %v2020 = vrot.slane %v2019, 2
      %v2021 = vmax.f32 %v2019, %v2020
      %v2022 = vrot.slane %v2021, 1
      %v2023 = vmax.f32 %v2021, %v2022
      %v2024 = vsel %vm959, %v677, -inf
      %v2025 = vrot.slane %v2024, 4
      %v2026 = vmax.f32 %v2024, %v2025
      %v2027 = vrot.slane %v2026, 2
      %v2028 = vmax.f32 %v2026, %v2027
      %v2029 = vrot.slane %v2028, 1
      %v2030 = vmax.f32 %v2028, %v2029
      %v2031 = vsel %vm959, %v833, -inf
      %v2032 = vrot.slane %v2031, 4
      %v2033 = vmax.f32 %v2031, %v2032
      %v2034 = vrot.slane %v2033, 2
      %v2035 = vmax.f32 %v2033, %v2034
      %v2036 = vrot.slane %v2035, 1
      %v2037 = vmax.f32 %v2035, %v2036
      %v2038 = vsel %vm959, %v834, -inf
      %v2039 = vrot.slane %v2038, 4
      %v2040 = vmax.f32 %v2038, %v2039
      %v2041 = vrot.slane %v2040, 2
      %v2042 = vmax.f32 %v2040, %v2041
      %v2043 = vrot.slane %v2042, 1
      %v2044 = vmax.f32 %v2042, %v2043
      %v2045 = vsel %vm959, %v835, -inf
      %v2046 = vrot.slane %v2045, 4
      %v2047 = vmax.f32 %v2045, %v2046
      %v2048 = vrot.slane %v2047, 2
      %v2049 = vmax.f32 %v2047, %v2048
      %v2050 = vrot.slane %v2049, 1
      %v2051 = vmax.f32 %v2049, %v2050
      %v2052 = vsel %vm959, %v678, -inf
      %v2053 = vrot.slane %v2052, 4
      %v2054 = vmax.f32 %v2052, %v2053
      %v2055 = vrot.slane %v2054, 2
      %v2056 = vmax.f32 %v2054, %v2055
      %v2057 = vrot.slane %v2056, 1
      %v2058 = vmax.f32 %v2056, %v2057
      %v2059 = vsel %vm959, %v836, -inf
      %v2060 = vrot.slane %v2059, 4
      %v2061 = vmax.f32 %v2059, %v2060
      %v2062 = vrot.slane %v2061, 2
      %v2063 = vmax.f32 %v2061, %v2062
      %v2064 = vrot.slane %v2063, 1
      %v2065 = vmax.f32 %v2063, %v2064
      %v2066 = vsel %vm959, %v837, -inf
      %v2067 = vrot.slane %v2066, 4
      %v2068 = vmax.f32 %v2066, %v2067
      %v2069 = vrot.slane %v2068, 2
      %v2070 = vmax.f32 %v2068, %v2069
      %v2071 = vrot.slane %v2070, 1
      %v2072 = vmax.f32 %v2070, %v2071
      %v2073 = vsel %vm959, %v838, -inf
      %v2074 = vrot.slane %v2073, 4
      %v2075 = vmax.f32 %v2073, %v2074
      %v2076 = vrot.slane %v2075, 2
      %v2077 = vmax.f32 %v2075, %v2076
      %v2078 = vrot.slane %v2077, 1
      %v2079 = vmax.f32 %v2077, %v2078
      %v2080 = vmax.f32 %v966, %v1022
      %v2081 = vmax.f32 %v973, %v1029
      %v2082 = vmax.f32 %v980, %v1036
      %v2083 = vmax.f32 %v987, %v1043
      %v2084 = vmax.f32 %v994, %v1050
      %v2085 = vmax.f32 %v1001, %v1057
      %v2086 = vmax.f32 %v1008, %v1064
      %v2087 = vmax.f32 %v1015, %v1071
      %v2088 = vmax.f32 %v1078, %v1134
      %v2089 = vmax.f32 %v1085, %v1141
      %v2090 = vmax.f32 %v1092, %v1148
      %v2091 = vmax.f32 %v1099, %v1155
      %v2092 = vmax.f32 %v1106, %v1162
      %v2093 = vmax.f32 %v1113, %v1169
      %v2094 = vmax.f32 %v1120, %v1176
      %v2095 = vmax.f32 %v1127, %v1183
      %v2096 = vmax.f32 %v1190, %v1246
      %v2097 = vmax.f32 %v1197, %v1253
      %v2098 = vmax.f32 %v1204, %v1260
      %v2099 = vmax.f32 %v1211, %v1267
      %v2100 = vmax.f32 %v1218, %v1274
      %v2101 = vmax.f32 %v1225, %v1281
      %v2102 = vmax.f32 %v1232, %v1288
      %v2103 = vmax.f32 %v1239, %v1295
      %v2104 = vmax.f32 %v1302, %v1358
      %v2105 = vmax.f32 %v1309, %v1365
      %v2106 = vmax.f32 %v1316, %v1372
      %v2107 = vmax.f32 %v1323, %v1379
      %v2108 = vmax.f32 %v1330, %v1386
      %v2109 = vmax.f32 %v1337, %v1393
      %v2110 = vmax.f32 %v1344, %v1400
      %v2111 = vmax.f32 %v1351, %v1407
      %v2112 = vmax.f32 %v1414, %v1470
      %v2113 = vmax.f32 %v1421, %v1477
      %v2114 = vmax.f32 %v1428, %v1484
      %v2115 = vmax.f32 %v1435, %v1491
      %v2116 = vmax.f32 %v1442, %v1498
      %v2117 = vmax.f32 %v1449, %v1505
      %v2118 = vmax.f32 %v1456, %v1512
      %v2119 = vmax.f32 %v1463, %v1519
      %v2120 = vmax.f32 %v1526, %v1582
      %v2121 = vmax.f32 %v1533, %v1589
      %v2122 = vmax.f32 %v1540, %v1596
      %v2123 = vmax.f32 %v1547, %v1603
      %v2124 = vmax.f32 %v1554, %v1610
      %v2125 = vmax.f32 %v1561, %v1617
      %v2126 = vmax.f32 %v1568, %v1624
      %v2127 = vmax.f32 %v1575, %v1631
      %v2128 = vmax.f32 %v1638, %v1694
      %v2129 = vmax.f32 %v1645, %v1701
      %v2130 = vmax.f32 %v1652, %v1708
      %v2131 = vmax.f32 %v1659, %v1715
      %v2132 = vmax.f32 %v1666, %v1722
      %v2133 = vmax.f32 %v1673, %v1729
      %v2134 = vmax.f32 %v1680, %v1736
      %v2135 = vmax.f32 %v1687, %v1743
      %v2136 = vmax.f32 %v1750, %v1806
      %v2137 = vmax.f32 %v1757, %v1813
      %v2138 = vmax.f32 %v1764, %v1820
      %v2139 = vmax.f32 %v1771, %v1827
      %v2140 = vmax.f32 %v1778, %v1834
      %v2141 = vmax.f32 %v1785, %v1841
      %v2142 = vmax.f32 %v1792, %v1848
      %v2143 = vmax.f32 %v1799, %v1855
      %v2144 = vmax.f32 %v1862, %v1918
      %v2145 = vmax.f32 %v1869, %v1925
      %v2146 = vmax.f32 %v1876, %v1932
      %v2147 = vmax.f32 %v1883, %v1939
      %v2148 = vmax.f32 %v1890, %v1946
      %v2149 = vmax.f32 %v1897, %v1953
      %v2150 = vmax.f32 %v1904, %v1960
      %v2151 = vmax.f32 %v1911, %v1967
      %v2152 = vmax.f32 %v1974, %v2030
      %v2153 = vmax.f32 %v1981, %v2037
      %v2154 = vmax.f32 %v1988, %v2044
      %v2155 = vmax.f32 %v1995, %v2051
      %v2156 = vmax.f32 %v2002, %v2058
      %v2157 = vmax.f32 %v2009, %v2065
      %v2158 = vmax.f32 %v2016, %v2072
      %v2159 = vmax.f32 %v2023, %v2079
      %v2160 = vpack.c.bf16 %v2080, %v2080
      %v2161 = vpack.c.bf16 %v2081, %v2081
      %v2162 = vpack.c.bf16 %v2082, %v2082
      %v2163 = vpack.c.bf16 %v2083, %v2083
      %v2164 = vpack.c.bf16 %v2084, %v2084
      %v2165 = vpack.c.bf16 %v2085, %v2085
      %v2166 = vpack.c.bf16 %v2086, %v2086
      %v2167 = vpack.c.bf16 %v2087, %v2087
      %v2168 = vpack.c.bf16 %v2088, %v2088
      %v2169 = vpack.c.bf16 %v2089, %v2089
      %v2170 = vpack.c.bf16 %v2090, %v2090
      %v2171 = vpack.c.bf16 %v2091, %v2091
      %v2172 = vpack.c.bf16 %v2092, %v2092
      %v2173 = vpack.c.bf16 %v2093, %v2093
      %v2174 = vpack.c.bf16 %v2094, %v2094
      %v2175 = vpack.c.bf16 %v2095, %v2095
      %v2176 = vpack.c.bf16 %v2096, %v2096
      %v2177 = vpack.c.bf16 %v2097, %v2097
      %v2178 = vpack.c.bf16 %v2098, %v2098
      %v2179 = vpack.c.bf16 %v2099, %v2099
      %v2180 = vpack.c.bf16 %v2100, %v2100
      %v2181 = vpack.c.bf16 %v2101, %v2101
      %v2182 = vpack.c.bf16 %v2102, %v2102
      %v2183 = vpack.c.bf16 %v2103, %v2103
      %v2184 = vpack.c.bf16 %v2104, %v2104
      %v2185 = vpack.c.bf16 %v2105, %v2105
      %v2186 = vpack.c.bf16 %v2106, %v2106
      %v2187 = vpack.c.bf16 %v2107, %v2107
      %v2188 = vpack.c.bf16 %v2108, %v2108
      %v2189 = vpack.c.bf16 %v2109, %v2109
      %v2190 = vpack.c.bf16 %v2110, %v2110
      %v2191 = vpack.c.bf16 %v2111, %v2111
      %v2192 = vpack.c.bf16 %v2112, %v2112
      %v2193 = vpack.c.bf16 %v2113, %v2113
      %v2194 = vpack.c.bf16 %v2114, %v2114
      %v2195 = vpack.c.bf16 %v2115, %v2115
      %v2196 = vpack.c.bf16 %v2116, %v2116
      %v2197 = vpack.c.bf16 %v2117, %v2117
      %v2198 = vpack.c.bf16 %v2118, %v2118
      %v2199 = vpack.c.bf16 %v2119, %v2119
      %v2200 = vpack.c.bf16 %v2120, %v2120
      %v2201 = vpack.c.bf16 %v2121, %v2121
      %v2202 = vpack.c.bf16 %v2122, %v2122
      %v2203 = vpack.c.bf16 %v2123, %v2123
      %v2204 = vpack.c.bf16 %v2124, %v2124
      %v2205 = vpack.c.bf16 %v2125, %v2125
      %v2206 = vpack.c.bf16 %v2126, %v2126
      %v2207 = vpack.c.bf16 %v2127, %v2127
      %v2208 = vpack.c.bf16 %v2128, %v2128
      %v2209 = vpack.c.bf16 %v2129, %v2129
      %v2210 = vpack.c.bf16 %v2130, %v2130
      %v2211 = vpack.c.bf16 %v2131, %v2131
      %v2212 = vpack.c.bf16 %v2132, %v2132
      %v2213 = vpack.c.bf16 %v2133, %v2133
      %v2214 = vpack.c.bf16 %v2134, %v2134
      %v2215 = vpack.c.bf16 %v2135, %v2135
      %v2216 = vpack.c.bf16 %v2136, %v2136
      %v2217 = vpack.c.bf16 %v2137, %v2137
      %v2218 = vpack.c.bf16 %v2138, %v2138
      %v2219 = vpack.c.bf16 %v2139, %v2139
      %v2220 = vpack.c.bf16 %v2140, %v2140
      %v2221 = vpack.c.bf16 %v2141, %v2141
      %v2222 = vpack.c.bf16 %v2142, %v2142
      %v2223 = vpack.c.bf16 %v2143, %v2143
      %v2224 = vpack.c.bf16 %v2144, %v2144
      %v2225 = vpack.c.bf16 %v2145, %v2145
      %v2226 = vpack.c.bf16 %v2146, %v2146
      %v2227 = vpack.c.bf16 %v2147, %v2147
      %v2228 = vpack.c.bf16 %v2148, %v2148
      %v2229 = vpack.c.bf16 %v2149, %v2149
      %v2230 = vpack.c.bf16 %v2150, %v2150
      %v2231 = vpack.c.bf16 %v2151, %v2151
      %v2232 = vpack.c.bf16 %v2152, %v2152
      %v2233 = vpack.c.bf16 %v2153, %v2153
      %v2234 = vpack.c.bf16 %v2154, %v2154
      %v2235 = vpack.c.bf16 %v2155, %v2155
      %v2236 = vpack.c.bf16 %v2156, %v2156
      %v2237 = vpack.c.bf16 %v2157, %v2157
      %v2238 = vpack.c.bf16 %v2158, %v2158
      %v2239 = vpack.c.bf16 %v2159, %v2159
      %v2320 = vunpack.c.l.b16 %v2160
      %v2321 = vunpack.c.l.b16 %v2161
      %v2322 = vunpack.c.l.b16 %v2162
      %v2323 = vunpack.c.l.b16 %v2163
      %v2324 = vunpack.c.l.b16 %v2164
      %v2325 = vunpack.c.l.b16 %v2165
      %v2326 = vunpack.c.l.b16 %v2166
      %v2327 = vunpack.c.l.b16 %v2167
      %v2328 = vunpack.c.l.b16 %v2168
      %v2329 = vunpack.c.l.b16 %v2169
      %v2330 = vunpack.c.l.b16 %v2170
      %v2331 = vunpack.c.l.b16 %v2171
      %v2332 = vunpack.c.l.b16 %v2172
      %v2333 = vunpack.c.l.b16 %v2173
      %v2334 = vunpack.c.l.b16 %v2174
      %v2335 = vunpack.c.l.b16 %v2175
      %v2336 = vunpack.c.l.b16 %v2176
      %v2337 = vunpack.c.l.b16 %v2177
      %v2338 = vunpack.c.l.b16 %v2178
      %v2339 = vunpack.c.l.b16 %v2179
      %v2340 = vunpack.c.l.b16 %v2180
      %v2341 = vunpack.c.l.b16 %v2181
      %v2342 = vunpack.c.l.b16 %v2182
      %v2343 = vunpack.c.l.b16 %v2183
      %v2344 = vunpack.c.l.b16 %v2184
      %v2345 = vunpack.c.l.b16 %v2185
      %v2346 = vunpack.c.l.b16 %v2186
      %v2347 = vunpack.c.l.b16 %v2187
      %v2348 = vunpack.c.l.b16 %v2188
      %v2349 = vunpack.c.l.b16 %v2189
      %v2350 = vunpack.c.l.b16 %v2190
      %v2351 = vunpack.c.l.b16 %v2191
      %v2352 = vunpack.c.l.b16 %v2192
      %v2353 = vunpack.c.l.b16 %v2193
      %v2354 = vunpack.c.l.b16 %v2194
      %v2355 = vunpack.c.l.b16 %v2195
      %v2356 = vunpack.c.l.b16 %v2196
      %v2357 = vunpack.c.l.b16 %v2197
      %v2358 = vunpack.c.l.b16 %v2198
      %v2359 = vunpack.c.l.b16 %v2199
      %v2360 = vunpack.c.l.b16 %v2200
      %v2361 = vunpack.c.l.b16 %v2201
      %v2362 = vunpack.c.l.b16 %v2202
      %v2363 = vunpack.c.l.b16 %v2203
      %v2364 = vunpack.c.l.b16 %v2204
      %v2365 = vunpack.c.l.b16 %v2205
      %v2366 = vunpack.c.l.b16 %v2206
      %v2367 = vunpack.c.l.b16 %v2207
      %v2368 = vunpack.c.l.b16 %v2208
      %v2369 = vunpack.c.l.b16 %v2209
      %v2370 = vunpack.c.l.b16 %v2210
      %v2371 = vunpack.c.l.b16 %v2211
      %v2372 = vunpack.c.l.b16 %v2212
      %v2373 = vunpack.c.l.b16 %v2213
      %v2374 = vunpack.c.l.b16 %v2214
      %v2375 = vunpack.c.l.b16 %v2215
      %v2376 = vunpack.c.l.b16 %v2216
      %v2377 = vunpack.c.l.b16 %v2217
      %v2378 = vunpack.c.l.b16 %v2218
      %v2379 = vunpack.c.l.b16 %v2219
      %v2380 = vunpack.c.l.b16 %v2220
      %v2381 = vunpack.c.l.b16 %v2221
      %v2382 = vunpack.c.l.b16 %v2222
      %v2383 = vunpack.c.l.b16 %v2223
      %v2384 = vunpack.c.l.b16 %v2224
      %v2385 = vunpack.c.l.b16 %v2225
      %v2386 = vunpack.c.l.b16 %v2226
      %v2387 = vunpack.c.l.b16 %v2227
      %v2388 = vunpack.c.l.b16 %v2228
      %v2389 = vunpack.c.l.b16 %v2229
      %v2390 = vunpack.c.l.b16 %v2230
      %v2391 = vunpack.c.l.b16 %v2231
      %v2392 = vunpack.c.l.b16 %v2232
      %v2393 = vunpack.c.l.b16 %v2233
      %v2394 = vunpack.c.l.b16 %v2234
      %v2395 = vunpack.c.l.b16 %v2235
      %v2396 = vunpack.c.l.b16 %v2236
      %v2397 = vunpack.c.l.b16 %v2237
      %v2398 = vunpack.c.l.b16 %v2238
      %v2399 = vunpack.c.l.b16 %v2239
      %vm2400 = vcmask 1042434
      %v2401 = vsel %vm2400, %v2321, %v2320
      %vm2402 = vcmask 1043459
      %v2403 = vsel %vm2402, %v2322, %v2401
      %vm2404 = vcmask 1044484
      %v2405 = vsel %vm2404, %v2323, %v2403
      %vm2406 = vcmask 1045509
      %v2407 = vsel %vm2406, %v2324, %v2405
      %vm2408 = vcmask 1046534
      %v2409 = vsel %vm2408, %v2325, %v2407
      %vm2410 = vcmask 1047559
      %v2411 = vsel %vm2410, %v2326, %v2409
      %v2412 = vsel %vm2400, %v2329, %v2328
      %v2413 = vsel %vm2402, %v2330, %v2412
      %v2414 = vsel %vm2404, %v2331, %v2413
      %v2415 = vsel %vm2406, %v2332, %v2414
      %v2416 = vsel %vm2408, %v2333, %v2415
      %v2417 = vsel %vm2410, %v2334, %v2416
      %v2418 = vsel %vm2400, %v2337, %v2336
      %v2419 = vsel %vm2402, %v2338, %v2418
      %v2420 = vsel %vm2404, %v2339, %v2419
      %v2421 = vsel %vm2406, %v2340, %v2420
      %v2422 = vsel %vm2408, %v2341, %v2421
      %v2423 = vsel %vm2410, %v2342, %v2422
      %v2424 = vsel %vm2400, %v2345, %v2344
      %v2425 = vsel %vm2402, %v2346, %v2424
      %v2426 = vsel %vm2404, %v2347, %v2425
      %v2427 = vsel %vm2406, %v2348, %v2426
      %v2428 = vsel %vm2408, %v2349, %v2427
      %v2429 = vsel %vm2410, %v2350, %v2428
      %v2430 = vsel %vm2400, %v2353, %v2352
      %v2431 = vsel %vm2402, %v2354, %v2430
      %v2432 = vsel %vm2404, %v2355, %v2431
      %v2433 = vsel %vm2406, %v2356, %v2432
      %v2434 = vsel %vm2408, %v2357, %v2433
      %v2435 = vsel %vm2410, %v2358, %v2434
      %v2436 = vsel %vm2400, %v2361, %v2360
      %v2437 = vsel %vm2402, %v2362, %v2436
      %v2438 = vsel %vm2404, %v2363, %v2437
      %v2439 = vsel %vm2406, %v2364, %v2438
      %v2440 = vsel %vm2408, %v2365, %v2439
      %v2441 = vsel %vm2410, %v2366, %v2440
      %v2442 = vsel %vm2400, %v2369, %v2368
      %v2443 = vsel %vm2402, %v2370, %v2442
      %v2444 = vsel %vm2404, %v2371, %v2443
      %v2445 = vsel %vm2406, %v2372, %v2444
      %v2446 = vsel %vm2408, %v2373, %v2445
      %v2447 = vsel %vm2410, %v2374, %v2446
      %v2448 = vsel %vm2400, %v2377, %v2376
      %v2449 = vsel %vm2402, %v2378, %v2448
      %v2450 = vsel %vm2404, %v2379, %v2449
      %v2451 = vsel %vm2406, %v2380, %v2450
      %v2452 = vsel %vm2408, %v2381, %v2451
      %v2453 = vsel %vm2410, %v2382, %v2452
      %v2454 = vsel %vm2400, %v2385, %v2384
      %v2455 = vsel %vm2402, %v2386, %v2454
      %v2456 = vsel %vm2404, %v2387, %v2455
      %v2457 = vsel %vm2406, %v2388, %v2456
      %v2458 = vsel %vm2408, %v2389, %v2457
      %v2459 = vsel %vm2410, %v2390, %v2458
      %v2460 = vsel %vm2400, %v2393, %v2392
      %v2461 = vsel %vm2402, %v2394, %v2460
      %v2462 = vsel %vm2404, %v2395, %v2461
      %v2463 = vsel %vm2406, %v2396, %v2462
      %v2464 = vsel %vm2408, %v2397, %v2463
      %v2465 = vsel %vm2410, %v2398, %v2464
      %v2466 = vpack.c.b16 %v2411, %v2411
      %v2467 = vpack.c.b16 %v2327, %v2327
      %v2468 = vpack.c.b16 %v2417, %v2417
      %v2469 = vpack.c.b16 %v2335, %v2335
      %v2470 = vpack.c.b16 %v2423, %v2423
      %v2471 = vpack.c.b16 %v2343, %v2343
      %v2472 = vpack.c.b16 %v2429, %v2429
      %v2473 = vpack.c.b16 %v2351, %v2351
      %v2474 = vpack.c.b16 %v2435, %v2435
      %v2475 = vpack.c.b16 %v2359, %v2359
      %v2476 = vpack.c.b16 %v2441, %v2441
      %v2477 = vpack.c.b16 %v2367, %v2367
      %v2478 = vpack.c.b16 %v2447, %v2447
      %v2479 = vpack.c.b16 %v2375, %v2375
      %v2480 = vpack.c.b16 %v2453, %v2453
      %v2481 = vpack.c.b16 %v2383, %v2383
      %v2482 = vpack.c.b16 %v2459, %v2459
      %v2483 = vpack.c.b16 %v2391, %v2391
      %v2484 = vpack.c.b16 %v2465, %v2465
      %v2485 = vpack.c.b16 %v2399, %v2399
      %vm2506 = vcmask 1043456
      %vm2507 = vsmask.f32 7938
      %vm2508 = vmand %vm2506, %vm2507
      %v2509 = vld [vmem:[#allocation2] sm:$0xf]
      %v2510 = vsel %vm2508, %v2466, %v2509
      %2511 = vst [vmem:[#allocation2] sm:$0xf] %v2510
      %vm2512 = vcmask 1040384
      %vm2513 = vsmask.f32 256
      %vm2514 = vmand %vm2512, %vm2513
      %v2515 = vld [vmem:[#allocation2 + $0x4] sm:$0x1]
      %v2516 = vsel %vm2514, %v2467, %v2515
      %2517 = vst [vmem:[#allocation2 + $0x4] sm:$0x1] %v2516
      %v2518 = vld [vmem:[#allocation2 + $0x8] sm:$0xf]
      %v2519 = vsel %vm2508, %v2468, %v2518
      %2520 = vst [vmem:[#allocation2 + $0x8] sm:$0xf] %v2519
      %v2521 = vld [vmem:[#allocation2 + $0xc] sm:$0x1]
      %v2522 = vsel %vm2514, %v2469, %v2521
      %2523 = vst [vmem:[#allocation2 + $0xc] sm:$0x1] %v2522
      %v2524 = vld [vmem:[#allocation2 + $0x10] sm:$0xf]
      %v2525 = vsel %vm2508, %v2470, %v2524
      %2526 = vst [vmem:[#allocation2 + $0x10] sm:$0xf] %v2525
      %v2527 = vld [vmem:[#allocation2 + $0x14] sm:$0x1]
      %v2528 = vsel %vm2514, %v2471, %v2527
      %2529 = vst [vmem:[#allocation2 + $0x14] sm:$0x1] %v2528
      %v2530 = vld [vmem:[#allocation2 + $0x18] sm:$0xf]
      %v2531 = vsel %vm2508, %v2472, %v2530
      %2532 = vst [vmem:[#allocation2 + $0x18] sm:$0xf] %v2531
      %v2533 = vld [vmem:[#allocation2 + $0x1c] sm:$0x1]
      %v2534 = vsel %vm2514, %v2473, %v2533
      %2535 = vst [vmem:[#allocation2 + $0x1c] sm:$0x1] %v2534
      %v2536 = vld [vmem:[#allocation2 + $0x20] sm:$0xf]
      %v2537 = vsel %vm2508, %v2474, %v2536
      %2538 = vst [vmem:[#allocation2 + $0x20] sm:$0xf] %v2537
      %v2539 = vld [vmem:[#allocation2 + $0x24] sm:$0x1]
      %v2540 = vsel %vm2514, %v2475, %v2539
      %2541 = vst [vmem:[#allocation2 + $0x24] sm:$0x1] %v2540
      %v2542 = vld [vmem:[#allocation2 + $0x28] sm:$0xf]
      %v2543 = vsel %vm2508, %v2476, %v2542
      %2544 = vst [vmem:[#allocation2 + $0x28] sm:$0xf] %v2543
      %v2545 = vld [vmem:[#allocation2 + $0x2c] sm:$0x1]
      %v2546 = vsel %vm2514, %v2477, %v2545
      %2547 = vst [vmem:[#allocation2 + $0x2c] sm:$0x1] %v2546
      %v2548 = vld [vmem:[#allocation2 + $0x30] sm:$0xf]
      %v2549 = vsel %vm2508, %v2478, %v2548
      %2550 = vst [vmem:[#allocation2 + $0x30] sm:$0xf] %v2549
      %v2551 = vld [vmem:[#allocation2 + $0x34] sm:$0x1]
      %v2552 = vsel %vm2514, %v2479, %v2551
      %2553 = vst [vmem:[#allocation2 + $0x34] sm:$0x1] %v2552
      %v2554 = vld [vmem:[#allocation2 + $0x38] sm:$0xf]
      %v2555 = vsel %vm2508, %v2480, %v2554
      %2556 = vst [vmem:[#allocation2 + $0x38] sm:$0xf] %v2555
      %v2557 = vld [vmem:[#allocation2 + $0x3c] sm:$0x1]
      %v2558 = vsel %vm2514, %v2481, %v2557
      %2559 = vst [vmem:[#allocation2 + $0x3c] sm:$0x1] %v2558
      %v2560 = vld [vmem:[#allocation2 + $0x40] sm:$0xf]
      %v2561 = vsel %vm2508, %v2482, %v2560
      %2562 = vst [vmem:[#allocation2 + $0x40] sm:$0xf] %v2561
      %v2563 = vld [vmem:[#allocation2 + $0x44] sm:$0x1]
      %v2564 = vsel %vm2514, %v2483, %v2563
      %2565 = vst [vmem:[#allocation2 + $0x44] sm:$0x1] %v2564
      %v2566 = vld [vmem:[#allocation2 + $0x48] sm:$0xf]
      %v2567 = vsel %vm2508, %v2484, %v2566
      %2568 = vst [vmem:[#allocation2 + $0x48] sm:$0xf] %v2567
      %v2569 = vld [vmem:[#allocation2 + $0x4c] sm:$0x1]
      %v2570 = vsel %vm2514, %v2485, %v2569
      %2571 = vst [vmem:[#allocation2 + $0x4c] sm:$0x1] %v2570
      %v2572 = vld [vmem:[#allocation2] sm:$0x1]
      %v2573 = vsel %vm2514, 0, %v2572
      %2574 = vst [vmem:[#allocation2] sm:$0x1] %v2573
      %v2575 = vld [vmem:[#allocation2 + $0x8] sm:$0x1]
      %v2576 = vsel %vm2514, 0, %v2575
      %2577 = vst [vmem:[#allocation2 + $0x8] sm:$0x1] %v2576
      %v2578 = vld [vmem:[#allocation2 + $0x10] sm:$0x1]
      %v2579 = vsel %vm2514, 0, %v2578
      %2580 = vst [vmem:[#allocation2 + $0x10] sm:$0x1] %v2579
      %v2581 = vld [vmem:[#allocation2 + $0x18] sm:$0x1]
      %v2582 = vsel %vm2514, 0, %v2581
      %2583 = vst [vmem:[#allocation2 + $0x18] sm:$0x1] %v2582
      %v2584 = vld [vmem:[#allocation2 + $0x20] sm:$0x1]
      %v2585 = vsel %vm2514, 0, %v2584
      %2586 = vst [vmem:[#allocation2 + $0x20] sm:$0x1] %v2585
      %v2587 = vld [vmem:[#allocation2 + $0x28] sm:$0x1]
      %v2588 = vsel %vm2514, 0, %v2587
      %2589 = vst [vmem:[#allocation2 + $0x28] sm:$0x1] %v2588
      %v2590 = vld [vmem:[#allocation2 + $0x30] sm:$0x1]
      %v2591 = vsel %vm2514, 0, %v2590
      %2592 = vst [vmem:[#allocation2 + $0x30] sm:$0x1] %v2591
      %v2593 = vld [vmem:[#allocation2 + $0x38] sm:$0x1]
      %v2594 = vsel %vm2514, 0, %v2593
      %2595 = vst [vmem:[#allocation2 + $0x38] sm:$0x1] %v2594
      %v2596 = vld [vmem:[#allocation2 + $0x40] sm:$0x1]
      %v2597 = vsel %vm2514, 0, %v2596
      %2598 = vst [vmem:[#allocation2 + $0x40] sm:$0x1] %v2597
      %v2599 = vld [vmem:[#allocation2 + $0x48] sm:$0x1]
      %v2600 = vsel %vm2514, 0, %v2599
      %2601 = vst [vmem:[#allocation2 + $0x48] sm:$0x1] %v2600
      %vm2602 = vmand %vm2512, %vm2507
      %v2603 = vld [vmem:[#allocation2 + $0x4] sm:$0x1]
      %v2604 = vsel %vm2602, 0, %v2603
      %2605 = vst [vmem:[#allocation2 + $0x4] sm:$0x1] %v2604
      %v2606 = vld [vmem:[#allocation2 + $0xc] sm:$0x1]
      %v2607 = vsel %vm2602, 0, %v2606
      %2608 = vst [vmem:[#allocation2 + $0xc] sm:$0x1] %v2607
      %v2609 = vld [vmem:[#allocation2 + $0x14] sm:$0x1]
      %v2610 = vsel %vm2602, 0, %v2609
      %2611 = vst [vmem:[#allocation2 + $0x14] sm:$0x1] %v2610
      %v2612 = vld [vmem:[#allocation2 + $0x1c] sm:$0x1]
      %v2613 = vsel %vm2602, 0, %v2612
      %2614 = vst [vmem:[#allocation2 + $0x1c] sm:$0x1] %v2613
      %v2615 = vld [vmem:[#allocation2 + $0x24] sm:$0x1]
      %v2616 = vsel %vm2602, 0, %v2615
      %2617 = vst [vmem:[#allocation2 + $0x24] sm:$0x1] %v2616
      %v2618 = vld [vmem:[#allocation2 + $0x2c] sm:$0x1]
      %v2619 = vsel %vm2602, 0, %v2618
      %2620 = vst [vmem:[#allocation2 + $0x2c] sm:$0x1] %v2619
      %v2621 = vld [vmem:[#allocation2 + $0x34] sm:$0x1]
      %v2622 = vsel %vm2602, 0, %v2621
      %2623 = vst [vmem:[#allocation2 + $0x34] sm:$0x1] %v2622
      %v2624 = vld [vmem:[#allocation2 + $0x3c] sm:$0x1]
      %v2625 = vsel %vm2602, 0, %v2624
      %2626 = vst [vmem:[#allocation2 + $0x3c] sm:$0x1] %v2625
      %v2627 = vld [vmem:[#allocation2 + $0x44] sm:$0x1]
      %v2628 = vsel %vm2602, 0, %v2627
      %2629 = vst [vmem:[#allocation2 + $0x44] sm:$0x1] %v2628
      %v2630 = vld [vmem:[#allocation2 + $0x4c] sm:$0x1]
      %v2631 = vsel %vm2602, 0, %v2630
      %2632 = vst [vmem:[#allocation2 + $0x4c] sm:$0x1] %v2631
      %p2633 = scmp.eq.s32.totalorder %s21, 0
      // Predicated region
      $region41: #{_lambda_.1} parent=39 // pred_check
        %p2634 = pneg %p2633
      $region42: #{_lambda_.1} parent=39 // pred_check_branch
        %2636 = sbr.rel (%p2634) target = $region44
      $region43: #{_lambda_.1} parent=39 // pred_region
        %2637 = vst [vmem:[#allocation2] sm:$0xf] 0
        %2638 = vst [vmem:[#allocation2 + $0x4] sm:$0x1] 0
        %s2639 = scalar_lea.vmem [#allocation2], 72
        %2640 = vst [vmem:[%s2639] sm:$0xf] 0
        %2641 = vst [vmem:[%s2639 + $0x4] sm:$0x1] 0
      $region44: #{_lambda_.1} parent=39 // pred_fallthru
        _
      %v2642 = vld [vmem:[#allocation2] sm:$0xf]
      %v2643 = vld [vmem:[#allocation2 + $0x8] sm:$0xf]
      %v2644 = vld [vmem:[#allocation2 + $0x10] sm:$0xf]
      %v2645 = vld [vmem:[#allocation2 + $0x18] sm:$0xf]
      %v2646 = vld [vmem:[#allocation2 + $0x20] sm:$0xf]
      %v2647 = vld [vmem:[#allocation2 + $0x28] sm:$0xf]
      %v2648 = vld [vmem:[#allocation2 + $0x30] sm:$0xf]
      %v2649 = vld [vmem:[#allocation2 + $0x38] sm:$0xf]
      %v2650 = vld [vmem:[#allocation2 + $0x4] sm:$0x1]
      %v2651 = vld [vmem:[#allocation2 + $0xc] sm:$0x1]
      %v2652 = vld [vmem:[#allocation2 + $0x14] sm:$0x1]
      %v2653 = vld [vmem:[#allocation2 + $0x1c] sm:$0x1]
      %v2654 = vld [vmem:[#allocation2 + $0x24] sm:$0x1]
      %v2655 = vld [vmem:[#allocation2 + $0x2c] sm:$0x1]
      %v2656 = vld [vmem:[#allocation2 + $0x34] sm:$0x1]
      %v2657 = vld [vmem:[#allocation2 + $0x3c] sm:$0x1]
      %v2658 = vld [vmem:[#allocation2] sm:$0xe]
      %v2659 = vld [vmem:[#allocation2 + $0x8] sm:$0xe]
      %v2660 = vld [vmem:[#allocation2 + $0x10] sm:$0xe]
      %v2661 = vld [vmem:[#allocation2 + $0x18] sm:$0xe]
      %v2662 = vld [vmem:[#allocation2 + $0x20] sm:$0xe]
      %v2663 = vld [vmem:[#allocation2 + $0x28] sm:$0xe]
      %v2664 = vld [vmem:[#allocation2 + $0x30] sm:$0xe]
      %v2665 = vld [vmem:[#allocation2 + $0x38] sm:$0xe]
      %v2682 = vunpack.c.l.b16 %v2642
      %v2683 = vunpack.c.l.b16 %v2650
      %v2684 = vunpack.c.l.b16 %v2643
      %v2685 = vunpack.c.l.b16 %v2651
      %v2686 = vunpack.c.l.b16 %v2644
      %v2687 = vunpack.c.l.b16 %v2652
      %v2688 = vunpack.c.l.b16 %v2645
      %v2689 = vunpack.c.l.b16 %v2653
      %v2690 = vunpack.c.l.b16 %v2646
      %v2691 = vunpack.c.l.b16 %v2654
      %v2692 = vunpack.c.l.b16 %v2647
      %v2693 = vunpack.c.l.b16 %v2655
      %v2694 = vunpack.c.l.b16 %v2648
      %v2695 = vunpack.c.l.b16 %v2656
      %v2696 = vunpack.c.l.b16 %v2649
      %v2697 = vunpack.c.l.b16 %v2657
      %v2698 = vpack.c.b16 %v2683, %v2682
      %v2699 = vpack.c.b16 %v2685, %v2684
      %v2700 = vpack.c.b16 %v2687, %v2686
      %v2701 = vpack.c.b16 %v2689, %v2688
      %v2702 = vpack.c.b16 %v2691, %v2690
      %v2703 = vpack.c.b16 %v2693, %v2692
      %v2704 = vpack.c.b16 %v2695, %v2694
      %v2705 = vpack.c.b16 %v2697, %v2696
      %v2707 = vshrl.u32 %v2698, 16
      %v2709 = vshll.u32 %v2698, 16
      %v2711 = vrot.slane %v2709, 1
      %v2712 = vor.u32 %v2707, %v2711
      %v2714 = vshrl.u32 %v2699, 16
      %v2716 = vshll.u32 %v2699, 16
      %v2718 = vrot.slane %v2716, 1
      %v2719 = vor.u32 %v2714, %v2718
      %v2721 = vshrl.u32 %v2700, 16
      %v2723 = vshll.u32 %v2700, 16
      %v2725 = vrot.slane %v2723, 1
      %v2726 = vor.u32 %v2721, %v2725
      %v2728 = vshrl.u32 %v2701, 16
      %v2730 = vshll.u32 %v2701, 16
      %v2732 = vrot.slane %v2730, 1
      %v2733 = vor.u32 %v2728, %v2732
      %v2735 = vshrl.u32 %v2702, 16
      %v2737 = vshll.u32 %v2702, 16
      %v2739 = vrot.slane %v2737, 1
      %v2740 = vor.u32 %v2735, %v2739
      %v2742 = vshrl.u32 %v2703, 16
      %v2744 = vshll.u32 %v2703, 16
      %v2746 = vrot.slane %v2744, 1
      %v2747 = vor.u32 %v2742, %v2746
      %v2749 = vshrl.u32 %v2704, 16
      %v2751 = vshll.u32 %v2704, 16
      %v2753 = vrot.slane %v2751, 1
      %v2754 = vor.u32 %v2749, %v2753
      %v2756 = vshrl.u32 %v2705, 16
      %v2758 = vshll.u32 %v2705, 16
      %v2760 = vrot.slane %v2758, 1
      %v2761 = vor.u32 %v2756, %v2760
      %v2770 = vunpack.c.l.b16 %v2658
      %v2771 = vunpack.c.l.b16 %v2659
      %v2772 = vunpack.c.l.b16 %v2660
      %v2773 = vunpack.c.l.b16 %v2661
      %v2774 = vunpack.c.l.b16 %v2662
      %v2775 = vunpack.c.l.b16 %v2663
      %v2776 = vunpack.c.l.b16 %v2664
      %v2777 = vunpack.c.l.b16 %v2665
      %v2778 = vpack.c.b16 %v2683, %v2770
      %v2779 = vpack.c.b16 %v2685, %v2771
      %v2780 = vpack.c.b16 %v2687, %v2772
      %v2781 = vpack.c.b16 %v2689, %v2773
      %v2782 = vpack.c.b16 %v2691, %v2774
      %v2783 = vpack.c.b16 %v2693, %v2775
      %v2784 = vpack.c.b16 %v2695, %v2776
      %v2785 = vpack.c.b16 %v2697, %v2777
      %v2786 = vrot.slane %v2778, 1
      %v2787 = vrot.slane %v2779, 1
      %v2788 = vrot.slane %v2780, 1
      %v2789 = vrot.slane %v2781, 1
      %v2790 = vrot.slane %v2782, 1
      %v2791 = vrot.slane %v2783, 1
      %v2792 = vrot.slane %v2784, 1
      %v2793 = vrot.slane %v2785, 1
      %v2794 = vunpack.c.l.b16 %v2712
      %v2795 = vunpack.c.l.b16 %v2786
      %v2796 = vunpack.c.l.b16 %v2719
      %v2797 = vunpack.c.l.b16 %v2787
      %v2798 = vunpack.c.l.b16 %v2726
      %v2799 = vunpack.c.l.b16 %v2788
      %v2800 = vunpack.c.l.b16 %v2733
      %v2801 = vunpack.c.l.b16 %v2789
      %v2802 = vunpack.c.l.b16 %v2740
      %v2803 = vunpack.c.l.b16 %v2790
      %v2804 = vunpack.c.l.b16 %v2747
      %v2805 = vunpack.c.l.b16 %v2791
      %v2806 = vunpack.c.l.b16 %v2754
      %v2807 = vunpack.c.l.b16 %v2792
      %v2808 = vunpack.c.l.b16 %v2761
      %v2809 = vunpack.c.l.b16 %v2793
      %v2810 = vld [vmem:[%s3] sm:$0xf]
      %v2811 = vld [vmem:[%s3 + $0x4] sm:$0xf]
      %v2812 = vld [vmem:[%s3 + $0x8] sm:$0xf]
      %v2813 = vld [vmem:[%s3 + $0xc] sm:$0xf]
      %v2814 = vld [vmem:[%s3 + $0x10] sm:$0xf]
      %v2815 = vld [vmem:[%s3 + $0x14] sm:$0xf]
      %v2816 = vld [vmem:[%s3 + $0x18] sm:$0xf]
      %v2817 = vld [vmem:[%s3 + $0x1c] sm:$0xf]
      %v2818 = vld [vmem:[%s3 + $0x20] sm:$0xf]
      %v2819 = vld [vmem:[%s3 + $0x24] sm:$0xf]
      %v2820 = vld [vmem:[%s3 + $0x28] sm:$0xf]
      %v2821 = vld [vmem:[%s3 + $0x2c] sm:$0xf]
      %v2822 = vld [vmem:[%s3 + $0x30] sm:$0xf]
      %v2823 = vld [vmem:[%s3 + $0x34] sm:$0xf]
      %v2824 = vld [vmem:[%s3 + $0x38] sm:$0xf]
      %v2825 = vld [vmem:[%s3 + $0x3c] sm:$0xf]
      %v2826 = vld [vmem:[%s3 + $0x40] sm:$0xf]
      %v2827 = vld [vmem:[%s3 + $0x44] sm:$0xf]
      %v2828 = vld [vmem:[%s3 + $0x48] sm:$0xf]
      %v2829 = vld [vmem:[%s3 + $0x4c] sm:$0xf]
      %v2830 = vld [vmem:[%s3 + $0x50] sm:$0xf]
      %v2831 = vld [vmem:[%s3 + $0x54] sm:$0xf]
      %v2832 = vld [vmem:[%s3 + $0x58] sm:$0xf]
      %v2833 = vld [vmem:[%s3 + $0x5c] sm:$0xf]
      %v2834 = vld [vmem:[%s3 + $0x60] sm:$0xf]
      %v2835 = vld [vmem:[%s3 + $0x64] sm:$0xf]
      %v2836 = vld [vmem:[%s3 + $0x68] sm:$0xf]
      %v2837 = vld [vmem:[%s3 + $0x6c] sm:$0xf]
      %v2838 = vld [vmem:[%s3 + $0x70] sm:$0xf]
      %v2839 = vld [vmem:[%s3 + $0x74] sm:$0xf]
      %v2840 = vld [vmem:[%s3 + $0x78] sm:$0xf]
      %v2841 = vld [vmem:[%s3 + $0x7c] sm:$0xf]
      %v2842 = vld [vmem:[%s3 + $0x80] sm:$0xf]
      %v2843 = vld [vmem:[%s3 + $0x84] sm:$0xf]
      %v2844 = vld [vmem:[%s3 + $0x88] sm:$0xf]
      %v2845 = vld [vmem:[%s3 + $0x8c] sm:$0xf]
      %v2846 = vld [vmem:[%s3 + $0x90] sm:$0xf]
      %v2847 = vld [vmem:[%s3 + $0x94] sm:$0xf]
      %v2848 = vld [vmem:[%s3 + $0x98] sm:$0xf]
      %v2849 = vld [vmem:[%s3 + $0x9c] sm:$0xf]
      %v2850 = vld [vmem:[%s3 + $0xa0] sm:$0xf]
      %v2851 = vld [vmem:[%s3 + $0xa4] sm:$0xf]
      %v2852 = vld [vmem:[%s3 + $0xa8] sm:$0xf]
      %v2853 = vld [vmem:[%s3 + $0xac] sm:$0xf]
      %v2854 = vld [vmem:[%s3 + $0xb0] sm:$0xf]
      %v2855 = vld [vmem:[%s3 + $0xb4] sm:$0xf]
      %v2856 = vld [vmem:[%s3 + $0xb8] sm:$0xf]
      %v2857 = vld [vmem:[%s3 + $0xbc] sm:$0xf]
      %s2858 = scalar_lea.vmem [#allocation2], 8
      %v2859 = vld [vmem:[%s2858] sm:$0xf]
      %v2860 = vld [vmem:[%s2858 + $0x8] sm:$0xf]
      %v2861 = vld [vmem:[%s2858 + $0x10] sm:$0xf]
      %v2862 = vld [vmem:[%s2858 + $0x18] sm:$0xf]
      %v2863 = vld [vmem:[%s2858 + $0x20] sm:$0xf]
      %v2864 = vld [vmem:[%s2858 + $0x28] sm:$0xf]
      %v2865 = vld [vmem:[%s2858 + $0x30] sm:$0xf]
      %v2866 = vld [vmem:[%s2858 + $0x38] sm:$0xf]
      %v2867 = vld [vmem:[%s2858 + $0x4] sm:$0x1]
      %v2868 = vld [vmem:[%s2858 + $0xc] sm:$0x1]
      %v2869 = vld [vmem:[%s2858 + $0x14] sm:$0x1]
      %v2870 = vld [vmem:[%s2858 + $0x1c] sm:$0x1]
      %v2871 = vld [vmem:[%s2858 + $0x24] sm:$0x1]
      %v2872 = vld [vmem:[%s2858 + $0x2c] sm:$0x1]
      %v2873 = vld [vmem:[%s2858 + $0x34] sm:$0x1]
      %v2874 = vld [vmem:[%s2858 + $0x3c] sm:$0x1]
      %v2875 = vld [vmem:[%s2858] sm:$0xe]
      %v2876 = vld [vmem:[%s2858 + $0x8] sm:$0xe]
      %v2877 = vld [vmem:[%s2858 + $0x10] sm:$0xe]
      %v2878 = vld [vmem:[%s2858 + $0x18] sm:$0xe]
      %v2879 = vld [vmem:[%s2858 + $0x20] sm:$0xe]
      %v2880 = vld [vmem:[%s2858 + $0x28] sm:$0xe]
      %v2881 = vld [vmem:[%s2858 + $0x30] sm:$0xe]
      %v2882 = vld [vmem:[%s2858 + $0x38] sm:$0xe]
      %v2899 = vunpack.c.l.b16 %v2859
      %v2900 = vunpack.c.l.b16 %v2867
      %v2901 = vunpack.c.l.b16 %v2860
      %v2902 = vunpack.c.l.b16 %v2868
      %v2903 = vunpack.c.l.b16 %v2861
      %v2904 = vunpack.c.l.b16 %v2869
      %v2905 = vunpack.c.l.b16 %v2862
      %v2906 = vunpack.c.l.b16 %v2870
      %v2907 = vunpack.c.l.b16 %v2863
      %v2908 = vunpack.c.l.b16 %v2871
      %v2909 = vunpack.c.l.b16 %v2864
      %v2910 = vunpack.c.l.b16 %v2872
      %v2911 = vunpack.c.l.b16 %v2865
      %v2912 = vunpack.c.l.b16 %v2873
      %v2913 = vunpack.c.l.b16 %v2866
      %v2914 = vunpack.c.l.b16 %v2874
      %v2915 = vpack.c.b16 %v2900, %v2899
      %v2916 = vpack.c.b16 %v2902, %v2901
      %v2917 = vpack.c.b16 %v2904, %v2903
      %v2918 = vpack.c.b16 %v2906, %v2905
      %v2919 = vpack.c.b16 %v2908, %v2907
      %v2920 = vpack.c.b16 %v2910, %v2909
      %v2921 = vpack.c.b16 %v2912, %v2911
      %v2922 = vpack.c.b16 %v2914, %v2913
      %v2924 = vshrl.u32 %v2915, 16
      %v2926 = vshll.u32 %v2915, 16
      %v2928 = vrot.slane %v2926, 1
      %v2929 = vor.u32 %v2924, %v2928
      %v2931 = vshrl.u32 %v2916, 16
      %v2933 = vshll.u32 %v2916, 16
      %v2935 = vrot.slane %v2933, 1
      %v2936 = vor.u32 %v2931, %v2935
      %v2938 = vshrl.u32 %v2917, 16
      %v2940 = vshll.u32 %v2917, 16
      %v2942 = vrot.slane %v2940, 1
      %v2943 = vor.u32 %v2938, %v2942
      %v2945 = vshrl.u32 %v2918, 16
      %v2947 = vshll.u32 %v2918, 16
      %v2949 = vrot.slane %v2947, 1
      %v2950 = vor.u32 %v2945, %v2949
      %v2952 = vshrl.u32 %v2919, 16
      %v2954 = vshll.u32 %v2919, 16
      %v2956 = vrot.slane %v2954, 1
      %v2957 = vor.u32 %v2952, %v2956
      %v2959 = vshrl.u32 %v2920, 16
      %v2961 = vshll.u32 %v2920, 16
      %v2963 = vrot.slane %v2961, 1
      %v2964 = vor.u32 %v2959, %v2963
      %v2966 = vshrl.u32 %v2921, 16
      %v2968 = vshll.u32 %v2921, 16
      %v2970 = vrot.slane %v2968, 1
      %v2971 = vor.u32 %v2966, %v2970
      %v2973 = vshrl.u32 %v2922, 16
      %v2975 = vshll.u32 %v2922, 16
      %v2977 = vrot.slane %v2975, 1
      %v2978 = vor.u32 %v2973, %v2977
      %v2987 = vunpack.c.l.b16 %v2875
      %v2988 = vunpack.c.l.b16 %v2876
      %v2989 = vunpack.c.l.b16 %v2877
      %v2990 = vunpack.c.l.b16 %v2878
      %v2991 = vunpack.c.l.b16 %v2879
      %v2992 = vunpack.c.l.b16 %v2880
      %v2993 = vunpack.c.l.b16 %v2881
      %v2994 = vunpack.c.l.b16 %v2882
      %v2995 = vpack.c.b16 %v2900, %v2987
      %v2996 = vpack.c.b16 %v2902, %v2988
      %v2997 = vpack.c.b16 %v2904, %v2989
      %v2998 = vpack.c.b16 %v2906, %v2990
      %v2999 = vpack.c.b16 %v2908, %v2991
      %v3000 = vpack.c.b16 %v2910, %v2992
      %v3001 = vpack.c.b16 %v2912, %v2993
      %v3002 = vpack.c.b16 %v2914, %v2994
      %v3003 = vrot.slane %v2995, 1
      %v3004 = vrot.slane %v2996, 1
      %v3005 = vrot.slane %v2997, 1
      %v3006 = vrot.slane %v2998, 1
      %v3007 = vrot.slane %v2999, 1
      %v3008 = vrot.slane %v3000, 1
      %v3009 = vrot.slane %v3001, 1
      %v3010 = vrot.slane %v3002, 1
      %v3011 = vunpack.c.l.b16 %v2929
      %v3012 = vunpack.c.l.b16 %v3003
      %v3013 = vunpack.c.l.b16 %v2936
      %v3014 = vunpack.c.l.b16 %v3004
      %v3015 = vunpack.c.l.b16 %v2943
      %v3016 = vunpack.c.l.b16 %v3005
      %v3017 = vunpack.c.l.b16 %v2950
      %v3018 = vunpack.c.l.b16 %v3006
      %v3019 = vunpack.c.l.b16 %v2957
      %v3020 = vunpack.c.l.b16 %v3007
      %v3021 = vunpack.c.l.b16 %v2964
      %v3022 = vunpack.c.l.b16 %v3008
      %v3023 = vunpack.c.l.b16 %v2971
      %v3024 = vunpack.c.l.b16 %v3009
      %v3025 = vunpack.c.l.b16 %v2978
      %v3026 = vunpack.c.l.b16 %v3010
      %s3027 = scalar_lea.vmem %s3, 192
      %v3028 = vld [vmem:[%s3027] sm:$0xf]
      %v3029 = vld [vmem:[%s3027 + $0x4] sm:$0xf]
      %v3030 = vld [vmem:[%s3027 + $0x8] sm:$0xf]
      %v3031 = vld [vmem:[%s3027 + $0xc] sm:$0xf]
      %v3032 = vld [vmem:[%s3027 + $0x10] sm:$0xf]
      %v3033 = vld [vmem:[%s3027 + $0x14] sm:$0xf]
      %v3034 = vld [vmem:[%s3027 + $0x18] sm:$0xf]
      %v3035 = vld [vmem:[%s3027 + $0x1c] sm:$0xf]
      %v3036 = vld [vmem:[%s3027 + $0x20] sm:$0xf]
      %v3037 = vld [vmem:[%s3027 + $0x24] sm:$0xf]
      %v3038 = vld [vmem:[%s3027 + $0x28] sm:$0xf]
      %v3039 = vld [vmem:[%s3027 + $0x2c] sm:$0xf]
      %v3040 = vld [vmem:[%s3027 + $0x30] sm:$0xf]
      %v3041 = vld [vmem:[%s3027 + $0x34] sm:$0xf]
      %v3042 = vld [vmem:[%s3027 + $0x38] sm:$0xf]
      %v3043 = vld [vmem:[%s3027 + $0x3c] sm:$0xf]
      %v3044 = vld [vmem:[%s3027 + $0x40] sm:$0xf]
      %v3045 = vld [vmem:[%s3027 + $0x44] sm:$0xf]
      %v3046 = vld [vmem:[%s3027 + $0x48] sm:$0xf]
      %v3047 = vld [vmem:[%s3027 + $0x4c] sm:$0xf]
      %v3048 = vld [vmem:[%s3027 + $0x50] sm:$0xf]
      %v3049 = vld [vmem:[%s3027 + $0x54] sm:$0xf]
      %v3050 = vld [vmem:[%s3027 + $0x58] sm:$0xf]
      %v3051 = vld [vmem:[%s3027 + $0x5c] sm:$0xf]
      %v3052 = vld [vmem:[%s3027 + $0x60] sm:$0xf]
      %v3053 = vld [vmem:[%s3027 + $0x64] sm:$0xf]
      %v3054 = vld [vmem:[%s3027 + $0x68] sm:$0xf]
      %v3055 = vld [vmem:[%s3027 + $0x6c] sm:$0xf]
      %v3056 = vld [vmem:[%s3027 + $0x70] sm:$0xf]
      %v3057 = vld [vmem:[%s3027 + $0x74] sm:$0xf]
      %v3058 = vld [vmem:[%s3027 + $0x78] sm:$0xf]
      %v3059 = vld [vmem:[%s3027 + $0x7c] sm:$0xf]
      %v3060 = vld [vmem:[%s3027 + $0x80] sm:$0xf]
      %v3061 = vld [vmem:[%s3027 + $0x84] sm:$0xf]
      %v3062 = vld [vmem:[%s3027 + $0x88] sm:$0xf]
      %v3063 = vld [vmem:[%s3027 + $0x8c] sm:$0xf]
      %v3064 = vld [vmem:[%s3027 + $0x90] sm:$0xf]
      %v3065 = vld [vmem:[%s3027 + $0x94] sm:$0xf]
      %v3066 = vld [vmem:[%s3027 + $0x98] sm:$0xf]
      %v3067 = vld [vmem:[%s3027 + $0x9c] sm:$0xf]
      %v3068 = vld [vmem:[%s3027 + $0xa0] sm:$0xf]
      %v3069 = vld [vmem:[%s3027 + $0xa4] sm:$0xf]
      %v3070 = vld [vmem:[%s3027 + $0xa8] sm:$0xf]
      %v3071 = vld [vmem:[%s3027 + $0xac] sm:$0xf]
      %v3072 = vld [vmem:[%s3027 + $0xb0] sm:$0xf]
      %v3073 = vld [vmem:[%s3027 + $0xb4] sm:$0xf]
      %v3074 = vld [vmem:[%s3027 + $0xb8] sm:$0xf]
      %v3075 = vld [vmem:[%s3027 + $0xbc] sm:$0xf]
      %v3076 = vpack.c.b16 %v2901, %v2899
      %v3077 = vpack.c.b16 %v3013, %v3011
      %v3078 = vpack.c.b16 %v3014, %v3012
      %v3079 = vpack.c.b16 %v2905, %v2903
      %v3080 = vpack.c.b16 %v3017, %v3015
      %v3081 = vpack.c.b16 %v3018, %v3016
      %v3082 = vpack.c.b16 %v2909, %v2907
      %v3083 = vpack.c.b16 %v3021, %v3019
      %v3084 = vpack.c.b16 %v3022, %v3020
      %v3085 = vpack.c.b16 %v2913, %v2911
      %v3086 = vpack.c.b16 %v3025, %v3023
      %v3087 = vpack.c.b16 %v3026, %v3024
      %v3148 = vunpack.c.l.b16 %v3028
      %v3149 = vunpack.c.l.b16 %v3029
      %v3150 = vunpack.c.l.b16 %v3030
      %v3151 = vunpack.c.l.b16 %v3031
      %v3152 = vunpack.c.l.b16 %v3032
      %v3153 = vunpack.c.l.b16 %v3033
      %v3154 = vunpack.c.l.b16 %v3034
      %v3155 = vunpack.c.l.b16 %v3035
      %v3156 = vunpack.c.l.b16 %v3036
      %v3157 = vunpack.c.l.b16 %v3037
      %v3158 = vunpack.c.l.b16 %v3038
      %v3159 = vunpack.c.l.b16 %v3039
      %v3160 = vunpack.c.l.b16 %v3040
      %v3161 = vunpack.c.l.b16 %v3041
      %v3162 = vunpack.c.l.b16 %v3042
      %v3163 = vunpack.c.l.b16 %v3043
      %v3164 = vunpack.c.l.b16 %v3044
      %v3165 = vunpack.c.l.b16 %v3045
      %v3166 = vunpack.c.l.b16 %v3046
      %v3167 = vunpack.c.l.b16 %v3047
      %v3168 = vunpack.c.l.b16 %v3048
      %v3169 = vunpack.c.l.b16 %v3049
      %v3170 = vunpack.c.l.b16 %v3050
      %v3171 = vunpack.c.l.b16 %v3051
      %v3172 = vunpack.c.l.b16 %v3052
      %v3173 = vunpack.c.l.b16 %v3053
      %v3174 = vunpack.c.l.b16 %v3054
      %v3175 = vunpack.c.l.b16 %v3055
      %v3176 = vunpack.c.l.b16 %v3056
      %v3177 = vunpack.c.l.b16 %v3057
      %v3178 = vunpack.c.l.b16 %v3058
      %v3179 = vunpack.c.l.b16 %v3059
      %v3180 = vunpack.c.l.b16 %v3060
      %v3181 = vunpack.c.l.b16 %v3061
      %v3182 = vunpack.c.l.b16 %v3062
      %v3183 = vunpack.c.l.b16 %v3063
      %v3184 = vunpack.c.l.b16 %v3064
      %v3185 = vunpack.c.l.b16 %v3065
      %v3186 = vunpack.c.l.b16 %v3066
      %v3187 = vunpack.c.l.b16 %v3067
      %v3188 = vunpack.c.l.b16 %v3068
      %v3189 = vunpack.c.l.b16 %v3069
      %v3190 = vunpack.c.l.b16 %v3070
      %v3191 = vunpack.c.l.b16 %v3071
      %v3192 = vunpack.c.l.b16 %v3072
      %v3193 = vunpack.c.l.b16 %v3073
      %v3194 = vunpack.c.l.b16 %v3074
      %v3195 = vunpack.c.l.b16 %v3075
      %v3196 = vpack.c.b16 %v3149, %v3148
      %v3197 = vpack.c.b16 %v3151, %v3150
      %v3198 = vpack.c.b16 %v3153, %v3152
      %v3199 = vpack.c.b16 %v3155, %v3154
      %v3200 = vpack.c.b16 %v3157, %v3156
      %v3201 = vpack.c.b16 %v3159, %v3158
      %v3202 = vpack.c.b16 %v3161, %v3160
      %v3203 = vpack.c.b16 %v3163, %v3162
      %v3204 = vpack.c.b16 %v3165, %v3164
      %v3205 = vpack.c.b16 %v3167, %v3166
      %v3206 = vpack.c.b16 %v3169, %v3168
      %v3207 = vpack.c.b16 %v3171, %v3170
      %v3208 = vpack.c.b16 %v3173, %v3172
      %v3209 = vpack.c.b16 %v3175, %v3174
      %v3210 = vpack.c.b16 %v3177, %v3176
      %v3211 = vpack.c.b16 %v3179, %v3178
      %v3212 = vpack.c.b16 %v3181, %v3180
      %v3213 = vpack.c.b16 %v3183, %v3182
      %v3214 = vpack.c.b16 %v3185, %v3184
      %v3215 = vpack.c.b16 %v3187, %v3186
      %v3216 = vpack.c.b16 %v3189, %v3188
      %v3217 = vpack.c.b16 %v3191, %v3190
      %v3218 = vpack.c.b16 %v3193, %v3192
      %v3219 = vpack.c.b16 %v3195, %v3194
      %3244 = vmatpush.bf16.msra.mxu0 %v3203
      %3245 = vmatpush.bf16.msra.mxu0 %v3202
      %3246 = vmatpush.bf16.msra.mxu0 %v3201
      %3247 = vmatpush.bf16.msra.mxu0 %v3200
      %3248 = vmatpush.bf16.msra.mxu0 %v3199
      %3249 = vmatpush.bf16.msra.mxu0 %v3198
      %3250 = vmatpush.bf16.msra.mxu0 %v3197
      %3251 = vmatpush.bf16.msra.mxu0 %v3196
      %3252 = vmatmul.bf16.gmra.mxu0 %v3076
      %v3253 = vpop.f32.mrf.mxu0
      %v3254 = vadd.f32 0.0, %v3253
      %v3255 = vpop.f32.mrf.mxu0
      %v3256 = vadd.f32 0.0, %v3255
      %3257 = vmatmul.bf16.gmra.mxu0 %v3079
      %v3258 = vpop.f32.mrf.mxu0
      %v3259 = vadd.f32 0.0, %v3258
      %v3260 = vpop.f32.mrf.mxu0
      %v3261 = vadd.f32 0.0, %v3260
      %3262 = vmatmul.bf16.gmra.mxu0 %v3082
      %v3263 = vpop.f32.mrf.mxu0
      %v3264 = vadd.f32 0.0, %v3263
      %v3265 = vpop.f32.mrf.mxu0
      %v3266 = vadd.f32 0.0, %v3265
      %3267 = vmatmul.bf16.gmra.mxu0 %v3085
      %v3268 = vpop.f32.mrf.mxu0
      %v3269 = vadd.f32 0.0, %v3268
      %v3270 = vpop.f32.mrf.mxu0
      %v3271 = vadd.f32 0.0, %v3270
      %3272 = vdwg.mxu0
      %3273 = vmatpush.bf16.msra.mxu0 %v3211
      %3274 = vmatpush.bf16.msra.mxu0 %v3210
      %3275 = vmatpush.bf16.msra.mxu0 %v3209
      %3276 = vmatpush.bf16.msra.mxu0 %v3208
      %3277 = vmatpush.bf16.msra.mxu0 %v3207
      %3278 = vmatpush.bf16.msra.mxu0 %v3206
      %3279 = vmatpush.bf16.msra.mxu0 %v3205
      %3280 = vmatpush.bf16.msra.mxu0 %v3204
      %3281 = vmatmul.bf16.gmra.mxu0 %v3077
      %v3282 = vpop.f32.mrf.mxu0
      %v3283 = vadd.f32 %v3254, %v3282
      %v3284 = vpop.f32.mrf.mxu0
      %v3285 = vadd.f32 %v3256, %v3284
      %3286 = vmatmul.bf16.gmra.mxu0 %v3080
      %v3287 = vpop.f32.mrf.mxu0
      %v3288 = vadd.f32 %v3259, %v3287
      %v3289 = vpop.f32.mrf.mxu0
      %v3290 = vadd.f32 %v3261, %v3289
      %3291 = vmatmul.bf16.gmra.mxu0 %v3083
      %v3292 = vpop.f32.mrf.mxu0
      %v3293 = vadd.f32 %v3264, %v3292
      %v3294 = vpop.f32.mrf.mxu0
      %v3295 = vadd.f32 %v3266, %v3294
      %3296 = vmatmul.bf16.gmra.mxu0 %v3086
      %v3297 = vpop.f32.mrf.mxu0
      %v3298 = vadd.f32 %v3269, %v3297
      %v3299 = vpop.f32.mrf.mxu0
      %v3300 = vadd.f32 %v3271, %v3299
      %3301 = vdwg.mxu0
      %3302 = vmatpush.bf16.msra.mxu0 %v3219
      %3303 = vmatpush.bf16.msra.mxu0 %v3218
      %3304 = vmatpush.bf16.msra.mxu0 %v3217
      %3305 = vmatpush.bf16.msra.mxu0 %v3216
      %3306 = vmatpush.bf16.msra.mxu0 %v3215
      %3307 = vmatpush.bf16.msra.mxu0 %v3214
      %3308 = vmatpush.bf16.msra.mxu0 %v3213
      %3309 = vmatpush.bf16.msra.mxu0 %v3212
      %3310 = vmatmul.bf16.gmra.mxu0 %v3078
      %v3311 = vpop.f32.mrf.mxu0
      %v3312 = vadd.f32 %v3283, %v3311
      %v3313 = vpop.f32.mrf.mxu0
      %v3314 = vadd.f32 %v3285, %v3313
      %3315 = vmatmul.bf16.gmra.mxu0 %v3081
      %v3316 = vpop.f32.mrf.mxu0
      %v3317 = vadd.f32 %v3288, %v3316
      %v3318 = vpop.f32.mrf.mxu0
      %v3319 = vadd.f32 %v3290, %v3318
      %3320 = vmatmul.bf16.gmra.mxu0 %v3084
      %v3321 = vpop.f32.mrf.mxu0
      %v3322 = vadd.f32 %v3293, %v3321
      %v3323 = vpop.f32.mrf.mxu0
      %v3324 = vadd.f32 %v3295, %v3323
      %3325 = vmatmul.bf16.gmra.mxu0 %v3087
      %v3326 = vpop.f32.mrf.mxu0
      %v3327 = vadd.f32 %v3298, %v3326
      %v3328 = vpop.f32.mrf.mxu0
      %v3329 = vadd.f32 %v3300, %v3328
      %3330 = vdwg.mxu0
      %v3331 = vpack.c.b16 %v2684, %v2682
      %v3332 = vpack.c.b16 %v2796, %v2794
      %v3333 = vpack.c.b16 %v2797, %v2795
      %v3334 = vpack.c.b16 %v2688, %v2686
      %v3335 = vpack.c.b16 %v2800, %v2798
      %v3336 = vpack.c.b16 %v2801, %v2799
      %v3337 = vpack.c.b16 %v2692, %v2690
      %v3338 = vpack.c.b16 %v2804, %v2802
      %v3339 = vpack.c.b16 %v2805, %v2803
      %v3340 = vpack.c.b16 %v2696, %v2694
      %v3341 = vpack.c.b16 %v2808, %v2806
      %v3342 = vpack.c.b16 %v2809, %v2807
      %v3403 = vunpack.c.l.b16 %v2810
      %v3404 = vunpack.c.l.b16 %v2811
      %v3405 = vunpack.c.l.b16 %v2812
      %v3406 = vunpack.c.l.b16 %v2813
      %v3407 = vunpack.c.l.b16 %v2814
      %v3408 = vunpack.c.l.b16 %v2815
      %v3409 = vunpack.c.l.b16 %v2816
      %v3410 = vunpack.c.l.b16 %v2817
      %v3411 = vunpack.c.l.b16 %v2818
      %v3412 = vunpack.c.l.b16 %v2819
      %v3413 = vunpack.c.l.b16 %v2820
      %v3414 = vunpack.c.l.b16 %v2821
      %v3415 = vunpack.c.l.b16 %v2822
      %v3416 = vunpack.c.l.b16 %v2823
      %v3417 = vunpack.c.l.b16 %v2824
      %v3418 = vunpack.c.l.b16 %v2825
      %v3419 = vunpack.c.l.b16 %v2826
      %v3420 = vunpack.c.l.b16 %v2827
      %v3421 = vunpack.c.l.b16 %v2828
      %v3422 = vunpack.c.l.b16 %v2829
      %v3423 = vunpack.c.l.b16 %v2830
      %v3424 = vunpack.c.l.b16 %v2831
      %v3425 = vunpack.c.l.b16 %v2832
      %v3426 = vunpack.c.l.b16 %v2833
      %v3427 = vunpack.c.l.b16 %v2834
      %v3428 = vunpack.c.l.b16 %v2835
      %v3429 = vunpack.c.l.b16 %v2836
      %v3430 = vunpack.c.l.b16 %v2837
      %v3431 = vunpack.c.l.b16 %v2838
      %v3432 = vunpack.c.l.b16 %v2839
      %v3433 = vunpack.c.l.b16 %v2840
      %v3434 = vunpack.c.l.b16 %v2841
      %v3435 = vunpack.c.l.b16 %v2842
      %v3436 = vunpack.c.l.b16 %v2843
      %v3437 = vunpack.c.l.b16 %v2844
      %v3438 = vunpack.c.l.b16 %v2845
      %v3439 = vunpack.c.l.b16 %v2846
      %v3440 = vunpack.c.l.b16 %v2847
      %v3441 = vunpack.c.l.b16 %v2848
      %v3442 = vunpack.c.l.b16 %v2849
      %v3443 = vunpack.c.l.b16 %v2850
      %v3444 = vunpack.c.l.b16 %v2851
      %v3445 = vunpack.c.l.b16 %v2852
      %v3446 = vunpack.c.l.b16 %v2853
      %v3447 = vunpack.c.l.b16 %v2854
      %v3448 = vunpack.c.l.b16 %v2855
      %v3449 = vunpack.c.l.b16 %v2856
      %v3450 = vunpack.c.l.b16 %v2857
      %v3451 = vpack.c.b16 %v3404, %v3403
      %v3452 = vpack.c.b16 %v3406, %v3405
      %v3453 = vpack.c.b16 %v3408, %v3407
      %v3454 = vpack.c.b16 %v3410, %v3409
      %v3455 = vpack.c.b16 %v3412, %v3411
      %v3456 = vpack.c.b16 %v3414, %v3413
      %v3457 = vpack.c.b16 %v3416, %v3415
      %v3458 = vpack.c.b16 %v3418, %v3417
      %v3459 = vpack.c.b16 %v3420, %v3419
      %v3460 = vpack.c.b16 %v3422, %v3421
      %v3461 = vpack.c.b16 %v3424, %v3423
      %v3462 = vpack.c.b16 %v3426, %v3425
      %v3463 = vpack.c.b16 %v3428, %v3427
      %v3464 = vpack.c.b16 %v3430, %v3429
      %v3465 = vpack.c.b16 %v3432, %v3431
      %v3466 = vpack.c.b16 %v3434, %v3433
      %v3467 = vpack.c.b16 %v3436, %v3435
      %v3468 = vpack.c.b16 %v3438, %v3437
      %v3469 = vpack.c.b16 %v3440, %v3439
      %v3470 = vpack.c.b16 %v3442, %v3441
      %v3471 = vpack.c.b16 %v3444, %v3443
      %v3472 = vpack.c.b16 %v3446, %v3445
      %v3473 = vpack.c.b16 %v3448, %v3447
      %v3474 = vpack.c.b16 %v3450, %v3449
      %3499 = vmatpush.bf16.msra.mxu0 %v3458
      %3500 = vmatpush.bf16.msra.mxu0 %v3457
      %3501 = vmatpush.bf16.msra.mxu0 %v3456
      %3502 = vmatpush.bf16.msra.mxu0 %v3455
      %3503 = vmatpush.bf16.msra.mxu0 %v3454
      %3504 = vmatpush.bf16.msra.mxu0 %v3453
      %3505 = vmatpush.bf16.msra.mxu0 %v3452
      %3506 = vmatpush.bf16.msra.mxu0 %v3451
      %3507 = vmatmul.bf16.gmra.mxu0 %v3331
      %v3508 = vpop.f32.mrf.mxu0
      %v3509 = vadd.f32 %v3312, %v3508
      %v3510 = vpop.f32.mrf.mxu0
      %v3511 = vadd.f32 %v3314, %v3510
      %3512 = vmatmul.bf16.gmra.mxu0 %v3334
      %v3513 = vpop.f32.mrf.mxu0
      %v3514 = vadd.f32 %v3317, %v3513
      %v3515 = vpop.f32.mrf.mxu0
      %v3516 = vadd.f32 %v3319, %v3515
      %3517 = vmatmul.bf16.gmra.mxu0 %v3337
      %v3518 = vpop.f32.mrf.mxu0
      %v3519 = vadd.f32 %v3322, %v3518
      %v3520 = vpop.f32.mrf.mxu0
      %v3521 = vadd.f32 %v3324, %v3520
      %3522 = vmatmul.bf16.gmra.mxu0 %v3340
      %v3523 = vpop.f32.mrf.mxu0
      %v3524 = vadd.f32 %v3327, %v3523
      %v3525 = vpop.f32.mrf.mxu0
      %v3526 = vadd.f32 %v3329, %v3525
      %3527 = vdwg.mxu0
      %3528 = vmatpush.bf16.msra.mxu0 %v3466
      %3529 = vmatpush.bf16.msra.mxu0 %v3465
      %3530 = vmatpush.bf16.msra.mxu0 %v3464
      %3531 = vmatpush.bf16.msra.mxu0 %v3463
      %3532 = vmatpush.bf16.msra.mxu0 %v3462
      %3533 = vmatpush.bf16.msra.mxu0 %v3461
      %3534 = vmatpush.bf16.msra.mxu0 %v3460
      %3535 = vmatpush.bf16.msra.mxu0 %v3459
      %3536 = vmatmul.bf16.gmra.mxu0 %v3332
      %v3537 = vpop.f32.mrf.mxu0
      %v3538 = vadd.f32 %v3509, %v3537
      %v3539 = vpop.f32.mrf.mxu0
      %v3540 = vadd.f32 %v3511, %v3539
      %3541 = vmatmul.bf16.gmra.mxu0 %v3335
      %v3542 = vpop.f32.mrf.mxu0
      %v3543 = vadd.f32 %v3514, %v3542
      %v3544 = vpop.f32.mrf.mxu0
      %v3545 = vadd.f32 %v3516, %v3544
      %3546 = vmatmul.bf16.gmra.mxu0 %v3338
      %v3547 = vpop.f32.mrf.mxu0
      %v3548 = vadd.f32 %v3519, %v3547
      %v3549 = vpop.f32.mrf.mxu0
      %v3550 = vadd.f32 %v3521, %v3549
      %3551 = vmatmul.bf16.gmra.mxu0 %v3341
      %v3552 = vpop.f32.mrf.mxu0
      %v3553 = vadd.f32 %v3524, %v3552
      %v3554 = vpop.f32.mrf.mxu0
      %v3555 = vadd.f32 %v3526, %v3554
      %3556 = vdwg.mxu0
      %3557 = vmatpush.bf16.msra.mxu0 %v3474
      %3558 = vmatpush.bf16.msra.mxu0 %v3473
      %3559 = vmatpush.bf16.msra.mxu0 %v3472
      %3560 = vmatpush.bf16.msra.mxu0 %v3471
      %3561 = vmatpush.bf16.msra.mxu0 %v3470
      %3562 = vmatpush.bf16.msra.mxu0 %v3469
      %3563 = vmatpush.bf16.msra.mxu0 %v3468
      %3564 = vmatpush.bf16.msra.mxu0 %v3467
      %3565 = vmatmul.bf16.gmra.mxu0 %v3333
      %v3566 = vpop.f32.mrf.mxu0
      %v3567 = vadd.f32 %v3538, %v3566
      %v3568 = vpop.f32.mrf.mxu0
      %v3569 = vadd.f32 %v3540, %v3568
      %3570 = vmatmul.bf16.gmra.mxu0 %v3336
      %v3571 = vpop.f32.mrf.mxu0
      %v3572 = vadd.f32 %v3543, %v3571
      %v3573 = vpop.f32.mrf.mxu0
      %v3574 = vadd.f32 %v3545, %v3573
      %3575 = vmatmul.bf16.gmra.mxu0 %v3339
      %v3576 = vpop.f32.mrf.mxu0
      %v3577 = vadd.f32 %v3548, %v3576
      %v3578 = vpop.f32.mrf.mxu0
      %v3579 = vadd.f32 %v3550, %v3578
      %3580 = vmatmul.bf16.gmra.mxu0 %v3342
      %v3581 = vpop.f32.mrf.mxu0
      %v3582 = vadd.f32 %v3553, %v3581
      %v3583 = vpop.f32.mrf.mxu0
      %v3584 = vadd.f32 %v3555, %v3583
      %3585 = vdwg.mxu0
      %s3586 = scalar_lea.vmem [#allocation2], 16
      %v3587 = vld [vmem:[%s3586] sm:$0xf]
      %v3588 = vld [vmem:[%s3586 + $0x8] sm:$0xf]
      %v3589 = vld [vmem:[%s3586 + $0x10] sm:$0xf]
      %v3590 = vld [vmem:[%s3586 + $0x18] sm:$0xf]
      %v3591 = vld [vmem:[%s3586 + $0x20] sm:$0xf]
      %v3592 = vld [vmem:[%s3586 + $0x28] sm:$0xf]
      %v3593 = vld [vmem:[%s3586 + $0x30] sm:$0xf]
      %v3594 = vld [vmem:[%s3586 + $0x38] sm:$0xf]
      %v3595 = vld [vmem:[%s3586 + $0x4] sm:$0x1]
      %v3596 = vld [vmem:[%s3586 + $0xc] sm:$0x1]
      %v3597 = vld [vmem:[%s3586 + $0x14] sm:$0x1]
      %v3598 = vld [vmem:[%s3586 + $0x1c] sm:$0x1]
      %v3599 = vld [vmem:[%s3586 + $0x24] sm:$0x1]
      %v3600 = vld [vmem:[%s3586 + $0x2c] sm:$0x1]
      %v3601 = vld [vmem:[%s3586 + $0x34] sm:$0x1]
      %v3602 = vld [vmem:[%s3586 + $0x3c] sm:$0x1]
      %v3603 = vld [vmem:[%s3586] sm:$0xe]
      %v3604 = vld [vmem:[%s3586 + $0x8] sm:$0xe]
      %v3605 = vld [vmem:[%s3586 + $0x10] sm:$0xe]
      %v3606 = vld [vmem:[%s3586 + $0x18] sm:$0xe]
      %v3607 = vld [vmem:[%s3586 + $0x20] sm:$0xe]
      %v3608 = vld [vmem:[%s3586 + $0x28] sm:$0xe]
      %v3609 = vld [vmem:[%s3586 + $0x30] sm:$0xe]
      %v3610 = vld [vmem:[%s3586 + $0x38] sm:$0xe]
      %v3627 = vunpack.c.l.b16 %v3587
      %v3628 = vunpack.c.l.b16 %v3595
      %v3629 = vunpack.c.l.b16 %v3588
      %v3630 = vunpack.c.l.b16 %v3596
      %v3631 = vunpack.c.l.b16 %v3589
      %v3632 = vunpack.c.l.b16 %v3597
      %v3633 = vunpack.c.l.b16 %v3590
      %v3634 = vunpack.c.l.b16 %v3598
      %v3635 = vunpack.c.l.b16 %v3591
      %v3636 = vunpack.c.l.b16 %v3599
      %v3637 = vunpack.c.l.b16 %v3592
      %v3638 = vunpack.c.l.b16 %v3600
      %v3639 = vunpack.c.l.b16 %v3593
      %v3640 = vunpack.c.l.b16 %v3601
      %v3641 = vunpack.c.l.b16 %v3594
      %v3642 = vunpack.c.l.b16 %v3602
      %v3643 = vpack.c.b16 %v3628, %v3627
      %v3644 = vpack.c.b16 %v3630, %v3629
      %v3645 = vpack.c.b16 %v3632, %v3631
      %v3646 = vpack.c.b16 %v3634, %v3633
      %v3647 = vpack.c.b16 %v3636, %v3635
      %v3648 = vpack.c.b16 %v3638, %v3637
      %v3649 = vpack.c.b16 %v3640, %v3639
      %v3650 = vpack.c.b16 %v3642, %v3641
      %v3652 = vshrl.u32 %v3643, 16
      %v3654 = vshll.u32 %v3643, 16
      %v3656 = vrot.slane %v3654, 1
      %v3657 = vor.u32 %v3652, %v3656
      %v3659 = vshrl.u32 %v3644, 16
      %v3661 = vshll.u32 %v3644, 16
      %v3663 = vrot.slane %v3661, 1
      %v3664 = vor.u32 %v3659, %v3663
      %v3666 = vshrl.u32 %v3645, 16
      %v3668 = vshll.u32 %v3645, 16
      %v3670 = vrot.slane %v3668, 1
      %v3671 = vor.u32 %v3666, %v3670
      %v3673 = vshrl.u32 %v3646, 16
      %v3675 = vshll.u32 %v3646, 16
      %v3677 = vrot.slane %v3675, 1
      %v3678 = vor.u32 %v3673, %v3677
      %v3680 = vshrl.u32 %v3647, 16
      %v3682 = vshll.u32 %v3647, 16
      %v3684 = vrot.slane %v3682, 1
      %v3685 = vor.u32 %v3680, %v3684
      %v3687 = vshrl.u32 %v3648, 16
      %v3689 = vshll.u32 %v3648, 16
      %v3691 = vrot.slane %v3689, 1
      %v3692 = vor.u32 %v3687, %v3691
      %v3694 = vshrl.u32 %v3649, 16
      %v3696 = vshll.u32 %v3649, 16
      %v3698 = vrot.slane %v3696, 1
      %v3699 = vor.u32 %v3694, %v3698
      %v3701 = vshrl.u32 %v3650, 16
      %v3703 = vshll.u32 %v3650, 16
      %v3705 = vrot.slane %v3703, 1
      %v3706 = vor.u32 %v3701, %v3705
      %v3715 = vunpack.c.l.b16 %v3603
      %v3716 = vunpack.c.l.b16 %v3604
      %v3717 = vunpack.c.l.b16 %v3605
      %v3718 = vunpack.c.l.b16 %v3606
      %v3719 = vunpack.c.l.b16 %v3607
      %v3720 = vunpack.c.l.b16 %v3608
      %v3721 = vunpack.c.l.b16 %v3609
      %v3722 = vunpack.c.l.b16 %v3610
      %v3723 = vpack.c.b16 %v3628, %v3715
      %v3724 = vpack.c.b16 %v3630, %v3716
      %v3725 = vpack.c.b16 %v3632, %v3717
      %v3726 = vpack.c.b16 %v3634, %v3718
      %v3727 = vpack.c.b16 %v3636, %v3719
      %v3728 = vpack.c.b16 %v3638, %v3720
      %v3729 = vpack.c.b16 %v3640, %v3721
      %v3730 = vpack.c.b16 %v3642, %v3722
      %v3731 = vrot.slane %v3723, 1
      %v3732 = vrot.slane %v3724, 1
      %v3733 = vrot.slane %v3725, 1
      %v3734 = vrot.slane %v3726, 1
      %v3735 = vrot.slane %v3727, 1
      %v3736 = vrot.slane %v3728, 1
      %v3737 = vrot.slane %v3729, 1
      %v3738 = vrot.slane %v3730, 1
      %v3739 = vunpack.c.l.b16 %v3657
      %v3740 = vunpack.c.l.b16 %v3731
      %v3741 = vunpack.c.l.b16 %v3664
      %v3742 = vunpack.c.l.b16 %v3732
      %v3743 = vunpack.c.l.b16 %v3671
      %v3744 = vunpack.c.l.b16 %v3733
      %v3745 = vunpack.c.l.b16 %v3678
      %v3746 = vunpack.c.l.b16 %v3734
      %v3747 = vunpack.c.l.b16 %v3685
      %v3748 = vunpack.c.l.b16 %v3735
      %v3749 = vunpack.c.l.b16 %v3692
      %v3750 = vunpack.c.l.b16 %v3736
      %v3751 = vunpack.c.l.b16 %v3699
      %v3752 = vunpack.c.l.b16 %v3737
      %v3753 = vunpack.c.l.b16 %v3706
      %v3754 = vunpack.c.l.b16 %v3738
      %s3755 = scalar_lea.vmem %s3, 384
      %v3756 = vld [vmem:[%s3755] sm:$0xf]
      %v3757 = vld [vmem:[%s3755 + $0x4] sm:$0xf]
      %v3758 = vld [vmem:[%s3755 + $0x8] sm:$0xf]
      %v3759 = vld [vmem:[%s3755 + $0xc] sm:$0xf]
      %v3760 = vld [vmem:[%s3755 + $0x10] sm:$0xf]
      %v3761 = vld [vmem:[%s3755 + $0x14] sm:$0xf]
      %v3762 = vld [vmem:[%s3755 + $0x18] sm:$0xf]
      %v3763 = vld [vmem:[%s3755 + $0x1c] sm:$0xf]
      %v3764 = vld [vmem:[%s3755 + $0x20] sm:$0xf]
      %v3765 = vld [vmem:[%s3755 + $0x24] sm:$0xf]
      %v3766 = vld [vmem:[%s3755 + $0x28] sm:$0xf]
      %v3767 = vld [vmem:[%s3755 + $0x2c] sm:$0xf]
      %v3768 = vld [vmem:[%s3755 + $0x30] sm:$0xf]
      %v3769 = vld [vmem:[%s3755 + $0x34] sm:$0xf]
      %v3770 = vld [vmem:[%s3755 + $0x38] sm:$0xf]
      %v3771 = vld [vmem:[%s3755 + $0x3c] sm:$0xf]
      %v3772 = vld [vmem:[%s3755 + $0x40] sm:$0xf]
      %v3773 = vld [vmem:[%s3755 + $0x44] sm:$0xf]
      %v3774 = vld [vmem:[%s3755 + $0x48] sm:$0xf]
      %v3775 = vld [vmem:[%s3755 + $0x4c] sm:$0xf]
      %v3776 = vld [vmem:[%s3755 + $0x50] sm:$0xf]
      %v3777 = vld [vmem:[%s3755 + $0x54] sm:$0xf]
      %v3778 = vld [vmem:[%s3755 + $0x58] sm:$0xf]
      %v3779 = vld [vmem:[%s3755 + $0x5c] sm:$0xf]
      %v3780 = vld [vmem:[%s3755 + $0x60] sm:$0xf]
      %v3781 = vld [vmem:[%s3755 + $0x64] sm:$0xf]
      %v3782 = vld [vmem:[%s3755 + $0x68] sm:$0xf]
      %v3783 = vld [vmem:[%s3755 + $0x6c] sm:$0xf]
      %v3784 = vld [vmem:[%s3755 + $0x70] sm:$0xf]
      %v3785 = vld [vmem:[%s3755 + $0x74] sm:$0xf]
      %v3786 = vld [vmem:[%s3755 + $0x78] sm:$0xf]
      %v3787 = vld [vmem:[%s3755 + $0x7c] sm:$0xf]
      %v3788 = vld [vmem:[%s3755 + $0x80] sm:$0xf]
      %v3789 = vld [vmem:[%s3755 + $0x84] sm:$0xf]
      %v3790 = vld [vmem:[%s3755 + $0x88] sm:$0xf]
      %v3791 = vld [vmem:[%s3755 + $0x8c] sm:$0xf]
      %v3792 = vld [vmem:[%s3755 + $0x90] sm:$0xf]
      %v3793 = vld [vmem:[%s3755 + $0x94] sm:$0xf]
      %v3794 = vld [vmem:[%s3755 + $0x98] sm:$0xf]
      %v3795 = vld [vmem:[%s3755 + $0x9c] sm:$0xf]
      %v3796 = vld [vmem:[%s3755 + $0xa0] sm:$0xf]
      %v3797 = vld [vmem:[%s3755 + $0xa4] sm:$0xf]
      %v3798 = vld [vmem:[%s3755 + $0xa8] sm:$0xf]
      %v3799 = vld [vmem:[%s3755 + $0xac] sm:$0xf]
      %v3800 = vld [vmem:[%s3755 + $0xb0] sm:$0xf]
      %v3801 = vld [vmem:[%s3755 + $0xb4] sm:$0xf]
      %v3802 = vld [vmem:[%s3755 + $0xb8] sm:$0xf]
      %v3803 = vld [vmem:[%s3755 + $0xbc] sm:$0xf]
      %v3804 = vpack.c.b16 %v3629, %v3627
      %v3805 = vpack.c.b16 %v3741, %v3739
      %v3806 = vpack.c.b16 %v3742, %v3740
      %v3807 = vpack.c.b16 %v3633, %v3631
      %v3808 = vpack.c.b16 %v3745, %v3743
      %v3809 = vpack.c.b16 %v3746, %v3744
      %v3810 = vpack.c.b16 %v3637, %v3635
      %v3811 = vpack.c.b16 %v3749, %v3747
      %v3812 = vpack.c.b16 %v3750, %v3748
      %v3813 = vpack.c.b16 %v3641, %v3639
      %v3814 = vpack.c.b16 %v3753, %v3751
      %v3815 = vpack.c.b16 %v3754, %v3752
      %v3876 = vunpack.c.l.b16 %v3756
      %v3877 = vunpack.c.l.b16 %v3757
      %v3878 = vunpack.c.l.b16 %v3758
      %v3879 = vunpack.c.l.b16 %v3759
      %v3880 = vunpack.c.l.b16 %v3760
      %v3881 = vunpack.c.l.b16 %v3761
      %v3882 = vunpack.c.l.b16 %v3762
      %v3883 = vunpack.c.l.b16 %v3763
      %v3884 = vunpack.c.l.b16 %v3764
      %v3885 = vunpack.c.l.b16 %v3765
      %v3886 = vunpack.c.l.b16 %v3766
      %v3887 = vunpack.c.l.b16 %v3767
      %v3888 = vunpack.c.l.b16 %v3768
      %v3889 = vunpack.c.l.b16 %v3769
      %v3890 = vunpack.c.l.b16 %v3770
      %v3891 = vunpack.c.l.b16 %v3771
      %v3892 = vunpack.c.l.b16 %v3772
      %v3893 = vunpack.c.l.b16 %v3773
      %v3894 = vunpack.c.l.b16 %v3774
      %v3895 = vunpack.c.l.b16 %v3775
      %v3896 = vunpack.c.l.b16 %v3776
      %v3897 = vunpack.c.l.b16 %v3777
      %v3898 = vunpack.c.l.b16 %v3778
      %v3899 = vunpack.c.l.b16 %v3779
      %v3900 = vunpack.c.l.b16 %v3780
      %v3901 = vunpack.c.l.b16 %v3781
      %v3902 = vunpack.c.l.b16 %v3782
      %v3903 = vunpack.c.l.b16 %v3783
      %v3904 = vunpack.c.l.b16 %v3784
      %v3905 = vunpack.c.l.b16 %v3785
      %v3906 = vunpack.c.l.b16 %v3786
      %v3907 = vunpack.c.l.b16 %v3787
      %v3908 = vunpack.c.l.b16 %v3788
      %v3909 = vunpack.c.l.b16 %v3789
      %v3910 = vunpack.c.l.b16 %v3790
      %v3911 = vunpack.c.l.b16 %v3791
      %v3912 = vunpack.c.l.b16 %v3792
      %v3913 = vunpack.c.l.b16 %v3793
      %v3914 = vunpack.c.l.b16 %v3794
      %v3915 = vunpack.c.l.b16 %v3795
      %v3916 = vunpack.c.l.b16 %v3796
      %v3917 = vunpack.c.l.b16 %v3797
      %v3918 = vunpack.c.l.b16 %v3798
      %v3919 = vunpack.c.l.b16 %v3799
      %v3920 = vunpack.c.l.b16 %v3800
      %v3921 = vunpack.c.l.b16 %v3801
      %v3922 = vunpack.c.l.b16 %v3802
      %v3923 = vunpack.c.l.b16 %v3803
      %v3924 = vpack.c.b16 %v3877, %v3876
      %v3925 = vpack.c.b16 %v3879, %v3878
      %v3926 = vpack.c.b16 %v3881, %v3880
      %v3927 = vpack.c.b16 %v3883, %v3882
      %v3928 = vpack.c.b16 %v3885, %v3884
      %v3929 = vpack.c.b16 %v3887, %v3886
      %v3930 = vpack.c.b16 %v3889, %v3888
      %v3931 = vpack.c.b16 %v3891, %v3890
      %v3932 = vpack.c.b16 %v3893, %v3892
      %v3933 = vpack.c.b16 %v3895, %v3894
      %v3934 = vpack.c.b16 %v3897, %v3896
      %v3935 = vpack.c.b16 %v3899, %v3898
      %v3936 = vpack.c.b16 %v3901, %v3900
      %v3937 = vpack.c.b16 %v3903, %v3902
      %v3938 = vpack.c.b16 %v3905, %v3904
      %v3939 = vpack.c.b16 %v3907, %v3906
      %v3940 = vpack.c.b16 %v3909, %v3908
      %v3941 = vpack.c.b16 %v3911, %v3910
      %v3942 = vpack.c.b16 %v3913, %v3912
      %v3943 = vpack.c.b16 %v3915, %v3914
      %v3944 = vpack.c.b16 %v3917, %v3916
      %v3945 = vpack.c.b16 %v3919, %v3918
      %v3946 = vpack.c.b16 %v3921, %v3920
      %v3947 = vpack.c.b16 %v3923, %v3922
      %3972 = vmatpush.bf16.msra.mxu0 %v3931
      %3973 = vmatpush.bf16.msra.mxu0 %v3930
      %3974 = vmatpush.bf16.msra.mxu0 %v3929
      %3975 = vmatpush.bf16.msra.mxu0 %v3928
      %3976 = vmatpush.bf16.msra.mxu0 %v3927
      %3977 = vmatpush.bf16.msra.mxu0 %v3926
      %3978 = vmatpush.bf16.msra.mxu0 %v3925
      %3979 = vmatpush.bf16.msra.mxu0 %v3924
      %3980 = vmatmul.bf16.gmra.mxu0 %v3804
      %v3981 = vpop.f32.mrf.mxu0
      %v3982 = vadd.f32 0.0, %v3981
      %v3983 = vpop.f32.mrf.mxu0
      %v3984 = vadd.f32 0.0, %v3983
      %3985 = vmatmul.bf16.gmra.mxu0 %v3807
      %v3986 = vpop.f32.mrf.mxu0
      %v3987 = vadd.f32 0.0, %v3986
      %v3988 = vpop.f32.mrf.mxu0
      %v3989 = vadd.f32 0.0, %v3988
      %3990 = vmatmul.bf16.gmra.mxu0 %v3810
      %v3991 = vpop.f32.mrf.mxu0
      %v3992 = vadd.f32 0.0, %v3991
      %v3993 = vpop.f32.mrf.mxu0
      %v3994 = vadd.f32 0.0, %v3993
      %3995 = vmatmul.bf16.gmra.mxu0 %v3813
      %v3996 = vpop.f32.mrf.mxu0
      %v3997 = vadd.f32 0.0, %v3996
      %v3998 = vpop.f32.mrf.mxu0
      %v3999 = vadd.f32 0.0, %v3998
      %4000 = vdwg.mxu0
      %4001 = vmatpush.bf16.msra.mxu0 %v3939
      %4002 = vmatpush.bf16.msra.mxu0 %v3938
      %4003 = vmatpush.bf16.msra.mxu0 %v3937
      %4004 = vmatpush.bf16.msra.mxu0 %v3936
      %4005 = vmatpush.bf16.msra.mxu0 %v3935
      %4006 = vmatpush.bf16.msra.mxu0 %v3934
      %4007 = vmatpush.bf16.msra.mxu0 %v3933
      %4008 = vmatpush.bf16.msra.mxu0 %v3932
      %4009 = vmatmul.bf16.gmra.mxu0 %v3805
      %v4010 = vpop.f32.mrf.mxu0
      %v4011 = vadd.f32 %v3982, %v4010
      %v4012 = vpop.f32.mrf.mxu0
      %v4013 = vadd.f32 %v3984, %v4012
      %4014 = vmatmul.bf16.gmra.mxu0 %v3808
      %v4015 = vpop.f32.mrf.mxu0
      %v4016 = vadd.f32 %v3987, %v4015
      %v4017 = vpop.f32.mrf.mxu0
      %v4018 = vadd.f32 %v3989, %v4017
      %4019 = vmatmul.bf16.gmra.mxu0 %v3811
      %v4020 = vpop.f32.mrf.mxu0
      %v4021 = vadd.f32 %v3992, %v4020
      %v4022 = vpop.f32.mrf.mxu0
      %v4023 = vadd.f32 %v3994, %v4022
      %4024 = vmatmul.bf16.gmra.mxu0 %v3814
      %v4025 = vpop.f32.mrf.mxu0
      %v4026 = vadd.f32 %v3997, %v4025
      %v4027 = vpop.f32.mrf.mxu0
      %v4028 = vadd.f32 %v3999, %v4027
      %4029 = vdwg.mxu0
      %4030 = vmatpush.bf16.msra.mxu0 %v3947
      %4031 = vmatpush.bf16.msra.mxu0 %v3946
      %4032 = vmatpush.bf16.msra.mxu0 %v3945
      %4033 = vmatpush.bf16.msra.mxu0 %v3944
      %4034 = vmatpush.bf16.msra.mxu0 %v3943
      %4035 = vmatpush.bf16.msra.mxu0 %v3942
      %4036 = vmatpush.bf16.msra.mxu0 %v3941
      %4037 = vmatpush.bf16.msra.mxu0 %v3940
      %4038 = vmatmul.bf16.gmra.mxu0 %v3806
      %v4039 = vpop.f32.mrf.mxu0
      %v4040 = vadd.f32 %v4011, %v4039
      %v4041 = vpop.f32.mrf.mxu0
      %v4042 = vadd.f32 %v4013, %v4041
      %4043 = vmatmul.bf16.gmra.mxu0 %v3809
      %v4044 = vpop.f32.mrf.mxu0
      %v4045 = vadd.f32 %v4016, %v4044
      %v4046 = vpop.f32.mrf.mxu0
      %v4047 = vadd.f32 %v4018, %v4046
      %4048 = vmatmul.bf16.gmra.mxu0 %v3812
      %v4049 = vpop.f32.mrf.mxu0
      %v4050 = vadd.f32 %v4021, %v4049
      %v4051 = vpop.f32.mrf.mxu0
      %v4052 = vadd.f32 %v4023, %v4051
      %4053 = vmatmul.bf16.gmra.mxu0 %v3815
      %v4054 = vpop.f32.mrf.mxu0
      %v4055 = vadd.f32 %v4026, %v4054
      %v4056 = vpop.f32.mrf.mxu0
      %v4057 = vadd.f32 %v4028, %v4056
      %4058 = vdwg.mxu0
      %v4059 = vadd.f32 %v3567, %v4040
      %v4060 = vadd.f32 %v3569, %v4042
      %v4061 = vadd.f32 %v3572, %v4045
      %v4062 = vadd.f32 %v3574, %v4047
      %v4063 = vadd.f32 %v3577, %v4050
      %v4064 = vadd.f32 %v3579, %v4052
      %v4065 = vadd.f32 %v3582, %v4055
      %v4066 = vadd.f32 %v3584, %v4057
      %v4067 = vld [vmem:[%s4] sm:$0x1]
      %v4069 = vperm.slane %v4067, 0
      %v4071 = vadd.f32 %v4059, %v4069
      %v4072 = vadd.f32 %v4060, %v4069
      %v4073 = vadd.f32 %v4061, %v4069
      %v4074 = vadd.f32 %v4062, %v4069
      %v4075 = vadd.f32 %v4063, %v4069
      %v4076 = vadd.f32 %v4064, %v4069
      %v4077 = vadd.f32 %v4065, %v4069
      %v4078 = vadd.f32 %v4066, %v4069
      %v4079 = vmul.f32 %v4071, 0.01
      %v4080 = vmul.f32 %v4072, 0.01
      %v4081 = vmul.f32 %v4073, 0.01
      %v4082 = vmul.f32 %v4074, 0.01
      %v4083 = vmul.f32 %v4075, 0.01
      %v4084 = vmul.f32 %v4076, 0.01
      %v4085 = vmul.f32 %v4077, 0.01
      %v4086 = vmul.f32 %v4078, 0.01
      %v4087 = vmax.f32 %v4071, %v4079
      %v4088 = vmax.f32 %v4072, %v4080
      %v4089 = vmax.f32 %v4073, %v4081
      %v4090 = vmax.f32 %v4074, %v4082
      %v4091 = vmax.f32 %v4075, %v4083
      %v4092 = vmax.f32 %v4076, %v4084
      %v4093 = vmax.f32 %v4077, %v4085
      %v4094 = vmax.f32 %v4078, %v4086
      %v4103 = vrot.slane %v4087, 2
      %v4104 = vrot.slane %v4087, 4
      %v4105 = vrot.slane %v4087, 6
      %v4106 = vrot.slane %v4088, 2
      %v4107 = vrot.slane %v4088, 4
      %v4108 = vrot.slane %v4088, 6
      %v4109 = vrot.slane %v4089, 2
      %v4110 = vrot.slane %v4089, 4
      %v4111 = vrot.slane %v4089, 6
      %v4112 = vrot.slane %v4090, 2
      %v4113 = vrot.slane %v4090, 4
      %v4114 = vrot.slane %v4090, 6
      %v4115 = vrot.slane %v4091, 2
      %v4116 = vrot.slane %v4091, 4
      %v4117 = vrot.slane %v4091, 6
      %v4118 = vrot.slane %v4092, 2
      %v4119 = vrot.slane %v4092, 4
      %v4120 = vrot.slane %v4092, 6
      %v4121 = vrot.slane %v4093, 2
      %v4122 = vrot.slane %v4093, 4
      %v4123 = vrot.slane %v4093, 6
      %v4124 = vrot.slane %v4094, 2
      %v4125 = vrot.slane %v4094, 4
      %v4126 = vrot.slane %v4094, 6
      %v4151 = vsel %vm959, %v4087, -inf
      %v4152 = vrot.slane %v4151, 4
      %v4153 = vmax.f32 %v4151, %v4152
      %v4154 = vrot.slane %v4153, 2
      %v4155 = vmax.f32 %v4153, %v4154
      %v4156 = vrot.slane %v4155, 1
      %v4157 = vmax.f32 %v4155, %v4156
      %v4158 = vsel %vm959, %v4103, -inf
      %v4159 = vrot.slane %v4158, 4
      %v4160 = vmax.f32 %v4158, %v4159
      %v4161 = vrot.slane %v4160, 2
      %v4162 = vmax.f32 %v4160, %v4161
      %v4163 = vrot.slane %v4162, 1
      %v4164 = vmax.f32 %v4162, %v4163
      %v4165 = vsel %vm959, %v4104, -inf
      %v4166 = vrot.slane %v4165, 4
      %v4167 = vmax.f32 %v4165, %v4166
      %v4168 = vrot.slane %v4167, 2
      %v4169 = vmax.f32 %v4167, %v4168
      %v4170 = vrot.slane %v4169, 1
      %v4171 = vmax.f32 %v4169, %v4170
      %v4172 = vsel %vm959, %v4105, -inf
      %v4173 = vrot.slane %v4172, 4
      %v4174 = vmax.f32 %v4172, %v4173
      %v4175 = vrot.slane %v4174, 2
      %v4176 = vmax.f32 %v4174, %v4175
      %v4177 = vrot.slane %v4176, 1
      %v4178 = vmax.f32 %v4176, %v4177
      %v4179 = vsel %vm959, %v4088, -inf
      %v4180 = vrot.slane %v4179, 4
      %v4181 = vmax.f32 %v4179, %v4180
      %v4182 = vrot.slane %v4181, 2
      %v4183 = vmax.f32 %v4181, %v4182
      %v4184 = vrot.slane %v4183, 1
      %v4185 = vmax.f32 %v4183, %v4184
      %v4186 = vsel %vm959, %v4106, -inf
      %v4187 = vrot.slane %v4186, 4
      %v4188 = vmax.f32 %v4186, %v4187
      %v4189 = vrot.slane %v4188, 2
      %v4190 = vmax.f32 %v4188, %v4189
      %v4191 = vrot.slane %v4190, 1
      %v4192 = vmax.f32 %v4190, %v4191
      %v4193 = vsel %vm959, %v4107, -inf
      %v4194 = vrot.slane %v4193, 4
      %v4195 = vmax.f32 %v4193, %v4194
      %v4196 = vrot.slane %v4195, 2
      %v4197 = vmax.f32 %v4195, %v4196
      %v4198 = vrot.slane %v4197, 1
      %v4199 = vmax.f32 %v4197, %v4198
      %v4200 = vsel %vm959, %v4108, -inf
      %v4201 = vrot.slane %v4200, 4
      %v4202 = vmax.f32 %v4200, %v4201
      %v4203 = vrot.slane %v4202, 2
      %v4204 = vmax.f32 %v4202, %v4203
      %v4205 = vrot.slane %v4204, 1
      %v4206 = vmax.f32 %v4204, %v4205
      %v4207 = vsel %vm959, %v4089, -inf
      %v4208 = vrot.slane %v4207, 4
      %v4209 = vmax.f32 %v4207, %v4208
      %v4210 = vrot.slane %v4209, 2
      %v4211 = vmax.f32 %v4209, %v4210
      %v4212 = vrot.slane %v4211, 1
      %v4213 = vmax.f32 %v4211, %v4212
      %v4214 = vsel %vm959, %v4109, -inf
      %v4215 = vrot.slane %v4214, 4
      %v4216 = vmax.f32 %v4214, %v4215
      %v4217 = vrot.slane %v4216, 2
      %v4218 = vmax.f32 %v4216, %v4217
      %v4219 = vrot.slane %v4218, 1
      %v4220 = vmax.f32 %v4218, %v4219
      %v4221 = vsel %vm959, %v4110, -inf
      %v4222 = vrot.slane %v4221, 4
      %v4223 = vmax.f32 %v4221, %v4222
      %v4224 = vrot.slane %v4223, 2
      %v4225 = vmax.f32 %v4223, %v4224
      %v4226 = vrot.slane %v4225, 1
      %v4227 = vmax.f32 %v4225, %v4226
      %v4228 = vsel %vm959, %v4111, -inf
      %v4229 = vrot.slane %v4228, 4
      %v4230 = vmax.f32 %v4228, %v4229
      %v4231 = vrot.slane %v4230, 2
      %v4232 = vmax.f32 %v4230, %v4231
      %v4233 = vrot.slane %v4232, 1
      %v4234 = vmax.f32 %v4232, %v4233
      %v4235 = vsel %vm959, %v4090, -inf
      %v4236 = vrot.slane %v4235, 4
      %v4237 = vmax.f32 %v4235, %v4236
      %v4238 = vrot.slane %v4237, 2
      %v4239 = vmax.f32 %v4237, %v4238
      %v4240 = vrot.slane %v4239, 1
      %v4241 = vmax.f32 %v4239, %v4240
      %v4242 = vsel %vm959, %v4112, -inf
      %v4243 = vrot.slane %v4242, 4
      %v4244 = vmax.f32 %v4242, %v4243
      %v4245 = vrot.slane %v4244, 2
      %v4246 = vmax.f32 %v4244, %v4245
      %v4247 = vrot.slane %v4246, 1
      %v4248 = vmax.f32 %v4246, %v4247
      %v4249 = vsel %vm959, %v4113, -inf
      %v4250 = vrot.slane %v4249, 4
      %v4251 = vmax.f32 %v4249, %v4250
      %v4252 = vrot.slane %v4251, 2
      %v4253 = vmax.f32 %v4251, %v4252
      %v4254 = vrot.slane %v4253, 1
      %v4255 = vmax.f32 %v4253, %v4254
      %v4256 = vsel %vm959, %v4114, -inf
      %v4257 = vrot.slane %v4256, 4
      %v4258 = vmax.f32 %v4256, %v4257
      %v4259 = vrot.slane %v4258, 2
      %v4260 = vmax.f32 %v4258, %v4259
      %v4261 = vrot.slane %v4260, 1
      %v4262 = vmax.f32 %v4260, %v4261
      %v4263 = vsel %vm959, %v4091, -inf
      %v4264 = vrot.slane %v4263, 4
      %v4265 = vmax.f32 %v4263, %v4264
      %v4266 = vrot.slane %v4265, 2
      %v4267 = vmax.f32 %v4265, %v4266
      %v4268 = vrot.slane %v4267, 1
      %v4269 = vmax.f32 %v4267, %v4268
      %v4270 = vsel %vm959, %v4115, -inf
      %v4271 = vrot.slane %v4270, 4
      %v4272 = vmax.f32 %v4270, %v4271
      %v4273 = vrot.slane %v4272, 2
      %v4274 = vmax.f32 %v4272, %v4273
      %v4275 = vrot.slane %v4274, 1
      %v4276 = vmax.f32 %v4274, %v4275
      %v4277 = vsel %vm959, %v4116, -inf
      %v4278 = vrot.slane %v4277, 4
      %v4279 = vmax.f32 %v4277, %v4278
      %v4280 = vrot.slane %v4279, 2
      %v4281 = vmax.f32 %v4279, %v4280
      %v4282 = vrot.slane %v4281, 1
      %v4283 = vmax.f32 %v4281, %v4282
      %v4284 = vsel %vm959, %v4117, -inf
      %v4285 = vrot.slane %v4284, 4
      %v4286 = vmax.f32 %v4284, %v4285
      %v4287 = vrot.slane %v4286, 2
      %v4288 = vmax.f32 %v4286, %v4287
      %v4289 = vrot.slane %v4288, 1
      %v4290 = vmax.f32 %v4288, %v4289
      %v4291 = vsel %vm959, %v4092, -inf
      %v4292 = vrot.slane %v4291, 4
      %v4293 = vmax.f32 %v4291, %v4292
      %v4294 = vrot.slane %v4293, 2
      %v4295 = vmax.f32 %v4293, %v4294
      %v4296 = vrot.slane %v4295, 1
      %v4297 = vmax.f32 %v4295, %v4296
      %v4298 = vsel %vm959, %v4118, -inf
      %v4299 = vrot.slane %v4298, 4
      %v4300 = vmax.f32 %v4298, %v4299
      %v4301 = vrot.slane %v4300, 2
      %v4302 = vmax.f32 %v4300, %v4301
      %v4303 = vrot.slane %v4302, 1
      %v4304 = vmax.f32 %v4302, %v4303
      %v4305 = vsel %vm959, %v4119, -inf
      %v4306 = vrot.slane %v4305, 4
      %v4307 = vmax.f32 %v4305, %v4306
      %v4308 = vrot.slane %v4307, 2
      %v4309 = vmax.f32 %v4307, %v4308
      %v4310 = vrot.slane %v4309, 1
      %v4311 = vmax.f32 %v4309, %v4310
      %v4312 = vsel %vm959, %v4120, -inf
      %v4313 = vrot.slane %v4312, 4
      %v4314 = vmax.f32 %v4312, %v4313
      %v4315 = vrot.slane %v4314, 2
      %v4316 = vmax.f32 %v4314, %v4315
      %v4317 = vrot.slane %v4316, 1
      %v4318 = vmax.f32 %v4316, %v4317
      %v4319 = vsel %vm959, %v4093, -inf
      %v4320 = vrot.slane %v4319, 4
      %v4321 = vmax.f32 %v4319, %v4320
      %v4322 = vrot.slane %v4321, 2
      %v4323 = vmax.f32 %v4321, %v4322
      %v4324 = vrot.slane %v4323, 1
      %v4325 = vmax.f32 %v4323, %v4324
      %v4326 = vsel %vm959, %v4121, -inf
      %v4327 = vrot.slane %v4326, 4
      %v4328 = vmax.f32 %v4326, %v4327
      %v4329 = vrot.slane %v4328, 2
      %v4330 = vmax.f32 %v4328, %v4329
      %v4331 = vrot.slane %v4330, 1
      %v4332 = vmax.f32 %v4330, %v4331
      %v4333 = vsel %vm959, %v4122, -inf
      %v4334 = vrot.slane %v4333, 4
      %v4335 = vmax.f32 %v4333, %v4334
      %v4336 = vrot.slane %v4335, 2
      %v4337 = vmax.f32 %v4335, %v4336
      %v4338 = vrot.slane %v4337, 1
      %v4339 = vmax.f32 %v4337, %v4338
      %v4340 = vsel %vm959, %v4123, -inf
      %v4341 = vrot.slane %v4340, 4
      %v4342 = vmax.f32 %v4340, %v4341
      %v4343 = vrot.slane %v4342, 2
      %v4344 = vmax.f32 %v4342, %v4343
      %v4345 = vrot.slane %v4344, 1
      %v4346 = vmax.f32 %v4344, %v4345
      %v4347 = vsel %vm959, %v4094, -inf
      %v4348 = vrot.slane %v4347, 4
      %v4349 = vmax.f32 %v4347, %v4348
      %v4350 = vrot.slane %v4349, 2
      %v4351 = vmax.f32 %v4349, %v4350
      %v4352 = vrot.slane %v4351, 1
      %v4353 = vmax.f32 %v4351, %v4352
      %v4354 = vsel %vm959, %v4124, -inf
      %v4355 = vrot.slane %v4354, 4
      %v4356 = vmax.f32 %v4354, %v4355
      %v4357 = vrot.slane %v4356, 2
      %v4358 = vmax.f32 %v4356, %v4357
      %v4359 = vrot.slane %v4358, 1
      %v4360 = vmax.f32 %v4358, %v4359
      %v4361 = vsel %vm959, %v4125, -inf
      %v4362 = vrot.slane %v4361, 4
      %v4363 = vmax.f32 %v4361, %v4362
      %v4364 = vrot.slane %v4363, 2
      %v4365 = vmax.f32 %v4363, %v4364
      %v4366 = vrot.slane %v4365, 1
      %v4367 = vmax.f32 %v4365, %v4366
      %v4368 = vsel %vm959, %v4126, -inf
      %v4369 = vrot.slane %v4368, 4
      %v4370 = vmax.f32 %v4368, %v4369
      %v4371 = vrot.slane %v4370, 2
      %v4372 = vmax.f32 %v4370, %v4371
      %v4373 = vrot.slane %v4372, 1
      %v4374 = vmax.f32 %v4372, %v4373
      %v4375 = vmax.f32 %v4157, %v4185
      %v4376 = vmax.f32 %v4164, %v4192
      %v4377 = vmax.f32 %v4171, %v4199
      %v4378 = vmax.f32 %v4178, %v4206
      %v4379 = vmax.f32 %v4213, %v4241
      %v4380 = vmax.f32 %v4220, %v4248
      %v4381 = vmax.f32 %v4227, %v4255
      %v4382 = vmax.f32 %v4234, %v4262
      %v4383 = vmax.f32 %v4269, %v4297
      %v4384 = vmax.f32 %v4276, %v4304
      %v4385 = vmax.f32 %v4283, %v4311
      %v4386 = vmax.f32 %v4290, %v4318
      %v4387 = vmax.f32 %v4325, %v4353
      %v4388 = vmax.f32 %v4332, %v4360
      %v4389 = vmax.f32 %v4339, %v4367
      %v4390 = vmax.f32 %v4346, %v4374
      %vm4407 = vcmask 1041409
      %v4408 = vsel %vm4407, %v4376, %v4375
      %v4409 = vsel %vm2400, %v4377, %v4408
      %v4410 = vsel %vm2402, %v4378, %v4409
      %v4411 = vsel %vm2404, %v4379, %v4410
      %v4412 = vsel %vm2406, %v4380, %v4411
      %v4413 = vsel %vm2408, %v4381, %v4412
      %v4414 = vsel %vm2410, %v4382, %v4413
      %v4415 = vsel %vm4407, %v4384, %v4383
      %v4416 = vsel %vm2400, %v4385, %v4415
      %v4417 = vsel %vm2402, %v4386, %v4416
      %v4418 = vsel %vm2404, %v4387, %v4417
      %v4419 = vsel %vm2406, %v4388, %v4418
      %v4420 = vsel %vm2408, %v4389, %v4419
      %v4421 = vsel %vm2410, %v4390, %v4420
      %4424 = vst [vmem:[%s260] sm:$0xff] %v4414
      %4425 = vst [vmem:[%s260 + $0x8] sm:$0xff] %v4421
      %p4426 = scmp.lt.s32.totalorder %s20, 1
      %s4427 = scalar_select %p4426, %s20, 1
      %p4428 = scmp.lt.s32.totalorder %s21, 0
      %s4429 = scalar_select %p4428, %s21, 0
      %s4430 = smul.addr %s4429, 2
      %s4431 = smul.addr %s4427, 2
      %s4432 = sadd.s32 %s4430, %s4431
      %s4433 = smul.addr %s4432, 8
      %s4434 = scalar_lea.vmem %s5, %s4433
      // Predicated region
      $region45: #{_lambda_.1} parent=39 // pred_check
        %p4435 = pneg %p160
      $region46: #{_lambda_.1} parent=39 // pred_check_branch
        %4437 = sbr.rel (%p4435) target = $region48
      $region47: #{_lambda_.1} parent=39 // pred_region
        _
      $region48: #{_lambda_.1} parent=39 // pred_fallthru
        _
    $region40: #{_lambda_.1} parent=5 // pred_fallthru
      _
    %p4438 = scmp.le.s32.totalorder 2, %s11
    // Predicated region
    $region49: #{_lambda_.1} parent=5 // pred_check
      %p4439 = pneg %p4438
    $region50: #{_lambda_.1} parent=5 // pred_check_branch
      %4441 = sbr.rel (%p4439) target = $region52
    $region51: #{_lambda_.1} parent=5 // pred_region
      %s4442 = ssub.s32 %s11, 2
      // Predicated region
      $region53: #{_lambda_.1} parent=51 // pred_check
        %p4443 = pneg %p166
      $region54: #{_lambda_.1} parent=51 // pred_check_branch
        %4445 = sbr.rel (%p4443) target = $region56
      $region55: #{_lambda_.1} parent=51 // pred_region
        %p4446 = scmp.lt.s32.totalorder %s22, 1
        %s4447 = scalar_select %p4446, %s22, 1
        %p4448 = scmp.lt.s32.totalorder %s23, 0
        %s4449 = scalar_select %p4448, %s23, 0
        %s4450 = smul.addr %s4449, 2
        %s4451 = smul.addr %s4447, 2
        %s4452 = sadd.s32 %s4450, %s4451
        %s4453 = smul.addr %s4452, 8
        %s4454 = scalar_lea.vmem %s5, %s4453
      $region56: #{_lambda_.1} parent=51 // pred_fallthru
        _
    $region52: #{_lambda_.1} parent=5 // pred_fallthru
      _
  $region6: #{_lambda_.1} parent=0 // loop_footer
    %s15 = sadd.s32 1, %s11
  $region7: #{_lambda_.1} parent=0 // loop_footer_branch
    %10 = sbr.rel target = $region3
  $region8: #{_lambda_.1} parent=0 // loop_exit
    _

</llo_original>
